<compile_context>
chip_gen: v6e
topology: v6e:2x2x1
jax: 0.10.0
libtpu: 0.0.40
codegen_flags: <defaults>
</compile_context>

<pallas_src>
import jax
import jax.numpy as jnp
from jax.experimental import pallas as pl
from jax.experimental.pallas import tpu as pltpu  # noqa: F401  (kept for TPU-specific extensions)

N_EMBD = 32
HEAD_SIZE = 16

_HIGHEST = jax.lax.Precision.HIGHEST


def _head_kernel(x_ref, w_ref, o_ref):
    # x_ref: (B, T, C)   w_ref: (3, C, H) = [Q*scale | K | V]   o_ref: (B, T, H)
    _, T, _ = x_ref.shape
    x = x_ref[...]

    # Projections: contract C directly on the (B, T, C) tile.  k/q/v come from
    # leading-axis indexing of the weight ref (no lane slicing, no reshapes).
    dn_proj = (((2,), (0,)), ((), ()))
    q = jax.lax.dot_general(x, w_ref[0], dn_proj, precision=_HIGHEST,
                            preferred_element_type=jnp.float32)   # (B,T,H), pre-scaled
    k = jax.lax.dot_general(x, w_ref[1], dn_proj, precision=_HIGHEST,
                            preferred_element_type=jnp.float32)   # (B,T,H)
    v = jax.lax.dot_general(x, w_ref[2], dn_proj, precision=_HIGHEST,
                            preferred_element_type=jnp.float32)   # (B,T,H)

    # Scores (B, T, T): contract head dim of q and k, batch over B (no explicit
    # transpose of k).
    wei = jax.lax.dot_general(q, k, (((2,), (2,)), ((0,), (0,))),
                              precision=_HIGHEST,
                              preferred_element_type=jnp.float32)

    # Causal mask (== tril[:T, :T] == 0 -> -inf).  The diagonal is always
    # unmasked, so the row max stays finite and exp(-inf - m) == 0 exactly.
    row = jax.lax.broadcasted_iota(jnp.int32, (T, T), 0)
    col = jax.lax.broadcasted_iota(jnp.int32, (T, T), 1)
    wei = jnp.where(col <= row, wei, -jnp.inf)

    # Numerically stable softmax with an exact divide (this kernel is not
    # VPU-bound, so the approximate EUP reciprocal bought nothing and cost
    # accuracy).
    m = jnp.max(wei, axis=-1, keepdims=True)
    e = jnp.exp(wei - m)
    p = e / jnp.sum(e, axis=-1, keepdims=True)

    # Dropout: eval-mode identity.
    # TODO(synk): training-mode dropout (p=0.2) via pltpu.prng_seed + prng_random_bits.

    # out = p @ v, batched over B.
    out = jax.lax.dot_general(p, v, (((2,), (1,)), ((0,), (0,))),
                              precision=_HIGHEST,
                              preferred_element_type=jnp.float32)
    o_ref[...] = out.astype(o_ref.dtype)


def fuse_head_weights(wk, wq, wv):
    """Fuse PyTorch-layout (H, C) projection weights into one (3, C, H) array.

    Call ONCE and reuse across forward calls.  The 1/sqrt(H) attention scale is
    folded into the Q weight columns so the kernel never scales the (T, T)
    score tile.  Order: [Q (pre-scaled), K, V].
    """
    H = wq.shape[0]
    scale = jnp.asarray(H, jnp.float32) ** -0.5
    return jnp.stack([wq.T * scale, wk.T, wv.T], axis=0)  # (3, C, H)


def head_forward(x, w3):
    """x: (B, T, C) float32; w3: (3, C, H) fused weight from fuse_head_weights."""
    B, T, _ = x.shape
    H = w3.shape[-1]
    # Tiny problem: one grid-free invocation, whole arrays resident in VMEM.
    return pl.pallas_call(
        _head_kernel,
        out_shape=jax.ShapeDtypeStruct((B, T, H), x.dtype),
    )(x, w3)


def head_forward_ref(x, wk, wq, wv):
    """Pure-JAX reference matching the PyTorch forward (eval mode)."""
    k = jnp.einsum('btc,hc->bth', x, wk, precision=_HIGHEST)
    q = jnp.einsum('btc,hc->bth', x, wq, precision=_HIGHEST)
    v = jnp.einsum('btc,hc->bth', x, wv, precision=_HIGHEST)
    H = k.shape[-1]
    wei = jnp.einsum('bqh,bkh->bqk', q, k, precision=_HIGHEST) * (H ** -0.5)
    T = x.shape[1]
    mask = jnp.tril(jnp.ones((T, T), dtype=bool))
    wei = jnp.where(mask, wei, -jnp.inf)
    wei = jax.nn.softmax(wei, axis=-1)
    return jnp.einsum('bqk,bkh->bqh', wei, v, precision=_HIGHEST)


if __name__ == "__main__":
    B, T, C, H = 2, 8, N_EMBD, HEAD_SIZE

    key = jax.random.PRNGKey(0)
    kx, kk, kq, kv = jax.random.split(key, 4)

    x = jax.random.normal(kx, (B, T, C), dtype=jnp.float32)

    # Deterministic init matching nn.Linear(n_embd, head_size, bias=False):
    # PyTorch weight shape is (head_size, n_embd); uniform(-1/sqrt(in), 1/sqrt(in)).
    bound = 1.0 / (C ** 0.5)
    wk = jax.random.uniform(kk, (H, C), jnp.float32, -bound, bound)
    wq = jax.random.uniform(kq, (H, C), jnp.float32, -bound, bound)
    wv = jax.random.uniform(kv, (H, C), jnp.float32, -bound, bound)

    # Fuse (and pre-scale) the projection weights once, reuse every call.
    w3 = fuse_head_weights(wk, wq, wv)

    out = jax.block_until_ready(head_forward(x, w3))

    ref = head_forward_ref(x, wk, wq, wv)
    assert out.shape == (B, T, H)
    assert jnp.allclose(out, ref, atol=1e-5, rtol=1e-5), "mismatch vs reference"

    print("KERNEL_OK")
</pallas_src>

<mosaic_0001>
module attributes {stable_mosaic.version = 11 : i64} {
  func.func @_head_kernel(%arg0: memref<2x8x32xf32, #tpu.memory_space<vmem>>, %arg1: memref<3x32x16xf32, #tpu.memory_space<vmem>>, %arg2: memref<2x8x16xf32, #tpu.memory_space<vmem>>) attributes {dimension_semantics = [], scalar_prefetch = 0 : i64, scratch_operands = 0 : i64, tpu.core_type = #tpu.core_type<tc>} {
    %c0 = arith.constant 0 : index
    %c0_0 = arith.constant 0 : index
    %c0_1 = arith.constant 0 : index
    %0 = vector.load %arg0[%c0, %c0_0, %c0_1] : memref<2x8x32xf32, #tpu.memory_space<vmem>>, vector<2x8x32xf32>
    %c0_2 = arith.constant 0 : index
    %c0_3 = arith.constant 0 : index
    %c0_4 = arith.constant 0 : index
    %1 = vector.load %arg1[%c0_2, %c0_3, %c0_4] : memref<3x32x16xf32, #tpu.memory_space<vmem>>, vector<1x32x16xf32>
    %2 = vector.shape_cast %1 : vector<1x32x16xf32> to vector<32x16xf32>
    %cst = arith.constant dense<0.000000e+00> : vector<2x8x16xf32>
    %3 = tpu.matmul %0, %2, %cst {dimension_numbers = #tpu.dot_dimension_numbers<[2], [0], [0, 1], [1], [0, 0, 0, 1, 1, 1], [], []>, precision = #tpu.contract_precision<fp32>} : vector<2x8x32xf32>, vector<32x16xf32>, vector<2x8x16xf32> -> vector<2x8x16xf32>
    %c1 = arith.constant 1 : index
    %c0_5 = arith.constant 0 : index
    %c0_6 = arith.constant 0 : index
    %4 = vector.load %arg1[%c1, %c0_5, %c0_6] : memref<3x32x16xf32, #tpu.memory_space<vmem>>, vector<1x32x16xf32>
    %5 = vector.shape_cast %4 : vector<1x32x16xf32> to vector<32x16xf32>
    %cst_7 = arith.constant dense<0.000000e+00> : vector<2x8x16xf32>
    %6 = tpu.matmul %0, %5, %cst_7 {dimension_numbers = #tpu.dot_dimension_numbers<[2], [0], [0, 1], [1], [0, 0, 0, 1, 1, 1], [], []>, precision = #tpu.contract_precision<fp32>} : vector<2x8x32xf32>, vector<32x16xf32>, vector<2x8x16xf32> -> vector<2x8x16xf32>
    %c2 = arith.constant 2 : index
    %c0_8 = arith.constant 0 : index
    %c0_9 = arith.constant 0 : index
    %7 = vector.load %arg1[%c2, %c0_8, %c0_9] : memref<3x32x16xf32, #tpu.memory_space<vmem>>, vector<1x32x16xf32>
    %8 = vector.shape_cast %7 : vector<1x32x16xf32> to vector<32x16xf32>
    %cst_10 = arith.constant dense<0.000000e+00> : vector<2x8x16xf32>
    %9 = tpu.matmul %0, %8, %cst_10 {dimension_numbers = #tpu.dot_dimension_numbers<[2], [0], [0, 1], [1], [0, 0, 0, 1, 1, 1], [], []>, precision = #tpu.contract_precision<fp32>} : vector<2x8x32xf32>, vector<32x16xf32>, vector<2x8x16xf32> -> vector<2x8x16xf32>
    %cst_11 = arith.constant dense<0.000000e+00> : vector<2x8x8xf32>
    %10 = tpu.matmul %3, %6, %cst_11 {dimension_numbers = #tpu.dot_dimension_numbers<[2], [2], [1], [1], [0, 0, 0, 1, 1, 1], [0], [0]>, precision = #tpu.contract_precision<fp32>} : vector<2x8x16xf32>, vector<2x8x16xf32>, vector<2x8x8xf32> -> vector<2x8x8xf32>
    %11 = tpu.iota {dimensions = array<i32: 0>} : vector<8x8xi32>
    %12 = tpu.iota {dimensions = array<i32: 1>} : vector<8x8xi32>
    %13 = arith.cmpi sle, %12, %11 : vector<8x8xi32>
    %cst_12 = arith.constant 0xFF800000 : f32
    %14 = vector.shape_cast %13 : vector<8x8xi1> to vector<1x8x8xi1>
    %15 = vector.broadcast %14 : vector<1x8x8xi1> to vector<2x8x8xi1>
    %16 = vector.broadcast %cst_12 : f32 to vector<2x8x8xf32>
    %17 = arith.select %15, %10, %16 : vector<2x8x8xi1>, vector<2x8x8xf32>
    %cst_13 = arith.constant dense<0xFF800000> : vector<2x8xf32>
    %18 = vector.multi_reduction <maximumf>, %17, %cst_13 [2] : vector<2x8x8xf32> to vector<2x8xf32>
    %19 = vector.shape_cast %18 : vector<2x8xf32> to vector<2x8x1xf32>
    %20 = vector.broadcast %19 : vector<2x8x1xf32> to vector<2x8x8xf32>
    %21 = arith.subf %17, %20 : vector<2x8x8xf32>
    %22 = math.exp %21 : vector<2x8x8xf32>
    %cst_14 = arith.constant dense<0.000000e+00> : vector<2x8xf32>
    %23 = vector.multi_reduction <add>, %22, %cst_14 [2] : vector<2x8x8xf32> to vector<2x8xf32>
    %24 = vector.shape_cast %23 : vector<2x8xf32> to vector<2x8x1xf32>
    %25 = vector.broadcast %24 : vector<2x8x1xf32> to vector<2x8x8xf32>
    %26 = arith.divf %22, %25 : vector<2x8x8xf32>
    %cst_15 = arith.constant dense<0.000000e+00> : vector<2x8x16xf32>
    %27 = tpu.matmul %26, %9, %cst_15 {dimension_numbers = #tpu.dot_dimension_numbers<[2], [1], [1], [2], [0, 0, 0, 1, 1, 2], [0], [0]>, precision = #tpu.contract_precision<fp32>} : vector<2x8x8xf32>, vector<2x8x16xf32>, vector<2x8x16xf32> -> vector<2x8x16xf32>
    %c0_16 = arith.constant 0 : index
    %c0_17 = arith.constant 0 : index
    %c0_18 = arith.constant 0 : index
    %28 = vector.load %arg2[%c0_16, %c0_17, %c0_18] : memref<2x8x16xf32, #tpu.memory_space<vmem>>, vector<2x8x16xf32>
    tpu.vector_store %arg2[%c0_16, %c0_17, %c0_18], %27 {strides = array<i32>} : memref<2x8x16xf32, #tpu.memory_space<vmem>>, vector<2x8x16xf32>,
    return
  }
}

</mosaic_0001>

<llo_original>
// kernel: tpu_custom_call.1
$region0: #{tpu_custom_call.1}
  #allocation0 [shape = 'u32[]', space=smem, size = 0x4, offset = 0x4, fixed_abs, tag = 'smem constant byte address 0x4 - core index']
  #allocation1 [shape = 'u32[144,128]{1,0:T(1,128)}', space=vmem, size = 0x12000, scoped, tag = 'internal scratch']
  %s0 = inlined_call_operand.vmem [shape: f32[2,8,32], index: 0, kind: input, shape index: {}]
  %s1 = inlined_call_operand.vmem [shape: f32[3,32,16], index: 1, kind: input, shape index: {}]
  %s2 = inlined_call_operand.hbm [shape: f32[2,8,16], index: 2, kind: output, shape index: {}]
  %s3 = sld [smem:[#allocation0]]
  $region18: #{tpu_custom_call.1} parent=0
    _
  %s5 = ssub.s32 1, %s3
  %s6 = scalar_select 0, %s5, %s3
  $region1: #{tpu_custom_call.1} parent=0
    #allocation2 [shape = 'u8[8192]{0}', space=vmem, size = 0x2000, scoped, tag = 'output window, operand 0, single buffered']
    #allocation3 [shape = 's32[1]{0}', space=sflag, size = 0x4, scoped, tag = 'scoped memory for tpu_custom_call.1']
    %7 = vsyncpa [#allocation3], 0
    // Predicated region
    $region2: #{tpu_custom_call.1} parent=1 // pred_check
      _
    $region3: #{tpu_custom_call.1} parent=1 // pred_check_branch
      %9 = sbr.rel (0) target = $region5
    $region4: #{tpu_custom_call.1} parent=1 // pred_region
      _
    $region5: #{tpu_custom_call.1} parent=1 // pred_fallthru
      _
    // Predicated region
    $region6: #{tpu_custom_call.1} parent=1 // pred_check
      _
    $region7: #{tpu_custom_call.1} parent=1 // pred_check_branch
      %11 = sbr.rel (0) target = $region9
    $region8: #{tpu_custom_call.1} parent=1 // pred_region
      _
    $region9: #{tpu_custom_call.1} parent=1 // pred_fallthru
      _
    %v12 = vld [vmem:[%s0] sm:$0xff]
    %v13 = vld [vmem:[%s0 + $0x8] sm:$0xff]
    %v14 = vld [vmem:[%s1] sm:$0xff]
    %v15 = vld [vmem:[%s1 + $0x8] sm:$0xff]
    %v16 = vld [vmem:[%s1 + $0x10] sm:$0xff]
    %v17 = vld [vmem:[%s1 + $0x18] sm:$0xff]
    %vm18 = vcmask 261120
    %v20 = vsel %vm18, %v12, 0
    %v23 = vsel %vm18, %v13, 0
    %25 = vmatprep.subr.mxu0 0.0
    %26 = vmatpush1.msra.mxu0 0.0
    %27 = vmatprep.subr.mxu0 0.0
    %28 = vmatpush1.msra.mxu0 0.0
    %29 = vmatprep.subr.mxu0 0.0
    %30 = vmatpush1.msra.mxu0 0.0
    %31 = vmatprep.subr.mxu0 0.0
    %32 = vmatpush1.msra.mxu0 0.0
    %33 = vmatprep.subr.mxu0 0.0
    %34 = vmatpush1.msra.mxu0 0.0
    %35 = vmatprep.subr.mxu0 0.0
    %36 = vmatpush1.msra.mxu0 0.0
    %37 = vmatprep.subr.mxu0 0.0
    %38 = vmatpush1.msra.mxu0 0.0
    %39 = vmatprep.subr.mxu0 0.0
    %40 = vmatpush1.msra.mxu0 0.0
    %41 = vmatprep.subr.mxu0 0.0
    %42 = vmatpush1.msra.mxu0 0.0
    %43 = vmatprep.subr.mxu0 0.0
    %44 = vmatpush1.msra.mxu0 0.0
    %45 = vmatprep.subr.mxu0 0.0
    %46 = vmatpush1.msra.mxu0 0.0
    %47 = vmatprep.subr.mxu0 0.0
    %48 = vmatpush1.msra.mxu0 0.0
    %49 = vmatprep.subr.mxu0 0.0
    %v50 = vand.u32 %v17, 4294901760
    %51 = vmatpush1.msra.mxu0 %v50
    %52 = vmatprep.subr.mxu0 0.0
    %v53 = vand.u32 %v16, 4294901760
    %54 = vmatpush1.msra.mxu0 %v53
    %55 = vmatprep.subr.mxu0 0.0
    %v56 = vand.u32 %v15, 4294901760
    %57 = vmatpush1.msra.mxu0 %v56
    %58 = vmatprep.subr.mxu0 0.0
    %v59 = vand.u32 %v14, 4294901760
    %60 = vmatpush1.msra.mxu0 %v59
    %61 = vmatprep.subr.mxu0 0.0
    %62 = vmatpush2.msra.mxu0 0.0
    %63 = vmatprep.subr.mxu0 0.0
    %64 = vmatpush2.msra.mxu0 0.0
    %65 = vmatprep.subr.mxu0 0.0
    %66 = vmatpush2.msra.mxu0 0.0
    %67 = vmatprep.subr.mxu0 0.0
    %68 = vmatpush2.msra.mxu0 0.0
    %69 = vmatprep.subr.mxu0 0.0
    %70 = vmatpush2.msra.mxu0 0.0
    %71 = vmatprep.subr.mxu0 0.0
    %72 = vmatpush2.msra.mxu0 0.0
    %73 = vmatprep.subr.mxu0 0.0
    %74 = vmatpush2.msra.mxu0 0.0
    %75 = vmatprep.subr.mxu0 0.0
    %76 = vmatpush2.msra.mxu0 0.0
    %77 = vmatprep.subr.mxu0 0.0
    %78 = vmatpush2.msra.mxu0 0.0
    %79 = vmatprep.subr.mxu0 0.0
    %80 = vmatpush2.msra.mxu0 0.0
    %81 = vmatprep.subr.mxu0 0.0
    %82 = vmatpush2.msra.mxu0 0.0
    %83 = vmatprep.subr.mxu0 0.0
    %84 = vmatpush2.msra.mxu0 0.0
    %85 = vmatprep.subr.mxu0 0.0
    %86 = vmatpush2.msra.mxu0 0.0
    %87 = vmatprep.subr.mxu0 0.0
    %88 = vmatpush2.msra.mxu0 0.0
    %89 = vmatprep.subr.mxu0 0.0
    %90 = vmatpush2.msra.mxu0 0.0
    %91 = vmatprep.subr.mxu0 0.0
    %92 = vmatpush2.msra.mxu0 0.0
    %93 = vmatprep.mubr.f32.mxu0 0.0
    %v94 = vand.u32 %v20, 4294901760
    %v95 = vsub.f32 %v20, %v94
    %v96 = vand.u32 %v95, 4294901760
    %v97 = vsub.f32 %v95, %v96
    %v98 = vand.u32 %v97, 4294901760
    %99 = vmatmul.mubr.f32.gmra.mxu0 %v98
    %v100 = vpop.f32.mrf.mxu0
    %v101 = vadd.f32 0.0, %v100
    %v102 = vpop.f32.mrf.mxu0
    %103 = vmatprep.mubr.f32.mxu0 0.0
    %v104 = vand.u32 %v23, 4294901760
    %v105 = vsub.f32 %v23, %v104
    %v106 = vand.u32 %v105, 4294901760
    %v107 = vsub.f32 %v105, %v106
    %v108 = vand.u32 %v107, 4294901760
    %109 = vmatmul.mubr.f32.gmra.mxu0 %v108
    %v110 = vpop.f32.mrf.mxu0
    %v111 = vadd.f32 0.0, %v110
    %v112 = vpop.f32.mrf.mxu0
    %113 = vdwg.mxu0
    %114 = vmatprep.subr.mxu0 0.0
    %115 = vmatpush1.msra.mxu0 0.0
    %116 = vmatprep.subr.mxu0 0.0
    %117 = vmatpush1.msra.mxu0 0.0
    %118 = vmatprep.subr.mxu0 0.0
    %119 = vmatpush1.msra.mxu0 0.0
    %120 = vmatprep.subr.mxu0 0.0
    %121 = vmatpush1.msra.mxu0 0.0
    %122 = vmatprep.subr.mxu0 0.0
    %123 = vmatpush1.msra.mxu0 0.0
    %124 = vmatprep.subr.mxu0 0.0
    %125 = vmatpush1.msra.mxu0 0.0
    %126 = vmatprep.subr.mxu0 0.0
    %127 = vmatpush1.msra.mxu0 0.0
    %128 = vmatprep.subr.mxu0 0.0
    %129 = vmatpush1.msra.mxu0 0.0
    %130 = vmatprep.subr.mxu0 0.0
    %131 = vmatpush1.msra.mxu0 0.0
    %132 = vmatprep.subr.mxu0 0.0
    %133 = vmatpush1.msra.mxu0 0.0
    %134 = vmatprep.subr.mxu0 0.0
    %135 = vmatpush1.msra.mxu0 0.0
    %136 = vmatprep.subr.mxu0 0.0
    %137 = vmatpush1.msra.mxu0 0.0
    %138 = vmatprep.subr.mxu0 0.0
    %v139 = vand.u32 %v17, 4294901760
    %v140 = vsub.f32 %v17, %v139
    %v141 = vand.u32 %v140, 4294901760
    %v142 = vsub.f32 %v140, %v141
    %v143 = vand.u32 %v142, 4294901760
    %144 = vmatpush1.msra.mxu0 %v143
    %145 = vmatprep.subr.mxu0 0.0
    %v146 = vand.u32 %v16, 4294901760
    %v147 = vsub.f32 %v16, %v146
    %v148 = vand.u32 %v147, 4294901760
    %v149 = vsub.f32 %v147, %v148
    %v150 = vand.u32 %v149, 4294901760
    %151 = vmatpush1.msra.mxu0 %v150
    %152 = vmatprep.subr.mxu0 0.0
    %v153 = vand.u32 %v15, 4294901760
    %v154 = vsub.f32 %v15, %v153
    %v155 = vand.u32 %v154, 4294901760
    %v156 = vsub.f32 %v154, %v155
    %v157 = vand.u32 %v156, 4294901760
    %158 = vmatpush1.msra.mxu0 %v157
    %159 = vmatprep.subr.mxu0 0.0
    %v160 = vand.u32 %v14, 4294901760
    %v161 = vsub.f32 %v14, %v160
    %v162 = vand.u32 %v161, 4294901760
    %v163 = vsub.f32 %v161, %v162
    %v164 = vand.u32 %v163, 4294901760
    %165 = vmatpush1.msra.mxu0 %v164
    %166 = vmatprep.subr.mxu0 0.0
    %167 = vmatpush2.msra.mxu0 0.0
    %168 = vmatprep.subr.mxu0 0.0
    %169 = vmatpush2.msra.mxu0 0.0
    %170 = vmatprep.subr.mxu0 0.0
    %171 = vmatpush2.msra.mxu0 0.0
    %172 = vmatprep.subr.mxu0 0.0
    %173 = vmatpush2.msra.mxu0 0.0
    %174 = vmatprep.subr.mxu0 0.0
    %175 = vmatpush2.msra.mxu0 0.0
    %176 = vmatprep.subr.mxu0 0.0
    %177 = vmatpush2.msra.mxu0 0.0
    %178 = vmatprep.subr.mxu0 0.0
    %179 = vmatpush2.msra.mxu0 0.0
    %180 = vmatprep.subr.mxu0 0.0
    %181 = vmatpush2.msra.mxu0 0.0
    %182 = vmatprep.subr.mxu0 0.0
    %183 = vmatpush2.msra.mxu0 0.0
    %184 = vmatprep.subr.mxu0 0.0
    %185 = vmatpush2.msra.mxu0 0.0
    %186 = vmatprep.subr.mxu0 0.0
    %187 = vmatpush2.msra.mxu0 0.0
    %188 = vmatprep.subr.mxu0 0.0
    %189 = vmatpush2.msra.mxu0 0.0
    %190 = vmatprep.subr.mxu0 0.0
    %191 = vmatpush2.msra.mxu0 0.0
    %192 = vmatprep.subr.mxu0 0.0
    %193 = vmatpush2.msra.mxu0 0.0
    %194 = vmatprep.subr.mxu0 0.0
    %195 = vmatpush2.msra.mxu0 0.0
    %196 = vmatprep.subr.mxu0 0.0
    %197 = vmatpush2.msra.mxu0 0.0
    %198 = vmatprep.mubr.f32.mxu0 0.0
    %v199 = vand.u32 %v20, 4294901760
    %200 = vmatmul.mubr.f32.gmra.mxu0 %v199
    %v201 = vpop.f32.mrf.mxu0
    %v202 = vadd.f32 %v101, %v201
    %v203 = vpop.f32.mrf.mxu0
    %204 = vmatprep.mubr.f32.mxu0 0.0
    %v205 = vand.u32 %v23, 4294901760
    %206 = vmatmul.mubr.f32.gmra.mxu0 %v205
    %v207 = vpop.f32.mrf.mxu0
    %v208 = vadd.f32 %v111, %v207
    %v209 = vpop.f32.mrf.mxu0
    %210 = vdwg.mxu0
    %211 = vmatprep.subr.mxu0 0.0
    %212 = vmatpush1.msra.mxu0 0.0
    %213 = vmatprep.subr.mxu0 0.0
    %214 = vmatpush1.msra.mxu0 0.0
    %215 = vmatprep.subr.mxu0 0.0
    %216 = vmatpush1.msra.mxu0 0.0
    %217 = vmatprep.subr.mxu0 0.0
    %218 = vmatpush1.msra.mxu0 0.0
    %219 = vmatprep.subr.mxu0 0.0
    %220 = vmatpush1.msra.mxu0 0.0
    %221 = vmatprep.subr.mxu0 0.0
    %222 = vmatpush1.msra.mxu0 0.0
    %223 = vmatprep.subr.mxu0 0.0
    %224 = vmatpush1.msra.mxu0 0.0
    %225 = vmatprep.subr.mxu0 0.0
    %226 = vmatpush1.msra.mxu0 0.0
    %227 = vmatprep.subr.mxu0 0.0
    %228 = vmatpush1.msra.mxu0 0.0
    %229 = vmatprep.subr.mxu0 0.0
    %230 = vmatpush1.msra.mxu0 0.0
    %231 = vmatprep.subr.mxu0 0.0
    %232 = vmatpush1.msra.mxu0 0.0
    %233 = vmatprep.subr.mxu0 0.0
    %234 = vmatpush1.msra.mxu0 0.0
    %235 = vmatprep.subr.mxu0 0.0
    %v236 = vand.u32 %v17, 4294901760
    %v237 = vsub.f32 %v17, %v236
    %238 = vmatpush1.msra.mxu0 %v237
    %239 = vmatprep.subr.mxu0 0.0
    %v240 = vand.u32 %v16, 4294901760
    %v241 = vsub.f32 %v16, %v240
    %242 = vmatpush1.msra.mxu0 %v241
    %243 = vmatprep.subr.mxu0 0.0
    %v244 = vand.u32 %v15, 4294901760
    %v245 = vsub.f32 %v15, %v244
    %246 = vmatpush1.msra.mxu0 %v245
    %247 = vmatprep.subr.mxu0 0.0
    %v248 = vand.u32 %v14, 4294901760
    %v249 = vsub.f32 %v14, %v248
    %250 = vmatpush1.msra.mxu0 %v249
    %251 = vmatprep.subr.mxu0 0.0
    %252 = vmatpush2.msra.mxu0 0.0
    %253 = vmatprep.subr.mxu0 0.0
    %254 = vmatpush2.msra.mxu0 0.0
    %255 = vmatprep.subr.mxu0 0.0
    %256 = vmatpush2.msra.mxu0 0.0
    %257 = vmatprep.subr.mxu0 0.0
    %258 = vmatpush2.msra.mxu0 0.0
    %259 = vmatprep.subr.mxu0 0.0
    %260 = vmatpush2.msra.mxu0 0.0
    %261 = vmatprep.subr.mxu0 0.0
    %262 = vmatpush2.msra.mxu0 0.0
    %263 = vmatprep.subr.mxu0 0.0
    %264 = vmatpush2.msra.mxu0 0.0
    %265 = vmatprep.subr.mxu0 0.0
    %266 = vmatpush2.msra.mxu0 0.0
    %267 = vmatprep.subr.mxu0 0.0
    %268 = vmatpush2.msra.mxu0 0.0
    %269 = vmatprep.subr.mxu0 0.0
    %270 = vmatpush2.msra.mxu0 0.0
    %271 = vmatprep.subr.mxu0 0.0
    %272 = vmatpush2.msra.mxu0 0.0
    %273 = vmatprep.subr.mxu0 0.0
    %274 = vmatpush2.msra.mxu0 0.0
    %275 = vmatprep.subr.mxu0 0.0
    %276 = vmatpush2.msra.mxu0 0.0
    %277 = vmatprep.subr.mxu0 0.0
    %278 = vmatpush2.msra.mxu0 0.0
    %279 = vmatprep.subr.mxu0 0.0
    %280 = vmatpush2.msra.mxu0 0.0
    %281 = vmatprep.subr.mxu0 0.0
    %282 = vmatpush2.msra.mxu0 0.0
    %283 = vmatprep.mubr.f32.mxu0 0.0
    %v284 = vand.u32 %v20, 4294901760
    %v285 = vsub.f32 %v20, %v284
    %286 = vmatmul.mubr.f32.gmra.mxu0 %v285
    %v287 = vpop.f32.mrf.mxu0
    %v288 = vadd.f32 %v202, %v287
    %v289 = vpop.f32.mrf.mxu0
    %290 = vmatprep.mubr.f32.mxu0 0.0
    %v291 = vand.u32 %v23, 4294901760
    %v292 = vsub.f32 %v23, %v291
    %293 = vmatmul.mubr.f32.gmra.mxu0 %v292
    %v294 = vpop.f32.mrf.mxu0
    %v295 = vadd.f32 %v208, %v294
    %v296 = vpop.f32.mrf.mxu0
    %297 = vdwg.mxu0
    %298 = vmatprep.subr.mxu0 0.0
    %299 = vmatpush1.msra.mxu0 0.0
    %300 = vmatprep.subr.mxu0 0.0
    %301 = vmatpush1.msra.mxu0 0.0
    %302 = vmatprep.subr.mxu0 0.0
    %303 = vmatpush1.msra.mxu0 0.0
    %304 = vmatprep.subr.mxu0 0.0
    %305 = vmatpush1.msra.mxu0 0.0
    %306 = vmatprep.subr.mxu0 0.0
    %307 = vmatpush1.msra.mxu0 0.0
    %308 = vmatprep.subr.mxu0 0.0
    %309 = vmatpush1.msra.mxu0 0.0
    %310 = vmatprep.subr.mxu0 0.0
    %311 = vmatpush1.msra.mxu0 0.0
    %312 = vmatprep.subr.mxu0 0.0
    %313 = vmatpush1.msra.mxu0 0.0
    %314 = vmatprep.subr.mxu0 0.0
    %315 = vmatpush1.msra.mxu0 0.0
    %316 = vmatprep.subr.mxu0 0.0
    %317 = vmatpush1.msra.mxu0 0.0
    %318 = vmatprep.subr.mxu0 0.0
    %319 = vmatpush1.msra.mxu0 0.0
    %320 = vmatprep.subr.mxu0 0.0
    %321 = vmatpush1.msra.mxu0 0.0
    %322 = vmatprep.subr.mxu0 0.0
    %v323 = vand.u32 %v17, 4294901760
    %324 = vmatpush1.msra.mxu0 %v323
    %325 = vmatprep.subr.mxu0 0.0
    %v326 = vand.u32 %v16, 4294901760
    %327 = vmatpush1.msra.mxu0 %v326
    %328 = vmatprep.subr.mxu0 0.0
    %v329 = vand.u32 %v15, 4294901760
    %330 = vmatpush1.msra.mxu0 %v329
    %331 = vmatprep.subr.mxu0 0.0
    %v332 = vand.u32 %v14, 4294901760
    %333 = vmatpush1.msra.mxu0 %v332
    %334 = vmatprep.subr.mxu0 0.0
    %335 = vmatpush2.msra.mxu0 0.0
    %336 = vmatprep.subr.mxu0 0.0
    %337 = vmatpush2.msra.mxu0 0.0
    %338 = vmatprep.subr.mxu0 0.0
    %339 = vmatpush2.msra.mxu0 0.0
    %340 = vmatprep.subr.mxu0 0.0
    %341 = vmatpush2.msra.mxu0 0.0
    %342 = vmatprep.subr.mxu0 0.0
    %343 = vmatpush2.msra.mxu0 0.0
    %344 = vmatprep.subr.mxu0 0.0
    %345 = vmatpush2.msra.mxu0 0.0
    %346 = vmatprep.subr.mxu0 0.0
    %347 = vmatpush2.msra.mxu0 0.0
    %348 = vmatprep.subr.mxu0 0.0
    %349 = vmatpush2.msra.mxu0 0.0
    %350 = vmatprep.subr.mxu0 0.0
    %351 = vmatpush2.msra.mxu0 0.0
    %352 = vmatprep.subr.mxu0 0.0
    %353 = vmatpush2.msra.mxu0 0.0
    %354 = vmatprep.subr.mxu0 0.0
    %355 = vmatpush2.msra.mxu0 0.0
    %356 = vmatprep.subr.mxu0 0.0
    %357 = vmatpush2.msra.mxu0 0.0
    %358 = vmatprep.subr.mxu0 0.0
    %359 = vmatpush2.msra.mxu0 0.0
    %360 = vmatprep.subr.mxu0 0.0
    %361 = vmatpush2.msra.mxu0 0.0
    %362 = vmatprep.subr.mxu0 0.0
    %363 = vmatpush2.msra.mxu0 0.0
    %364 = vmatprep.subr.mxu0 0.0
    %365 = vmatpush2.msra.mxu0 0.0
    %366 = vmatprep.mubr.f32.mxu0 0.0
    %v367 = vand.u32 %v20, 4294901760
    %v368 = vsub.f32 %v20, %v367
    %v369 = vand.u32 %v368, 4294901760
    %370 = vmatmul.mubr.f32.gmra.mxu0 %v369
    %v371 = vpop.f32.mrf.mxu0
    %v372 = vadd.f32 %v288, %v371
    %v373 = vpop.f32.mrf.mxu0
    %374 = vmatprep.mubr.f32.mxu0 0.0
    %v375 = vand.u32 %v23, 4294901760
    %v376 = vsub.f32 %v23, %v375
    %v377 = vand.u32 %v376, 4294901760
    %378 = vmatmul.mubr.f32.gmra.mxu0 %v377
    %v379 = vpop.f32.mrf.mxu0
    %v380 = vadd.f32 %v295, %v379
    %v381 = vpop.f32.mrf.mxu0
    %382 = vdwg.mxu0
    %383 = vmatprep.subr.mxu0 0.0
    %384 = vmatpush1.msra.mxu0 0.0
    %385 = vmatprep.subr.mxu0 0.0
    %386 = vmatpush1.msra.mxu0 0.0
    %387 = vmatprep.subr.mxu0 0.0
    %388 = vmatpush1.msra.mxu0 0.0
    %389 = vmatprep.subr.mxu0 0.0
    %390 = vmatpush1.msra.mxu0 0.0
    %391 = vmatprep.subr.mxu0 0.0
    %392 = vmatpush1.msra.mxu0 0.0
    %393 = vmatprep.subr.mxu0 0.0
    %394 = vmatpush1.msra.mxu0 0.0
    %395 = vmatprep.subr.mxu0 0.0
    %396 = vmatpush1.msra.mxu0 0.0
    %397 = vmatprep.subr.mxu0 0.0
    %398 = vmatpush1.msra.mxu0 0.0
    %399 = vmatprep.subr.mxu0 0.0
    %400 = vmatpush1.msra.mxu0 0.0
    %401 = vmatprep.subr.mxu0 0.0
    %402 = vmatpush1.msra.mxu0 0.0
    %403 = vmatprep.subr.mxu0 0.0
    %404 = vmatpush1.msra.mxu0 0.0
    %405 = vmatprep.subr.mxu0 0.0
    %406 = vmatpush1.msra.mxu0 0.0
    %407 = vmatprep.subr.mxu0 0.0
    %v408 = vand.u32 %v17, 4294901760
    %v409 = vsub.f32 %v17, %v408
    %v410 = vand.u32 %v409, 4294901760
    %411 = vmatpush1.msra.mxu0 %v410
    %412 = vmatprep.subr.mxu0 0.0
    %v413 = vand.u32 %v16, 4294901760
    %v414 = vsub.f32 %v16, %v413
    %v415 = vand.u32 %v414, 4294901760
    %416 = vmatpush1.msra.mxu0 %v415
    %417 = vmatprep.subr.mxu0 0.0
    %v418 = vand.u32 %v15, 4294901760
    %v419 = vsub.f32 %v15, %v418
    %v420 = vand.u32 %v419, 4294901760
    %421 = vmatpush1.msra.mxu0 %v420
    %422 = vmatprep.subr.mxu0 0.0
    %v423 = vand.u32 %v14, 4294901760
    %v424 = vsub.f32 %v14, %v423
    %v425 = vand.u32 %v424, 4294901760
    %426 = vmatpush1.msra.mxu0 %v425
    %427 = vmatprep.subr.mxu0 0.0
    %428 = vmatpush2.msra.mxu0 0.0
    %429 = vmatprep.subr.mxu0 0.0
    %430 = vmatpush2.msra.mxu0 0.0
    %431 = vmatprep.subr.mxu0 0.0
    %432 = vmatpush2.msra.mxu0 0.0
    %433 = vmatprep.subr.mxu0 0.0
    %434 = vmatpush2.msra.mxu0 0.0
    %435 = vmatprep.subr.mxu0 0.0
    %436 = vmatpush2.msra.mxu0 0.0
    %437 = vmatprep.subr.mxu0 0.0
    %438 = vmatpush2.msra.mxu0 0.0
    %439 = vmatprep.subr.mxu0 0.0
    %440 = vmatpush2.msra.mxu0 0.0
    %441 = vmatprep.subr.mxu0 0.0
    %442 = vmatpush2.msra.mxu0 0.0
    %443 = vmatprep.subr.mxu0 0.0
    %444 = vmatpush2.msra.mxu0 0.0
    %445 = vmatprep.subr.mxu0 0.0
    %446 = vmatpush2.msra.mxu0 0.0
    %447 = vmatprep.subr.mxu0 0.0
    %448 = vmatpush2.msra.mxu0 0.0
    %449 = vmatprep.subr.mxu0 0.0
    %450 = vmatpush2.msra.mxu0 0.0
    %451 = vmatprep.subr.mxu0 0.0
    %452 = vmatpush2.msra.mxu0 0.0
    %453 = vmatprep.subr.mxu0 0.0
    %454 = vmatpush2.msra.mxu0 0.0
    %455 = vmatprep.subr.mxu0 0.0
    %456 = vmatpush2.msra.mxu0 0.0
    %457 = vmatprep.subr.mxu0 0.0
    %458 = vmatpush2.msra.mxu0 0.0
    %459 = vmatprep.mubr.f32.mxu0 0.0
    %v460 = vand.u32 %v20, 4294901760
    %461 = vmatmul.mubr.f32.gmra.mxu0 %v460
    %v462 = vpop.f32.mrf.mxu0
    %v463 = vadd.f32 %v372, %v462
    %v464 = vpop.f32.mrf.mxu0
    %465 = vmatprep.mubr.f32.mxu0 0.0
    %v466 = vand.u32 %v23, 4294901760
    %467 = vmatmul.mubr.f32.gmra.mxu0 %v466
    %v468 = vpop.f32.mrf.mxu0
    %v469 = vadd.f32 %v380, %v468
    %v470 = vpop.f32.mrf.mxu0
    %471 = vdwg.mxu0
    %472 = vmatprep.subr.mxu0 0.0
    %473 = vmatpush1.msra.mxu0 0.0
    %474 = vmatprep.subr.mxu0 0.0
    %475 = vmatpush1.msra.mxu0 0.0
    %476 = vmatprep.subr.mxu0 0.0
    %477 = vmatpush1.msra.mxu0 0.0
    %478 = vmatprep.subr.mxu0 0.0
    %479 = vmatpush1.msra.mxu0 0.0
    %480 = vmatprep.subr.mxu0 0.0
    %481 = vmatpush1.msra.mxu0 0.0
    %482 = vmatprep.subr.mxu0 0.0
    %483 = vmatpush1.msra.mxu0 0.0
    %484 = vmatprep.subr.mxu0 0.0
    %485 = vmatpush1.msra.mxu0 0.0
    %486 = vmatprep.subr.mxu0 0.0
    %487 = vmatpush1.msra.mxu0 0.0
    %488 = vmatprep.subr.mxu0 0.0
    %489 = vmatpush1.msra.mxu0 0.0
    %490 = vmatprep.subr.mxu0 0.0
    %491 = vmatpush1.msra.mxu0 0.0
    %492 = vmatprep.subr.mxu0 0.0
    %493 = vmatpush1.msra.mxu0 0.0
    %494 = vmatprep.subr.mxu0 0.0
    %495 = vmatpush1.msra.mxu0 0.0
    %496 = vmatprep.subr.mxu0 0.0
    %v497 = vand.u32 %v17, 4294901760
    %498 = vmatpush1.msra.mxu0 %v497
    %499 = vmatprep.subr.mxu0 0.0
    %v500 = vand.u32 %v16, 4294901760
    %501 = vmatpush1.msra.mxu0 %v500
    %502 = vmatprep.subr.mxu0 0.0
    %v503 = vand.u32 %v15, 4294901760
    %504 = vmatpush1.msra.mxu0 %v503
    %505 = vmatprep.subr.mxu0 0.0
    %v506 = vand.u32 %v14, 4294901760
    %507 = vmatpush1.msra.mxu0 %v506
    %508 = vmatprep.subr.mxu0 0.0
    %509 = vmatpush2.msra.mxu0 0.0
    %510 = vmatprep.subr.mxu0 0.0
    %511 = vmatpush2.msra.mxu0 0.0
    %512 = vmatprep.subr.mxu0 0.0
    %513 = vmatpush2.msra.mxu0 0.0
    %514 = vmatprep.subr.mxu0 0.0
    %515 = vmatpush2.msra.mxu0 0.0
    %516 = vmatprep.subr.mxu0 0.0
    %517 = vmatpush2.msra.mxu0 0.0
    %518 = vmatprep.subr.mxu0 0.0
    %519 = vmatpush2.msra.mxu0 0.0
    %520 = vmatprep.subr.mxu0 0.0
    %521 = vmatpush2.msra.mxu0 0.0
    %522 = vmatprep.subr.mxu0 0.0
    %523 = vmatpush2.msra.mxu0 0.0
    %524 = vmatprep.subr.mxu0 0.0
    %525 = vmatpush2.msra.mxu0 0.0
    %526 = vmatprep.subr.mxu0 0.0
    %527 = vmatpush2.msra.mxu0 0.0
    %528 = vmatprep.subr.mxu0 0.0
    %529 = vmatpush2.msra.mxu0 0.0
    %530 = vmatprep.subr.mxu0 0.0
    %531 = vmatpush2.msra.mxu0 0.0
    %532 = vmatprep.subr.mxu0 0.0
    %533 = vmatpush2.msra.mxu0 0.0
    %534 = vmatprep.subr.mxu0 0.0
    %535 = vmatpush2.msra.mxu0 0.0
    %536 = vmatprep.subr.mxu0 0.0
    %537 = vmatpush2.msra.mxu0 0.0
    %538 = vmatprep.subr.mxu0 0.0
    %539 = vmatpush2.msra.mxu0 0.0
    %540 = vmatprep.mubr.f32.mxu0 0.0
    %v541 = vand.u32 %v20, 4294901760
    %542 = vmatmul.mubr.f32.gmra.mxu0 %v541
    %v543 = vpop.f32.mrf.mxu0
    %v544 = vadd.f32 %v463, %v543
    %v545 = vpop.f32.mrf.mxu0
    %546 = vmatprep.mubr.f32.mxu0 0.0
    %v547 = vand.u32 %v23, 4294901760
    %548 = vmatmul.mubr.f32.gmra.mxu0 %v547
    %v549 = vpop.f32.mrf.mxu0
    %v550 = vadd.f32 %v469, %v549
    %v551 = vpop.f32.mrf.mxu0
    %552 = vdwg.mxu0
    %s553 = scalar_lea.vmem %s1, 32
    %v554 = vld [vmem:[%s553] sm:$0xff]
    %v555 = vld [vmem:[%s553 + $0x8] sm:$0xff]
    %v556 = vld [vmem:[%s553 + $0x10] sm:$0xff]
    %v557 = vld [vmem:[%s553 + $0x18] sm:$0xff]
    %558 = vmatprep.subr.mxu0 0.0
    %559 = vmatpush1.msra.mxu0 0.0
    %560 = vmatprep.subr.mxu0 0.0
    %561 = vmatpush1.msra.mxu0 0.0
    %562 = vmatprep.subr.mxu0 0.0
    %563 = vmatpush1.msra.mxu0 0.0
    %564 = vmatprep.subr.mxu0 0.0
    %565 = vmatpush1.msra.mxu0 0.0
    %566 = vmatprep.subr.mxu0 0.0
    %567 = vmatpush1.msra.mxu0 0.0
    %568 = vmatprep.subr.mxu0 0.0
    %569 = vmatpush1.msra.mxu0 0.0
    %570 = vmatprep.subr.mxu0 0.0
    %571 = vmatpush1.msra.mxu0 0.0
    %572 = vmatprep.subr.mxu0 0.0
    %573 = vmatpush1.msra.mxu0 0.0
    %574 = vmatprep.subr.mxu0 0.0
    %575 = vmatpush1.msra.mxu0 0.0
    %576 = vmatprep.subr.mxu0 0.0
    %577 = vmatpush1.msra.mxu0 0.0
    %578 = vmatprep.subr.mxu0 0.0
    %579 = vmatpush1.msra.mxu0 0.0
    %580 = vmatprep.subr.mxu0 0.0
    %581 = vmatpush1.msra.mxu0 0.0
    %582 = vmatprep.subr.mxu0 0.0
    %v583 = vand.u32 %v557, 4294901760
    %584 = vmatpush1.msra.mxu0 %v583
    %585 = vmatprep.subr.mxu0 0.0
    %v586 = vand.u32 %v556, 4294901760
    %587 = vmatpush1.msra.mxu0 %v586
    %588 = vmatprep.subr.mxu0 0.0
    %v589 = vand.u32 %v555, 4294901760
    %590 = vmatpush1.msra.mxu0 %v589
    %591 = vmatprep.subr.mxu0 0.0
    %v592 = vand.u32 %v554, 4294901760
    %593 = vmatpush1.msra.mxu0 %v592
    %594 = vmatprep.subr.mxu0 0.0
    %595 = vmatpush2.msra.mxu0 0.0
    %596 = vmatprep.subr.mxu0 0.0
    %597 = vmatpush2.msra.mxu0 0.0
    %598 = vmatprep.subr.mxu0 0.0
    %599 = vmatpush2.msra.mxu0 0.0
    %600 = vmatprep.subr.mxu0 0.0
    %601 = vmatpush2.msra.mxu0 0.0
    %602 = vmatprep.subr.mxu0 0.0
    %603 = vmatpush2.msra.mxu0 0.0
    %604 = vmatprep.subr.mxu0 0.0
    %605 = vmatpush2.msra.mxu0 0.0
    %606 = vmatprep.subr.mxu0 0.0
    %607 = vmatpush2.msra.mxu0 0.0
    %608 = vmatprep.subr.mxu0 0.0
    %609 = vmatpush2.msra.mxu0 0.0
    %610 = vmatprep.subr.mxu0 0.0
    %611 = vmatpush2.msra.mxu0 0.0
    %612 = vmatprep.subr.mxu0 0.0
    %613 = vmatpush2.msra.mxu0 0.0
    %614 = vmatprep.subr.mxu0 0.0
    %615 = vmatpush2.msra.mxu0 0.0
    %616 = vmatprep.subr.mxu0 0.0
    %617 = vmatpush2.msra.mxu0 0.0
    %618 = vmatprep.subr.mxu0 0.0
    %619 = vmatpush2.msra.mxu0 0.0
    %620 = vmatprep.subr.mxu0 0.0
    %621 = vmatpush2.msra.mxu0 0.0
    %622 = vmatprep.subr.mxu0 0.0
    %623 = vmatpush2.msra.mxu0 0.0
    %624 = vmatprep.subr.mxu0 0.0
    %625 = vmatpush2.msra.mxu0 0.0
    %626 = vmatprep.mubr.f32.mxu0 0.0
    %v627 = vand.u32 %v20, 4294901760
    %v628 = vsub.f32 %v20, %v627
    %v629 = vand.u32 %v628, 4294901760
    %v630 = vsub.f32 %v628, %v629
    %v631 = vand.u32 %v630, 4294901760
    %632 = vmatmul.mubr.f32.gmra.mxu0 %v631
    %v633 = vpop.f32.mrf.mxu0
    %v634 = vadd.f32 0.0, %v633
    %v635 = vpop.f32.mrf.mxu0
    %636 = vmatprep.mubr.f32.mxu0 0.0
    %v637 = vand.u32 %v23, 4294901760
    %v638 = vsub.f32 %v23, %v637
    %v639 = vand.u32 %v638, 4294901760
    %v640 = vsub.f32 %v638, %v639
    %v641 = vand.u32 %v640, 4294901760
    %642 = vmatmul.mubr.f32.gmra.mxu0 %v641
    %v643 = vpop.f32.mrf.mxu0
    %v644 = vadd.f32 0.0, %v643
    %v645 = vpop.f32.mrf.mxu0
    %646 = vdwg.mxu0
    %647 = vmatprep.subr.mxu0 0.0
    %648 = vmatpush1.msra.mxu0 0.0
    %649 = vmatprep.subr.mxu0 0.0
    %650 = vmatpush1.msra.mxu0 0.0
    %651 = vmatprep.subr.mxu0 0.0
    %652 = vmatpush1.msra.mxu0 0.0
    %653 = vmatprep.subr.mxu0 0.0
    %654 = vmatpush1.msra.mxu0 0.0
    %655 = vmatprep.subr.mxu0 0.0
    %656 = vmatpush1.msra.mxu0 0.0
    %657 = vmatprep.subr.mxu0 0.0
    %658 = vmatpush1.msra.mxu0 0.0
    %659 = vmatprep.subr.mxu0 0.0
    %660 = vmatpush1.msra.mxu0 0.0
    %661 = vmatprep.subr.mxu0 0.0
    %662 = vmatpush1.msra.mxu0 0.0
    %663 = vmatprep.subr.mxu0 0.0
    %664 = vmatpush1.msra.mxu0 0.0
    %665 = vmatprep.subr.mxu0 0.0
    %666 = vmatpush1.msra.mxu0 0.0
    %667 = vmatprep.subr.mxu0 0.0
    %668 = vmatpush1.msra.mxu0 0.0
    %669 = vmatprep.subr.mxu0 0.0
    %670 = vmatpush1.msra.mxu0 0.0
    %671 = vmatprep.subr.mxu0 0.0
    %v672 = vand.u32 %v557, 4294901760
    %v673 = vsub.f32 %v557, %v672
    %v674 = vand.u32 %v673, 4294901760
    %v675 = vsub.f32 %v673, %v674
    %v676 = vand.u32 %v675, 4294901760
    %677 = vmatpush1.msra.mxu0 %v676
    %678 = vmatprep.subr.mxu0 0.0
    %v679 = vand.u32 %v556, 4294901760
    %v680 = vsub.f32 %v556, %v679
    %v681 = vand.u32 %v680, 4294901760
    %v682 = vsub.f32 %v680, %v681
    %v683 = vand.u32 %v682, 4294901760
    %684 = vmatpush1.msra.mxu0 %v683
    %685 = vmatprep.subr.mxu0 0.0
    %v686 = vand.u32 %v555, 4294901760
    %v687 = vsub.f32 %v555, %v686
    %v688 = vand.u32 %v687, 4294901760
    %v689 = vsub.f32 %v687, %v688
    %v690 = vand.u32 %v689, 4294901760
    %691 = vmatpush1.msra.mxu0 %v690
    %692 = vmatprep.subr.mxu0 0.0
    %v693 = vand.u32 %v554, 4294901760
    %v694 = vsub.f32 %v554, %v693
    %v695 = vand.u32 %v694, 4294901760
    %v696 = vsub.f32 %v694, %v695
    %v697 = vand.u32 %v696, 4294901760
    %698 = vmatpush1.msra.mxu0 %v697
    %699 = vmatprep.subr.mxu0 0.0
    %700 = vmatpush2.msra.mxu0 0.0
    %701 = vmatprep.subr.mxu0 0.0
    %702 = vmatpush2.msra.mxu0 0.0
    %703 = vmatprep.subr.mxu0 0.0
    %704 = vmatpush2.msra.mxu0 0.0
    %705 = vmatprep.subr.mxu0 0.0
    %706 = vmatpush2.msra.mxu0 0.0
    %707 = vmatprep.subr.mxu0 0.0
    %708 = vmatpush2.msra.mxu0 0.0
    %709 = vmatprep.subr.mxu0 0.0
    %710 = vmatpush2.msra.mxu0 0.0
    %711 = vmatprep.subr.mxu0 0.0
    %712 = vmatpush2.msra.mxu0 0.0
    %713 = vmatprep.subr.mxu0 0.0
    %714 = vmatpush2.msra.mxu0 0.0
    %715 = vmatprep.subr.mxu0 0.0
    %716 = vmatpush2.msra.mxu0 0.0
    %717 = vmatprep.subr.mxu0 0.0
    %718 = vmatpush2.msra.mxu0 0.0
    %719 = vmatprep.subr.mxu0 0.0
    %720 = vmatpush2.msra.mxu0 0.0
    %721 = vmatprep.subr.mxu0 0.0
    %722 = vmatpush2.msra.mxu0 0.0
    %723 = vmatprep.subr.mxu0 0.0
    %724 = vmatpush2.msra.mxu0 0.0
    %725 = vmatprep.subr.mxu0 0.0
    %726 = vmatpush2.msra.mxu0 0.0
    %727 = vmatprep.subr.mxu0 0.0
    %728 = vmatpush2.msra.mxu0 0.0
    %729 = vmatprep.subr.mxu0 0.0
    %730 = vmatpush2.msra.mxu0 0.0
    %731 = vmatprep.mubr.f32.mxu0 0.0
    %v732 = vand.u32 %v20, 4294901760
    %733 = vmatmul.mubr.f32.gmra.mxu0 %v732
    %v734 = vpop.f32.mrf.mxu0
    %v735 = vadd.f32 %v634, %v734
    %v736 = vpop.f32.mrf.mxu0
    %737 = vmatprep.mubr.f32.mxu0 0.0
    %v738 = vand.u32 %v23, 4294901760
    %739 = vmatmul.mubr.f32.gmra.mxu0 %v738
    %v740 = vpop.f32.mrf.mxu0
    %v741 = vadd.f32 %v644, %v740
    %v742 = vpop.f32.mrf.mxu0
    %743 = vdwg.mxu0
    %744 = vmatprep.subr.mxu0 0.0
    %745 = vmatpush1.msra.mxu0 0.0
    %746 = vmatprep.subr.mxu0 0.0
    %747 = vmatpush1.msra.mxu0 0.0
    %748 = vmatprep.subr.mxu0 0.0
    %749 = vmatpush1.msra.mxu0 0.0
    %750 = vmatprep.subr.mxu0 0.0
    %751 = vmatpush1.msra.mxu0 0.0
    %752 = vmatprep.subr.mxu0 0.0
    %753 = vmatpush1.msra.mxu0 0.0
    %754 = vmatprep.subr.mxu0 0.0
    %755 = vmatpush1.msra.mxu0 0.0
    %756 = vmatprep.subr.mxu0 0.0
    %757 = vmatpush1.msra.mxu0 0.0
    %758 = vmatprep.subr.mxu0 0.0
    %759 = vmatpush1.msra.mxu0 0.0
    %760 = vmatprep.subr.mxu0 0.0
    %761 = vmatpush1.msra.mxu0 0.0
    %762 = vmatprep.subr.mxu0 0.0
    %763 = vmatpush1.msra.mxu0 0.0
    %764 = vmatprep.subr.mxu0 0.0
    %765 = vmatpush1.msra.mxu0 0.0
    %766 = vmatprep.subr.mxu0 0.0
    %767 = vmatpush1.msra.mxu0 0.0
    %768 = vmatprep.subr.mxu0 0.0
    %v769 = vand.u32 %v557, 4294901760
    %v770 = vsub.f32 %v557, %v769
    %771 = vmatpush1.msra.mxu0 %v770
    %772 = vmatprep.subr.mxu0 0.0
    %v773 = vand.u32 %v556, 4294901760
    %v774 = vsub.f32 %v556, %v773
    %775 = vmatpush1.msra.mxu0 %v774
    %776 = vmatprep.subr.mxu0 0.0
    %v777 = vand.u32 %v555, 4294901760
    %v778 = vsub.f32 %v555, %v777
    %779 = vmatpush1.msra.mxu0 %v778
    %780 = vmatprep.subr.mxu0 0.0
    %v781 = vand.u32 %v554, 4294901760
    %v782 = vsub.f32 %v554, %v781
    %783 = vmatpush1.msra.mxu0 %v782
    %784 = vmatprep.subr.mxu0 0.0
    %785 = vmatpush2.msra.mxu0 0.0
    %786 = vmatprep.subr.mxu0 0.0
    %787 = vmatpush2.msra.mxu0 0.0
    %788 = vmatprep.subr.mxu0 0.0
    %789 = vmatpush2.msra.mxu0 0.0
    %790 = vmatprep.subr.mxu0 0.0
    %791 = vmatpush2.msra.mxu0 0.0
    %792 = vmatprep.subr.mxu0 0.0
    %793 = vmatpush2.msra.mxu0 0.0
    %794 = vmatprep.subr.mxu0 0.0
    %795 = vmatpush2.msra.mxu0 0.0
    %796 = vmatprep.subr.mxu0 0.0
    %797 = vmatpush2.msra.mxu0 0.0
    %798 = vmatprep.subr.mxu0 0.0
    %799 = vmatpush2.msra.mxu0 0.0
    %800 = vmatprep.subr.mxu0 0.0
    %801 = vmatpush2.msra.mxu0 0.0
    %802 = vmatprep.subr.mxu0 0.0
    %803 = vmatpush2.msra.mxu0 0.0
    %804 = vmatprep.subr.mxu0 0.0
    %805 = vmatpush2.msra.mxu0 0.0
    %806 = vmatprep.subr.mxu0 0.0
    %807 = vmatpush2.msra.mxu0 0.0
    %808 = vmatprep.subr.mxu0 0.0
    %809 = vmatpush2.msra.mxu0 0.0
    %810 = vmatprep.subr.mxu0 0.0
    %811 = vmatpush2.msra.mxu0 0.0
    %812 = vmatprep.subr.mxu0 0.0
    %813 = vmatpush2.msra.mxu0 0.0
    %814 = vmatprep.subr.mxu0 0.0
    %815 = vmatpush2.msra.mxu0 0.0
    %816 = vmatprep.mubr.f32.mxu0 0.0
    %v817 = vand.u32 %v20, 4294901760
    %v818 = vsub.f32 %v20, %v817
    %819 = vmatmul.mubr.f32.gmra.mxu0 %v818
    %v820 = vpop.f32.mrf.mxu0
    %v821 = vadd.f32 %v735, %v820
    %v822 = vpop.f32.mrf.mxu0
    %823 = vmatprep.mubr.f32.mxu0 0.0
    %v824 = vand.u32 %v23, 4294901760
    %v825 = vsub.f32 %v23, %v824
    %826 = vmatmul.mubr.f32.gmra.mxu0 %v825
    %v827 = vpop.f32.mrf.mxu0
    %v828 = vadd.f32 %v741, %v827
    %v829 = vpop.f32.mrf.mxu0
    %830 = vdwg.mxu0
    %831 = vmatprep.subr.mxu0 0.0
    %832 = vmatpush1.msra.mxu0 0.0
    %833 = vmatprep.subr.mxu0 0.0
    %834 = vmatpush1.msra.mxu0 0.0
    %835 = vmatprep.subr.mxu0 0.0
    %836 = vmatpush1.msra.mxu0 0.0
    %837 = vmatprep.subr.mxu0 0.0
    %838 = vmatpush1.msra.mxu0 0.0
    %839 = vmatprep.subr.mxu0 0.0
    %840 = vmatpush1.msra.mxu0 0.0
    %841 = vmatprep.subr.mxu0 0.0
    %842 = vmatpush1.msra.mxu0 0.0
    %843 = vmatprep.subr.mxu0 0.0
    %844 = vmatpush1.msra.mxu0 0.0
    %845 = vmatprep.subr.mxu0 0.0
    %846 = vmatpush1.msra.mxu0 0.0
    %847 = vmatprep.subr.mxu0 0.0
    %848 = vmatpush1.msra.mxu0 0.0
    %849 = vmatprep.subr.mxu0 0.0
    %850 = vmatpush1.msra.mxu0 0.0
    %851 = vmatprep.subr.mxu0 0.0
    %852 = vmatpush1.msra.mxu0 0.0
    %853 = vmatprep.subr.mxu0 0.0
    %854 = vmatpush1.msra.mxu0 0.0
    %855 = vmatprep.subr.mxu0 0.0
    %v856 = vand.u32 %v557, 4294901760
    %857 = vmatpush1.msra.mxu0 %v856
    %858 = vmatprep.subr.mxu0 0.0
    %v859 = vand.u32 %v556, 4294901760
    %860 = vmatpush1.msra.mxu0 %v859
    %861 = vmatprep.subr.mxu0 0.0
    %v862 = vand.u32 %v555, 4294901760
    %863 = vmatpush1.msra.mxu0 %v862
    %864 = vmatprep.subr.mxu0 0.0
    %v865 = vand.u32 %v554, 4294901760
    %866 = vmatpush1.msra.mxu0 %v865
    %867 = vmatprep.subr.mxu0 0.0
    %868 = vmatpush2.msra.mxu0 0.0
    %869 = vmatprep.subr.mxu0 0.0
    %870 = vmatpush2.msra.mxu0 0.0
    %871 = vmatprep.subr.mxu0 0.0
    %872 = vmatpush2.msra.mxu0 0.0
    %873 = vmatprep.subr.mxu0 0.0
    %874 = vmatpush2.msra.mxu0 0.0
    %875 = vmatprep.subr.mxu0 0.0
    %876 = vmatpush2.msra.mxu0 0.0
    %877 = vmatprep.subr.mxu0 0.0
    %878 = vmatpush2.msra.mxu0 0.0
    %879 = vmatprep.subr.mxu0 0.0
    %880 = vmatpush2.msra.mxu0 0.0
    %881 = vmatprep.subr.mxu0 0.0
    %882 = vmatpush2.msra.mxu0 0.0
    %883 = vmatprep.subr.mxu0 0.0
    %884 = vmatpush2.msra.mxu0 0.0
    %885 = vmatprep.subr.mxu0 0.0
    %886 = vmatpush2.msra.mxu0 0.0
    %887 = vmatprep.subr.mxu0 0.0
    %888 = vmatpush2.msra.mxu0 0.0
    %889 = vmatprep.subr.mxu0 0.0
    %890 = vmatpush2.msra.mxu0 0.0
    %891 = vmatprep.subr.mxu0 0.0
    %892 = vmatpush2.msra.mxu0 0.0
    %893 = vmatprep.subr.mxu0 0.0
    %894 = vmatpush2.msra.mxu0 0.0
    %895 = vmatprep.subr.mxu0 0.0
    %896 = vmatpush2.msra.mxu0 0.0
    %897 = vmatprep.subr.mxu0 0.0
    %898 = vmatpush2.msra.mxu0 0.0
    %899 = vmatprep.mubr.f32.mxu0 0.0
    %v900 = vand.u32 %v20, 4294901760
    %v901 = vsub.f32 %v20, %v900
    %v902 = vand.u32 %v901, 4294901760
    %903 = vmatmul.mubr.f32.gmra.mxu0 %v902
    %v904 = vpop.f32.mrf.mxu0
    %v905 = vadd.f32 %v821, %v904
    %v906 = vpop.f32.mrf.mxu0
    %907 = vmatprep.mubr.f32.mxu0 0.0
    %v908 = vand.u32 %v23, 4294901760
    %v909 = vsub.f32 %v23, %v908
    %v910 = vand.u32 %v909, 4294901760
    %911 = vmatmul.mubr.f32.gmra.mxu0 %v910
    %v912 = vpop.f32.mrf.mxu0
    %v913 = vadd.f32 %v828, %v912
    %v914 = vpop.f32.mrf.mxu0
    %915 = vdwg.mxu0
    %916 = vmatprep.subr.mxu0 0.0
    %917 = vmatpush1.msra.mxu0 0.0
    %918 = vmatprep.subr.mxu0 0.0
    %919 = vmatpush1.msra.mxu0 0.0
    %920 = vmatprep.subr.mxu0 0.0
    %921 = vmatpush1.msra.mxu0 0.0
    %922 = vmatprep.subr.mxu0 0.0
    %923 = vmatpush1.msra.mxu0 0.0
    %924 = vmatprep.subr.mxu0 0.0
    %925 = vmatpush1.msra.mxu0 0.0
    %926 = vmatprep.subr.mxu0 0.0
    %927 = vmatpush1.msra.mxu0 0.0
    %928 = vmatprep.subr.mxu0 0.0
    %929 = vmatpush1.msra.mxu0 0.0
    %930 = vmatprep.subr.mxu0 0.0
    %931 = vmatpush1.msra.mxu0 0.0
    %932 = vmatprep.subr.mxu0 0.0
    %933 = vmatpush1.msra.mxu0 0.0
    %934 = vmatprep.subr.mxu0 0.0
    %935 = vmatpush1.msra.mxu0 0.0
    %936 = vmatprep.subr.mxu0 0.0
    %937 = vmatpush1.msra.mxu0 0.0
    %938 = vmatprep.subr.mxu0 0.0
    %939 = vmatpush1.msra.mxu0 0.0
    %940 = vmatprep.subr.mxu0 0.0
    %v941 = vand.u32 %v557, 4294901760
    %v942 = vsub.f32 %v557, %v941
    %v943 = vand.u32 %v942, 4294901760
    %944 = vmatpush1.msra.mxu0 %v943
    %945 = vmatprep.subr.mxu0 0.0
    %v946 = vand.u32 %v556, 4294901760
    %v947 = vsub.f32 %v556, %v946
    %v948 = vand.u32 %v947, 4294901760
    %949 = vmatpush1.msra.mxu0 %v948
    %950 = vmatprep.subr.mxu0 0.0
    %v951 = vand.u32 %v555, 4294901760
    %v952 = vsub.f32 %v555, %v951
    %v953 = vand.u32 %v952, 4294901760
    %954 = vmatpush1.msra.mxu0 %v953
    %955 = vmatprep.subr.mxu0 0.0
    %v956 = vand.u32 %v554, 4294901760
    %v957 = vsub.f32 %v554, %v956
    %v958 = vand.u32 %v957, 4294901760
    %959 = vmatpush1.msra.mxu0 %v958
    %960 = vmatprep.subr.mxu0 0.0
    %961 = vmatpush2.msra.mxu0 0.0
    %962 = vmatprep.subr.mxu0 0.0
    %963 = vmatpush2.msra.mxu0 0.0
    %964 = vmatprep.subr.mxu0 0.0
    %965 = vmatpush2.msra.mxu0 0.0
    %966 = vmatprep.subr.mxu0 0.0
    %967 = vmatpush2.msra.mxu0 0.0
    %968 = vmatprep.subr.mxu0 0.0
    %969 = vmatpush2.msra.mxu0 0.0
    %970 = vmatprep.subr.mxu0 0.0
    %971 = vmatpush2.msra.mxu0 0.0
    %972 = vmatprep.subr.mxu0 0.0
    %973 = vmatpush2.msra.mxu0 0.0
    %974 = vmatprep.subr.mxu0 0.0
    %975 = vmatpush2.msra.mxu0 0.0
    %976 = vmatprep.subr.mxu0 0.0
    %977 = vmatpush2.msra.mxu0 0.0
    %978 = vmatprep.subr.mxu0 0.0
    %979 = vmatpush2.msra.mxu0 0.0
    %980 = vmatprep.subr.mxu0 0.0
    %981 = vmatpush2.msra.mxu0 0.0
    %982 = vmatprep.subr.mxu0 0.0
    %983 = vmatpush2.msra.mxu0 0.0
    %984 = vmatprep.subr.mxu0 0.0
    %985 = vmatpush2.msra.mxu0 0.0
    %986 = vmatprep.subr.mxu0 0.0
    %987 = vmatpush2.msra.mxu0 0.0
    %988 = vmatprep.subr.mxu0 0.0
    %989 = vmatpush2.msra.mxu0 0.0
    %990 = vmatprep.subr.mxu0 0.0
    %991 = vmatpush2.msra.mxu0 0.0
    %992 = vmatprep.mubr.f32.mxu0 0.0
    %v993 = vand.u32 %v20, 4294901760
    %994 = vmatmul.mubr.f32.gmra.mxu0 %v993
    %v995 = vpop.f32.mrf.mxu0
    %v996 = vadd.f32 %v905, %v995
    %v997 = vpop.f32.mrf.mxu0
    %998 = vmatprep.mubr.f32.mxu0 0.0
    %v999 = vand.u32 %v23, 4294901760
    %1000 = vmatmul.mubr.f32.gmra.mxu0 %v999
    %v1001 = vpop.f32.mrf.mxu0
    %v1002 = vadd.f32 %v913, %v1001
    %v1003 = vpop.f32.mrf.mxu0
    %1004 = vdwg.mxu0
    %1005 = vmatprep.subr.mxu0 0.0
    %1006 = vmatpush1.msra.mxu0 0.0
    %1007 = vmatprep.subr.mxu0 0.0
    %1008 = vmatpush1.msra.mxu0 0.0
    %1009 = vmatprep.subr.mxu0 0.0
    %1010 = vmatpush1.msra.mxu0 0.0
    %1011 = vmatprep.subr.mxu0 0.0
    %1012 = vmatpush1.msra.mxu0 0.0
    %1013 = vmatprep.subr.mxu0 0.0
    %1014 = vmatpush1.msra.mxu0 0.0
    %1015 = vmatprep.subr.mxu0 0.0
    %1016 = vmatpush1.msra.mxu0 0.0
    %1017 = vmatprep.subr.mxu0 0.0
    %1018 = vmatpush1.msra.mxu0 0.0
    %1019 = vmatprep.subr.mxu0 0.0
    %1020 = vmatpush1.msra.mxu0 0.0
    %1021 = vmatprep.subr.mxu0 0.0
    %1022 = vmatpush1.msra.mxu0 0.0
    %1023 = vmatprep.subr.mxu0 0.0
    %1024 = vmatpush1.msra.mxu0 0.0
    %1025 = vmatprep.subr.mxu0 0.0
    %1026 = vmatpush1.msra.mxu0 0.0
    %1027 = vmatprep.subr.mxu0 0.0
    %1028 = vmatpush1.msra.mxu0 0.0
    %1029 = vmatprep.subr.mxu0 0.0
    %v1030 = vand.u32 %v557, 4294901760
    %1031 = vmatpush1.msra.mxu0 %v1030
    %1032 = vmatprep.subr.mxu0 0.0
    %v1033 = vand.u32 %v556, 4294901760
    %1034 = vmatpush1.msra.mxu0 %v1033
    %1035 = vmatprep.subr.mxu0 0.0
    %v1036 = vand.u32 %v555, 4294901760
    %1037 = vmatpush1.msra.mxu0 %v1036
    %1038 = vmatprep.subr.mxu0 0.0
    %v1039 = vand.u32 %v554, 4294901760
    %1040 = vmatpush1.msra.mxu0 %v1039
    %1041 = vmatprep.subr.mxu0 0.0
    %1042 = vmatpush2.msra.mxu0 0.0
    %1043 = vmatprep.subr.mxu0 0.0
    %1044 = vmatpush2.msra.mxu0 0.0
    %1045 = vmatprep.subr.mxu0 0.0
    %1046 = vmatpush2.msra.mxu0 0.0
    %1047 = vmatprep.subr.mxu0 0.0
    %1048 = vmatpush2.msra.mxu0 0.0
    %1049 = vmatprep.subr.mxu0 0.0
    %1050 = vmatpush2.msra.mxu0 0.0
    %1051 = vmatprep.subr.mxu0 0.0
    %1052 = vmatpush2.msra.mxu0 0.0
    %1053 = vmatprep.subr.mxu0 0.0
    %1054 = vmatpush2.msra.mxu0 0.0
    %1055 = vmatprep.subr.mxu0 0.0
    %1056 = vmatpush2.msra.mxu0 0.0
    %1057 = vmatprep.subr.mxu0 0.0
    %1058 = vmatpush2.msra.mxu0 0.0
    %1059 = vmatprep.subr.mxu0 0.0
    %1060 = vmatpush2.msra.mxu0 0.0
    %1061 = vmatprep.subr.mxu0 0.0
    %1062 = vmatpush2.msra.mxu0 0.0
    %1063 = vmatprep.subr.mxu0 0.0
    %1064 = vmatpush2.msra.mxu0 0.0
    %1065 = vmatprep.subr.mxu0 0.0
    %1066 = vmatpush2.msra.mxu0 0.0
    %1067 = vmatprep.subr.mxu0 0.0
    %1068 = vmatpush2.msra.mxu0 0.0
    %1069 = vmatprep.subr.mxu0 0.0
    %1070 = vmatpush2.msra.mxu0 0.0
    %1071 = vmatprep.subr.mxu0 0.0
    %1072 = vmatpush2.msra.mxu0 0.0
    %1073 = vmatprep.mubr.f32.mxu0 0.0
    %v1074 = vand.u32 %v20, 4294901760
    %1075 = vmatmul.mubr.f32.gmra.mxu0 %v1074
    %v1076 = vpop.f32.mrf.mxu0
    %v1077 = vadd.f32 %v996, %v1076
    %v1078 = vpop.f32.mrf.mxu0
    %1079 = vmatprep.mubr.f32.mxu0 0.0
    %v1080 = vand.u32 %v23, 4294901760
    %1081 = vmatmul.mubr.f32.gmra.mxu0 %v1080
    %v1082 = vpop.f32.mrf.mxu0
    %v1083 = vadd.f32 %v1002, %v1082
    %v1084 = vpop.f32.mrf.mxu0
    %1085 = vdwg.mxu0
    %s1086 = scalar_lea.vmem %s1, 64
    %v1087 = vld [vmem:[%s1086] sm:$0xff]
    %v1088 = vld [vmem:[%s1086 + $0x8] sm:$0xff]
    %v1089 = vld [vmem:[%s1086 + $0x10] sm:$0xff]
    %v1090 = vld [vmem:[%s1086 + $0x18] sm:$0xff]
    %1091 = vmatprep.subr.mxu0 0.0
    %1092 = vmatpush1.msra.mxu0 0.0
    %1093 = vmatprep.subr.mxu0 0.0
    %1094 = vmatpush1.msra.mxu0 0.0
    %1095 = vmatprep.subr.mxu0 0.0
    %1096 = vmatpush1.msra.mxu0 0.0
    %1097 = vmatprep.subr.mxu0 0.0
    %1098 = vmatpush1.msra.mxu0 0.0
    %1099 = vmatprep.subr.mxu0 0.0
    %1100 = vmatpush1.msra.mxu0 0.0
    %1101 = vmatprep.subr.mxu0 0.0
    %1102 = vmatpush1.msra.mxu0 0.0
    %1103 = vmatprep.subr.mxu0 0.0
    %1104 = vmatpush1.msra.mxu0 0.0
    %1105 = vmatprep.subr.mxu0 0.0
    %1106 = vmatpush1.msra.mxu0 0.0
    %1107 = vmatprep.subr.mxu0 0.0
    %1108 = vmatpush1.msra.mxu0 0.0
    %1109 = vmatprep.subr.mxu0 0.0
    %1110 = vmatpush1.msra.mxu0 0.0
    %1111 = vmatprep.subr.mxu0 0.0
    %1112 = vmatpush1.msra.mxu0 0.0
    %1113 = vmatprep.subr.mxu0 0.0
    %1114 = vmatpush1.msra.mxu0 0.0
    %1115 = vmatprep.subr.mxu0 0.0
    %v1116 = vand.u32 %v1090, 4294901760
    %1117 = vmatpush1.msra.mxu0 %v1116
    %1118 = vmatprep.subr.mxu0 0.0
    %v1119 = vand.u32 %v1089, 4294901760
    %1120 = vmatpush1.msra.mxu0 %v1119
    %1121 = vmatprep.subr.mxu0 0.0
    %v1122 = vand.u32 %v1088, 4294901760
    %1123 = vmatpush1.msra.mxu0 %v1122
    %1124 = vmatprep.subr.mxu0 0.0
    %v1125 = vand.u32 %v1087, 4294901760
    %1126 = vmatpush1.msra.mxu0 %v1125
    %1127 = vmatprep.subr.mxu0 0.0
    %1128 = vmatpush2.msra.mxu0 0.0
    %1129 = vmatprep.subr.mxu0 0.0
    %1130 = vmatpush2.msra.mxu0 0.0
    %1131 = vmatprep.subr.mxu0 0.0
    %1132 = vmatpush2.msra.mxu0 0.0
    %1133 = vmatprep.subr.mxu0 0.0
    %1134 = vmatpush2.msra.mxu0 0.0
    %1135 = vmatprep.subr.mxu0 0.0
    %1136 = vmatpush2.msra.mxu0 0.0
    %1137 = vmatprep.subr.mxu0 0.0
    %1138 = vmatpush2.msra.mxu0 0.0
    %1139 = vmatprep.subr.mxu0 0.0
    %1140 = vmatpush2.msra.mxu0 0.0
    %1141 = vmatprep.subr.mxu0 0.0
    %1142 = vmatpush2.msra.mxu0 0.0
    %1143 = vmatprep.subr.mxu0 0.0
    %1144 = vmatpush2.msra.mxu0 0.0
    %1145 = vmatprep.subr.mxu0 0.0
    %1146 = vmatpush2.msra.mxu0 0.0
    %1147 = vmatprep.subr.mxu0 0.0
    %1148 = vmatpush2.msra.mxu0 0.0
    %1149 = vmatprep.subr.mxu0 0.0
    %1150 = vmatpush2.msra.mxu0 0.0
    %1151 = vmatprep.subr.mxu0 0.0
    %1152 = vmatpush2.msra.mxu0 0.0
    %1153 = vmatprep.subr.mxu0 0.0
    %1154 = vmatpush2.msra.mxu0 0.0
    %1155 = vmatprep.subr.mxu0 0.0
    %1156 = vmatpush2.msra.mxu0 0.0
    %1157 = vmatprep.subr.mxu0 0.0
    %1158 = vmatpush2.msra.mxu0 0.0
    %1159 = vmatprep.mubr.f32.mxu0 0.0
    %v1160 = vand.u32 %v20, 4294901760
    %v1161 = vsub.f32 %v20, %v1160
    %v1162 = vand.u32 %v1161, 4294901760
    %v1163 = vsub.f32 %v1161, %v1162
    %v1164 = vand.u32 %v1163, 4294901760
    %1165 = vmatmul.mubr.f32.gmra.mxu0 %v1164
    %v1166 = vpop.f32.mrf.mxu0
    %v1167 = vadd.f32 0.0, %v1166
    %v1168 = vpop.f32.mrf.mxu0
    %1169 = vmatprep.mubr.f32.mxu0 0.0
    %v1170 = vand.u32 %v23, 4294901760
    %v1171 = vsub.f32 %v23, %v1170
    %v1172 = vand.u32 %v1171, 4294901760
    %v1173 = vsub.f32 %v1171, %v1172
    %v1174 = vand.u32 %v1173, 4294901760
    %1175 = vmatmul.mubr.f32.gmra.mxu0 %v1174
    %v1176 = vpop.f32.mrf.mxu0
    %v1177 = vadd.f32 0.0, %v1176
    %v1178 = vpop.f32.mrf.mxu0
    %1179 = vdwg.mxu0
    %1180 = vmatprep.subr.mxu0 0.0
    %1181 = vmatpush1.msra.mxu0 0.0
    %1182 = vmatprep.subr.mxu0 0.0
    %1183 = vmatpush1.msra.mxu0 0.0
    %1184 = vmatprep.subr.mxu0 0.0
    %1185 = vmatpush1.msra.mxu0 0.0
    %1186 = vmatprep.subr.mxu0 0.0
    %1187 = vmatpush1.msra.mxu0 0.0
    %1188 = vmatprep.subr.mxu0 0.0
    %1189 = vmatpush1.msra.mxu0 0.0
    %1190 = vmatprep.subr.mxu0 0.0
    %1191 = vmatpush1.msra.mxu0 0.0
    %1192 = vmatprep.subr.mxu0 0.0
    %1193 = vmatpush1.msra.mxu0 0.0
    %1194 = vmatprep.subr.mxu0 0.0
    %1195 = vmatpush1.msra.mxu0 0.0
    %1196 = vmatprep.subr.mxu0 0.0
    %1197 = vmatpush1.msra.mxu0 0.0
    %1198 = vmatprep.subr.mxu0 0.0
    %1199 = vmatpush1.msra.mxu0 0.0
    %1200 = vmatprep.subr.mxu0 0.0
    %1201 = vmatpush1.msra.mxu0 0.0
    %1202 = vmatprep.subr.mxu0 0.0
    %1203 = vmatpush1.msra.mxu0 0.0
    %1204 = vmatprep.subr.mxu0 0.0
    %v1205 = vand.u32 %v1090, 4294901760
    %v1206 = vsub.f32 %v1090, %v1205
    %v1207 = vand.u32 %v1206, 4294901760
    %v1208 = vsub.f32 %v1206, %v1207
    %v1209 = vand.u32 %v1208, 4294901760
    %1210 = vmatpush1.msra.mxu0 %v1209
    %1211 = vmatprep.subr.mxu0 0.0
    %v1212 = vand.u32 %v1089, 4294901760
    %v1213 = vsub.f32 %v1089, %v1212
    %v1214 = vand.u32 %v1213, 4294901760
    %v1215 = vsub.f32 %v1213, %v1214
    %v1216 = vand.u32 %v1215, 4294901760
    %1217 = vmatpush1.msra.mxu0 %v1216
    %1218 = vmatprep.subr.mxu0 0.0
    %v1219 = vand.u32 %v1088, 4294901760
    %v1220 = vsub.f32 %v1088, %v1219
    %v1221 = vand.u32 %v1220, 4294901760
    %v1222 = vsub.f32 %v1220, %v1221
    %v1223 = vand.u32 %v1222, 4294901760
    %1224 = vmatpush1.msra.mxu0 %v1223
    %1225 = vmatprep.subr.mxu0 0.0
    %v1226 = vand.u32 %v1087, 4294901760
    %v1227 = vsub.f32 %v1087, %v1226
    %v1228 = vand.u32 %v1227, 4294901760
    %v1229 = vsub.f32 %v1227, %v1228
    %v1230 = vand.u32 %v1229, 4294901760
    %1231 = vmatpush1.msra.mxu0 %v1230
    %1232 = vmatprep.subr.mxu0 0.0
    %1233 = vmatpush2.msra.mxu0 0.0
    %1234 = vmatprep.subr.mxu0 0.0
    %1235 = vmatpush2.msra.mxu0 0.0
    %1236 = vmatprep.subr.mxu0 0.0
    %1237 = vmatpush2.msra.mxu0 0.0
    %1238 = vmatprep.subr.mxu0 0.0
    %1239 = vmatpush2.msra.mxu0 0.0
    %1240 = vmatprep.subr.mxu0 0.0
    %1241 = vmatpush2.msra.mxu0 0.0
    %1242 = vmatprep.subr.mxu0 0.0
    %1243 = vmatpush2.msra.mxu0 0.0
    %1244 = vmatprep.subr.mxu0 0.0
    %1245 = vmatpush2.msra.mxu0 0.0
    %1246 = vmatprep.subr.mxu0 0.0
    %1247 = vmatpush2.msra.mxu0 0.0
    %1248 = vmatprep.subr.mxu0 0.0
    %1249 = vmatpush2.msra.mxu0 0.0
    %1250 = vmatprep.subr.mxu0 0.0
    %1251 = vmatpush2.msra.mxu0 0.0
    %1252 = vmatprep.subr.mxu0 0.0
    %1253 = vmatpush2.msra.mxu0 0.0
    %1254 = vmatprep.subr.mxu0 0.0
    %1255 = vmatpush2.msra.mxu0 0.0
    %1256 = vmatprep.subr.mxu0 0.0
    %1257 = vmatpush2.msra.mxu0 0.0
    %1258 = vmatprep.subr.mxu0 0.0
    %1259 = vmatpush2.msra.mxu0 0.0
    %1260 = vmatprep.subr.mxu0 0.0
    %1261 = vmatpush2.msra.mxu0 0.0
    %1262 = vmatprep.subr.mxu0 0.0
    %1263 = vmatpush2.msra.mxu0 0.0
    %1264 = vmatprep.mubr.f32.mxu0 0.0
    %v1265 = vand.u32 %v20, 4294901760
    %1266 = vmatmul.mubr.f32.gmra.mxu0 %v1265
    %v1267 = vpop.f32.mrf.mxu0
    %v1268 = vadd.f32 %v1167, %v1267
    %v1269 = vpop.f32.mrf.mxu0
    %1270 = vmatprep.mubr.f32.mxu0 0.0
    %v1271 = vand.u32 %v23, 4294901760
    %1272 = vmatmul.mubr.f32.gmra.mxu0 %v1271
    %v1273 = vpop.f32.mrf.mxu0
    %v1274 = vadd.f32 %v1177, %v1273
    %v1275 = vpop.f32.mrf.mxu0
    %1276 = vdwg.mxu0
    %1277 = vmatprep.subr.mxu0 0.0
    %1278 = vmatpush1.msra.mxu0 0.0
    %1279 = vmatprep.subr.mxu0 0.0
    %1280 = vmatpush1.msra.mxu0 0.0
    %1281 = vmatprep.subr.mxu0 0.0
    %1282 = vmatpush1.msra.mxu0 0.0
    %1283 = vmatprep.subr.mxu0 0.0
    %1284 = vmatpush1.msra.mxu0 0.0
    %1285 = vmatprep.subr.mxu0 0.0
    %1286 = vmatpush1.msra.mxu0 0.0
    %1287 = vmatprep.subr.mxu0 0.0
    %1288 = vmatpush1.msra.mxu0 0.0
    %1289 = vmatprep.subr.mxu0 0.0
    %1290 = vmatpush1.msra.mxu0 0.0
    %1291 = vmatprep.subr.mxu0 0.0
    %1292 = vmatpush1.msra.mxu0 0.0
    %1293 = vmatprep.subr.mxu0 0.0
    %1294 = vmatpush1.msra.mxu0 0.0
    %1295 = vmatprep.subr.mxu0 0.0
    %1296 = vmatpush1.msra.mxu0 0.0
    %1297 = vmatprep.subr.mxu0 0.0
    %1298 = vmatpush1.msra.mxu0 0.0
    %1299 = vmatprep.subr.mxu0 0.0
    %1300 = vmatpush1.msra.mxu0 0.0
    %1301 = vmatprep.subr.mxu0 0.0
    %v1302 = vand.u32 %v1090, 4294901760
    %v1303 = vsub.f32 %v1090, %v1302
    %1304 = vmatpush1.msra.mxu0 %v1303
    %1305 = vmatprep.subr.mxu0 0.0
    %v1306 = vand.u32 %v1089, 4294901760
    %v1307 = vsub.f32 %v1089, %v1306
    %1308 = vmatpush1.msra.mxu0 %v1307
    %1309 = vmatprep.subr.mxu0 0.0
    %v1310 = vand.u32 %v1088, 4294901760
    %v1311 = vsub.f32 %v1088, %v1310
    %1312 = vmatpush1.msra.mxu0 %v1311
    %1313 = vmatprep.subr.mxu0 0.0
    %v1314 = vand.u32 %v1087, 4294901760
    %v1315 = vsub.f32 %v1087, %v1314
    %1316 = vmatpush1.msra.mxu0 %v1315
    %1317 = vmatprep.subr.mxu0 0.0
    %1318 = vmatpush2.msra.mxu0 0.0
    %1319 = vmatprep.subr.mxu0 0.0
    %1320 = vmatpush2.msra.mxu0 0.0
    %1321 = vmatprep.subr.mxu0 0.0
    %1322 = vmatpush2.msra.mxu0 0.0
    %1323 = vmatprep.subr.mxu0 0.0
    %1324 = vmatpush2.msra.mxu0 0.0
    %1325 = vmatprep.subr.mxu0 0.0
    %1326 = vmatpush2.msra.mxu0 0.0
    %1327 = vmatprep.subr.mxu0 0.0
    %1328 = vmatpush2.msra.mxu0 0.0
    %1329 = vmatprep.subr.mxu0 0.0
    %1330 = vmatpush2.msra.mxu0 0.0
    %1331 = vmatprep.subr.mxu0 0.0
    %1332 = vmatpush2.msra.mxu0 0.0
    %1333 = vmatprep.subr.mxu0 0.0
    %1334 = vmatpush2.msra.mxu0 0.0
    %1335 = vmatprep.subr.mxu0 0.0
    %1336 = vmatpush2.msra.mxu0 0.0
    %1337 = vmatprep.subr.mxu0 0.0
    %1338 = vmatpush2.msra.mxu0 0.0
    %1339 = vmatprep.subr.mxu0 0.0
    %1340 = vmatpush2.msra.mxu0 0.0
    %1341 = vmatprep.subr.mxu0 0.0
    %1342 = vmatpush2.msra.mxu0 0.0
    %1343 = vmatprep.subr.mxu0 0.0
    %1344 = vmatpush2.msra.mxu0 0.0
    %1345 = vmatprep.subr.mxu0 0.0
    %1346 = vmatpush2.msra.mxu0 0.0
    %1347 = vmatprep.subr.mxu0 0.0
    %1348 = vmatpush2.msra.mxu0 0.0
    %1349 = vmatprep.mubr.f32.mxu0 0.0
    %v1350 = vand.u32 %v20, 4294901760
    %v1351 = vsub.f32 %v20, %v1350
    %1352 = vmatmul.mubr.f32.gmra.mxu0 %v1351
    %v1353 = vpop.f32.mrf.mxu0
    %v1354 = vadd.f32 %v1268, %v1353
    %v1355 = vpop.f32.mrf.mxu0
    %1356 = vmatprep.mubr.f32.mxu0 0.0
    %v1357 = vand.u32 %v23, 4294901760
    %v1358 = vsub.f32 %v23, %v1357
    %1359 = vmatmul.mubr.f32.gmra.mxu0 %v1358
    %v1360 = vpop.f32.mrf.mxu0
    %v1361 = vadd.f32 %v1274, %v1360
    %v1362 = vpop.f32.mrf.mxu0
    %1363 = vdwg.mxu0
    %1364 = vmatprep.subr.mxu0 0.0
    %1365 = vmatpush1.msra.mxu0 0.0
    %1366 = vmatprep.subr.mxu0 0.0
    %1367 = vmatpush1.msra.mxu0 0.0
    %1368 = vmatprep.subr.mxu0 0.0
    %1369 = vmatpush1.msra.mxu0 0.0
    %1370 = vmatprep.subr.mxu0 0.0
    %1371 = vmatpush1.msra.mxu0 0.0
    %1372 = vmatprep.subr.mxu0 0.0
    %1373 = vmatpush1.msra.mxu0 0.0
    %1374 = vmatprep.subr.mxu0 0.0
    %1375 = vmatpush1.msra.mxu0 0.0
    %1376 = vmatprep.subr.mxu0 0.0
    %1377 = vmatpush1.msra.mxu0 0.0
    %1378 = vmatprep.subr.mxu0 0.0
    %1379 = vmatpush1.msra.mxu0 0.0
    %1380 = vmatprep.subr.mxu0 0.0
    %1381 = vmatpush1.msra.mxu0 0.0
    %1382 = vmatprep.subr.mxu0 0.0
    %1383 = vmatpush1.msra.mxu0 0.0
    %1384 = vmatprep.subr.mxu0 0.0
    %1385 = vmatpush1.msra.mxu0 0.0
    %1386 = vmatprep.subr.mxu0 0.0
    %1387 = vmatpush1.msra.mxu0 0.0
    %1388 = vmatprep.subr.mxu0 0.0
    %v1389 = vand.u32 %v1090, 4294901760
    %1390 = vmatpush1.msra.mxu0 %v1389
    %1391 = vmatprep.subr.mxu0 0.0
    %v1392 = vand.u32 %v1089, 4294901760
    %1393 = vmatpush1.msra.mxu0 %v1392
    %1394 = vmatprep.subr.mxu0 0.0
    %v1395 = vand.u32 %v1088, 4294901760
    %1396 = vmatpush1.msra.mxu0 %v1395
    %1397 = vmatprep.subr.mxu0 0.0
    %v1398 = vand.u32 %v1087, 4294901760
    %1399 = vmatpush1.msra.mxu0 %v1398
    %1400 = vmatprep.subr.mxu0 0.0
    %1401 = vmatpush2.msra.mxu0 0.0
    %1402 = vmatprep.subr.mxu0 0.0
    %1403 = vmatpush2.msra.mxu0 0.0
    %1404 = vmatprep.subr.mxu0 0.0
    %1405 = vmatpush2.msra.mxu0 0.0
    %1406 = vmatprep.subr.mxu0 0.0
    %1407 = vmatpush2.msra.mxu0 0.0
    %1408 = vmatprep.subr.mxu0 0.0
    %1409 = vmatpush2.msra.mxu0 0.0
    %1410 = vmatprep.subr.mxu0 0.0
    %1411 = vmatpush2.msra.mxu0 0.0
    %1412 = vmatprep.subr.mxu0 0.0
    %1413 = vmatpush2.msra.mxu0 0.0
    %1414 = vmatprep.subr.mxu0 0.0
    %1415 = vmatpush2.msra.mxu0 0.0
    %1416 = vmatprep.subr.mxu0 0.0
    %1417 = vmatpush2.msra.mxu0 0.0
    %1418 = vmatprep.subr.mxu0 0.0
    %1419 = vmatpush2.msra.mxu0 0.0
    %1420 = vmatprep.subr.mxu0 0.0
    %1421 = vmatpush2.msra.mxu0 0.0
    %1422 = vmatprep.subr.mxu0 0.0
    %1423 = vmatpush2.msra.mxu0 0.0
    %1424 = vmatprep.subr.mxu0 0.0
    %1425 = vmatpush2.msra.mxu0 0.0
    %1426 = vmatprep.subr.mxu0 0.0
    %1427 = vmatpush2.msra.mxu0 0.0
    %1428 = vmatprep.subr.mxu0 0.0
    %1429 = vmatpush2.msra.mxu0 0.0
    %1430 = vmatprep.subr.mxu0 0.0
    %1431 = vmatpush2.msra.mxu0 0.0
    %1432 = vmatprep.mubr.f32.mxu0 0.0
    %v1433 = vand.u32 %v20, 4294901760
    %v1434 = vsub.f32 %v20, %v1433
    %v1435 = vand.u32 %v1434, 4294901760
    %1436 = vmatmul.mubr.f32.gmra.mxu0 %v1435
    %v1437 = vpop.f32.mrf.mxu0
    %v1438 = vadd.f32 %v1354, %v1437
    %v1439 = vpop.f32.mrf.mxu0
    %1440 = vmatprep.mubr.f32.mxu0 0.0
    %v1441 = vand.u32 %v23, 4294901760
    %v1442 = vsub.f32 %v23, %v1441
    %v1443 = vand.u32 %v1442, 4294901760
    %1444 = vmatmul.mubr.f32.gmra.mxu0 %v1443
    %v1445 = vpop.f32.mrf.mxu0
    %v1446 = vadd.f32 %v1361, %v1445
    %v1447 = vpop.f32.mrf.mxu0
    %1448 = vdwg.mxu0
    %1449 = vmatprep.subr.mxu0 0.0
    %1450 = vmatpush1.msra.mxu0 0.0
    %1451 = vmatprep.subr.mxu0 0.0
    %1452 = vmatpush1.msra.mxu0 0.0
    %1453 = vmatprep.subr.mxu0 0.0
    %1454 = vmatpush1.msra.mxu0 0.0
    %1455 = vmatprep.subr.mxu0 0.0
    %1456 = vmatpush1.msra.mxu0 0.0
    %1457 = vmatprep.subr.mxu0 0.0
    %1458 = vmatpush1.msra.mxu0 0.0
    %1459 = vmatprep.subr.mxu0 0.0
    %1460 = vmatpush1.msra.mxu0 0.0
    %1461 = vmatprep.subr.mxu0 0.0
    %1462 = vmatpush1.msra.mxu0 0.0
    %1463 = vmatprep.subr.mxu0 0.0
    %1464 = vmatpush1.msra.mxu0 0.0
    %1465 = vmatprep.subr.mxu0 0.0
    %1466 = vmatpush1.msra.mxu0 0.0
    %1467 = vmatprep.subr.mxu0 0.0
    %1468 = vmatpush1.msra.mxu0 0.0
    %1469 = vmatprep.subr.mxu0 0.0
    %1470 = vmatpush1.msra.mxu0 0.0
    %1471 = vmatprep.subr.mxu0 0.0
    %1472 = vmatpush1.msra.mxu0 0.0
    %1473 = vmatprep.subr.mxu0 0.0
    %v1474 = vand.u32 %v1090, 4294901760
    %v1475 = vsub.f32 %v1090, %v1474
    %v1476 = vand.u32 %v1475, 4294901760
    %1477 = vmatpush1.msra.mxu0 %v1476
    %1478 = vmatprep.subr.mxu0 0.0
    %v1479 = vand.u32 %v1089, 4294901760
    %v1480 = vsub.f32 %v1089, %v1479
    %v1481 = vand.u32 %v1480, 4294901760
    %1482 = vmatpush1.msra.mxu0 %v1481
    %1483 = vmatprep.subr.mxu0 0.0
    %v1484 = vand.u32 %v1088, 4294901760
    %v1485 = vsub.f32 %v1088, %v1484
    %v1486 = vand.u32 %v1485, 4294901760
    %1487 = vmatpush1.msra.mxu0 %v1486
    %1488 = vmatprep.subr.mxu0 0.0
    %v1489 = vand.u32 %v1087, 4294901760
    %v1490 = vsub.f32 %v1087, %v1489
    %v1491 = vand.u32 %v1490, 4294901760
    %1492 = vmatpush1.msra.mxu0 %v1491
    %1493 = vmatprep.subr.mxu0 0.0
    %1494 = vmatpush2.msra.mxu0 0.0
    %1495 = vmatprep.subr.mxu0 0.0
    %1496 = vmatpush2.msra.mxu0 0.0
    %1497 = vmatprep.subr.mxu0 0.0
    %1498 = vmatpush2.msra.mxu0 0.0
    %1499 = vmatprep.subr.mxu0 0.0
    %1500 = vmatpush2.msra.mxu0 0.0
    %1501 = vmatprep.subr.mxu0 0.0
    %1502 = vmatpush2.msra.mxu0 0.0
    %1503 = vmatprep.subr.mxu0 0.0
    %1504 = vmatpush2.msra.mxu0 0.0
    %1505 = vmatprep.subr.mxu0 0.0
    %1506 = vmatpush2.msra.mxu0 0.0
    %1507 = vmatprep.subr.mxu0 0.0
    %1508 = vmatpush2.msra.mxu0 0.0
    %1509 = vmatprep.subr.mxu0 0.0
    %1510 = vmatpush2.msra.mxu0 0.0
    %1511 = vmatprep.subr.mxu0 0.0
    %1512 = vmatpush2.msra.mxu0 0.0
    %1513 = vmatprep.subr.mxu0 0.0
    %1514 = vmatpush2.msra.mxu0 0.0
    %1515 = vmatprep.subr.mxu0 0.0
    %1516 = vmatpush2.msra.mxu0 0.0
    %1517 = vmatprep.subr.mxu0 0.0
    %1518 = vmatpush2.msra.mxu0 0.0
    %1519 = vmatprep.subr.mxu0 0.0
    %1520 = vmatpush2.msra.mxu0 0.0
    %1521 = vmatprep.subr.mxu0 0.0
    %1522 = vmatpush2.msra.mxu0 0.0
    %1523 = vmatprep.subr.mxu0 0.0
    %1524 = vmatpush2.msra.mxu0 0.0
    %1525 = vmatprep.mubr.f32.mxu0 0.0
    %v1526 = vand.u32 %v20, 4294901760
    %1527 = vmatmul.mubr.f32.gmra.mxu0 %v1526
    %v1528 = vpop.f32.mrf.mxu0
    %v1529 = vadd.f32 %v1438, %v1528
    %v1530 = vpop.f32.mrf.mxu0
    %1531 = vmatprep.mubr.f32.mxu0 0.0
    %v1532 = vand.u32 %v23, 4294901760
    %1533 = vmatmul.mubr.f32.gmra.mxu0 %v1532
    %v1534 = vpop.f32.mrf.mxu0
    %v1535 = vadd.f32 %v1446, %v1534
    %v1536 = vpop.f32.mrf.mxu0
    %1537 = vdwg.mxu0
    %1538 = vmatprep.subr.mxu0 0.0
    %1539 = vmatpush1.msra.mxu0 0.0
    %1540 = vmatprep.subr.mxu0 0.0
    %1541 = vmatpush1.msra.mxu0 0.0
    %1542 = vmatprep.subr.mxu0 0.0
    %1543 = vmatpush1.msra.mxu0 0.0
    %1544 = vmatprep.subr.mxu0 0.0
    %1545 = vmatpush1.msra.mxu0 0.0
    %1546 = vmatprep.subr.mxu0 0.0
    %1547 = vmatpush1.msra.mxu0 0.0
    %1548 = vmatprep.subr.mxu0 0.0
    %1549 = vmatpush1.msra.mxu0 0.0
    %1550 = vmatprep.subr.mxu0 0.0
    %1551 = vmatpush1.msra.mxu0 0.0
    %1552 = vmatprep.subr.mxu0 0.0
    %1553 = vmatpush1.msra.mxu0 0.0
    %1554 = vmatprep.subr.mxu0 0.0
    %1555 = vmatpush1.msra.mxu0 0.0
    %1556 = vmatprep.subr.mxu0 0.0
    %1557 = vmatpush1.msra.mxu0 0.0
    %1558 = vmatprep.subr.mxu0 0.0
    %1559 = vmatpush1.msra.mxu0 0.0
    %1560 = vmatprep.subr.mxu0 0.0
    %1561 = vmatpush1.msra.mxu0 0.0
    %1562 = vmatprep.subr.mxu0 0.0
    %v1563 = vand.u32 %v1090, 4294901760
    %1564 = vmatpush1.msra.mxu0 %v1563
    %1565 = vmatprep.subr.mxu0 0.0
    %v1566 = vand.u32 %v1089, 4294901760
    %1567 = vmatpush1.msra.mxu0 %v1566
    %1568 = vmatprep.subr.mxu0 0.0
    %v1569 = vand.u32 %v1088, 4294901760
    %1570 = vmatpush1.msra.mxu0 %v1569
    %1571 = vmatprep.subr.mxu0 0.0
    %v1572 = vand.u32 %v1087, 4294901760
    %1573 = vmatpush1.msra.mxu0 %v1572
    %1574 = vmatprep.subr.mxu0 0.0
    %1575 = vmatpush2.msra.mxu0 0.0
    %1576 = vmatprep.subr.mxu0 0.0
    %1577 = vmatpush2.msra.mxu0 0.0
    %1578 = vmatprep.subr.mxu0 0.0
    %1579 = vmatpush2.msra.mxu0 0.0
    %1580 = vmatprep.subr.mxu0 0.0
    %1581 = vmatpush2.msra.mxu0 0.0
    %1582 = vmatprep.subr.mxu0 0.0
    %1583 = vmatpush2.msra.mxu0 0.0
    %1584 = vmatprep.subr.mxu0 0.0
    %1585 = vmatpush2.msra.mxu0 0.0
    %1586 = vmatprep.subr.mxu0 0.0
    %1587 = vmatpush2.msra.mxu0 0.0
    %1588 = vmatprep.subr.mxu0 0.0
    %1589 = vmatpush2.msra.mxu0 0.0
    %1590 = vmatprep.subr.mxu0 0.0
    %1591 = vmatpush2.msra.mxu0 0.0
    %1592 = vmatprep.subr.mxu0 0.0
    %1593 = vmatpush2.msra.mxu0 0.0
    %1594 = vmatprep.subr.mxu0 0.0
    %1595 = vmatpush2.msra.mxu0 0.0
    %1596 = vmatprep.subr.mxu0 0.0
    %1597 = vmatpush2.msra.mxu0 0.0
    %1598 = vmatprep.subr.mxu0 0.0
    %1599 = vmatpush2.msra.mxu0 0.0
    %1600 = vmatprep.subr.mxu0 0.0
    %1601 = vmatpush2.msra.mxu0 0.0
    %1602 = vmatprep.subr.mxu0 0.0
    %1603 = vmatpush2.msra.mxu0 0.0
    %1604 = vmatprep.subr.mxu0 0.0
    %1605 = vmatpush2.msra.mxu0 0.0
    %1606 = vmatprep.mubr.f32.mxu0 0.0
    %v1607 = vand.u32 %v20, 4294901760
    %1608 = vmatmul.mubr.f32.gmra.mxu0 %v1607
    %v1609 = vpop.f32.mrf.mxu0
    %v1610 = vadd.f32 %v1529, %v1609
    %v1611 = vpop.f32.mrf.mxu0
    %1612 = vmatprep.mubr.f32.mxu0 0.0
    %v1613 = vand.u32 %v23, 4294901760
    %1614 = vmatmul.mubr.f32.gmra.mxu0 %v1613
    %v1615 = vpop.f32.mrf.mxu0
    %v1616 = vadd.f32 %v1535, %v1615
    %v1617 = vpop.f32.mrf.mxu0
    %1618 = vdwg.mxu0
    %vm1619 = vcmask 130048
    %v1621 = vsel %vm1619, %v544, 0
    %v1624 = vsel %vm1619, %v1077, 0
    %1626 = vmatprep.subr.mxu0 0.0
    %1627 = vmatpush1.xpose.msra.mxu0 0.0
    %1628 = vmatprep.subr.mxu0 0.0
    %1629 = vmatpush1.xpose.msra.mxu0 0.0
    %1630 = vmatprep.subr.mxu0 0.0
    %1631 = vmatpush1.xpose.msra.mxu0 0.0
    %1632 = vmatprep.subr.mxu0 0.0
    %1633 = vmatpush1.xpose.msra.mxu0 0.0
    %1634 = vmatprep.subr.mxu0 0.0
    %1635 = vmatpush1.xpose.msra.mxu0 0.0
    %1636 = vmatprep.subr.mxu0 0.0
    %1637 = vmatpush1.xpose.msra.mxu0 0.0
    %1638 = vmatprep.subr.mxu0 0.0
    %1639 = vmatpush1.xpose.msra.mxu0 0.0
    %1640 = vmatprep.subr.mxu0 0.0
    %1641 = vmatpush1.xpose.msra.mxu0 0.0
    %1642 = vmatprep.subr.mxu0 0.0
    %1643 = vmatpush1.xpose.msra.mxu0 0.0
    %1644 = vmatprep.subr.mxu0 0.0
    %1645 = vmatpush1.xpose.msra.mxu0 0.0
    %1646 = vmatprep.subr.mxu0 0.0
    %1647 = vmatpush1.xpose.msra.mxu0 0.0
    %1648 = vmatprep.subr.mxu0 0.0
    %1649 = vmatpush1.xpose.msra.mxu0 0.0
    %1650 = vmatprep.subr.mxu0 0.0
    %1651 = vmatpush1.xpose.msra.mxu0 0.0
    %1652 = vmatprep.subr.mxu0 0.0
    %1653 = vmatpush1.xpose.msra.mxu0 0.0
    %1654 = vmatprep.subr.mxu0 0.0
    %1655 = vmatpush1.xpose.msra.mxu0 0.0
    %1656 = vmatprep.subr.mxu0 0.0
    %v1657 = vand.u32 %v1624, 4294901760
    %1658 = vmatpush1.xpose.msra.mxu0 %v1657
    %1659 = vmatprep.subr.mxu0 0.0
    %1660 = vmatpush2.xpose.msra.mxu0 0.0
    %1661 = vmatprep.subr.mxu0 0.0
    %1662 = vmatpush2.xpose.msra.mxu0 0.0
    %1663 = vmatprep.subr.mxu0 0.0
    %1664 = vmatpush2.xpose.msra.mxu0 0.0
    %1665 = vmatprep.subr.mxu0 0.0
    %1666 = vmatpush2.xpose.msra.mxu0 0.0
    %1667 = vmatprep.subr.mxu0 0.0
    %1668 = vmatpush2.xpose.msra.mxu0 0.0
    %1669 = vmatprep.subr.mxu0 0.0
    %1670 = vmatpush2.xpose.msra.mxu0 0.0
    %1671 = vmatprep.subr.mxu0 0.0
    %1672 = vmatpush2.xpose.msra.mxu0 0.0
    %1673 = vmatprep.subr.mxu0 0.0
    %1674 = vmatpush2.xpose.msra.mxu0 0.0
    %1675 = vmatprep.subr.mxu0 0.0
    %1676 = vmatpush2.xpose.msra.mxu0 0.0
    %1677 = vmatprep.subr.mxu0 0.0
    %1678 = vmatpush2.xpose.msra.mxu0 0.0
    %1679 = vmatprep.subr.mxu0 0.0
    %1680 = vmatpush2.xpose.msra.mxu0 0.0
    %1681 = vmatprep.subr.mxu0 0.0
    %1682 = vmatpush2.xpose.msra.mxu0 0.0
    %1683 = vmatprep.subr.mxu0 0.0
    %1684 = vmatpush2.xpose.msra.mxu0 0.0
    %1685 = vmatprep.subr.mxu0 0.0
    %1686 = vmatpush2.xpose.msra.mxu0 0.0
    %1687 = vmatprep.subr.mxu0 0.0
    %1688 = vmatpush2.xpose.msra.mxu0 0.0
    %1689 = vmatprep.subr.mxu0 0.0
    %1690 = vmatpush2.xpose.msra.mxu0 0.0
    %1691 = vmatprep.mubr.f32.mxu0 0.0
    %v1692 = vand.u32 %v1621, 4294901760
    %v1693 = vsub.f32 %v1621, %v1692
    %v1694 = vand.u32 %v1693, 4294901760
    %v1695 = vsub.f32 %v1693, %v1694
    %v1696 = vand.u32 %v1695, 4294901760
    %1697 = vmatmul.mubr.f32.gmra.mxu0 %v1696
    %v1698 = vpop.f32.mrf.mxu0
    %v1699 = vadd.f32 0.0, %v1698
    %v1700 = vpop.f32.mrf.mxu0
    %1701 = vdwg.mxu0
    %1702 = vmatprep.subr.mxu0 0.0
    %1703 = vmatpush1.xpose.msra.mxu0 0.0
    %1704 = vmatprep.subr.mxu0 0.0
    %1705 = vmatpush1.xpose.msra.mxu0 0.0
    %1706 = vmatprep.subr.mxu0 0.0
    %1707 = vmatpush1.xpose.msra.mxu0 0.0
    %1708 = vmatprep.subr.mxu0 0.0
    %1709 = vmatpush1.xpose.msra.mxu0 0.0
    %1710 = vmatprep.subr.mxu0 0.0
    %1711 = vmatpush1.xpose.msra.mxu0 0.0
    %1712 = vmatprep.subr.mxu0 0.0
    %1713 = vmatpush1.xpose.msra.mxu0 0.0
    %1714 = vmatprep.subr.mxu0 0.0
    %1715 = vmatpush1.xpose.msra.mxu0 0.0
    %1716 = vmatprep.subr.mxu0 0.0
    %1717 = vmatpush1.xpose.msra.mxu0 0.0
    %1718 = vmatprep.subr.mxu0 0.0
    %1719 = vmatpush1.xpose.msra.mxu0 0.0
    %1720 = vmatprep.subr.mxu0 0.0
    %1721 = vmatpush1.xpose.msra.mxu0 0.0
    %1722 = vmatprep.subr.mxu0 0.0
    %1723 = vmatpush1.xpose.msra.mxu0 0.0
    %1724 = vmatprep.subr.mxu0 0.0
    %1725 = vmatpush1.xpose.msra.mxu0 0.0
    %1726 = vmatprep.subr.mxu0 0.0
    %1727 = vmatpush1.xpose.msra.mxu0 0.0
    %1728 = vmatprep.subr.mxu0 0.0
    %1729 = vmatpush1.xpose.msra.mxu0 0.0
    %1730 = vmatprep.subr.mxu0 0.0
    %1731 = vmatpush1.xpose.msra.mxu0 0.0
    %1732 = vmatprep.subr.mxu0 0.0
    %v1733 = vand.u32 %v1624, 4294901760
    %v1734 = vsub.f32 %v1624, %v1733
    %v1735 = vand.u32 %v1734, 4294901760
    %v1736 = vsub.f32 %v1734, %v1735
    %v1737 = vand.u32 %v1736, 4294901760
    %1738 = vmatpush1.xpose.msra.mxu0 %v1737
    %1739 = vmatprep.subr.mxu0 0.0
    %1740 = vmatpush2.xpose.msra.mxu0 0.0
    %1741 = vmatprep.subr.mxu0 0.0
    %1742 = vmatpush2.xpose.msra.mxu0 0.0
    %1743 = vmatprep.subr.mxu0 0.0
    %1744 = vmatpush2.xpose.msra.mxu0 0.0
    %1745 = vmatprep.subr.mxu0 0.0
    %1746 = vmatpush2.xpose.msra.mxu0 0.0
    %1747 = vmatprep.subr.mxu0 0.0
    %1748 = vmatpush2.xpose.msra.mxu0 0.0
    %1749 = vmatprep.subr.mxu0 0.0
    %1750 = vmatpush2.xpose.msra.mxu0 0.0
    %1751 = vmatprep.subr.mxu0 0.0
    %1752 = vmatpush2.xpose.msra.mxu0 0.0
    %1753 = vmatprep.subr.mxu0 0.0
    %1754 = vmatpush2.xpose.msra.mxu0 0.0
    %1755 = vmatprep.subr.mxu0 0.0
    %1756 = vmatpush2.xpose.msra.mxu0 0.0
    %1757 = vmatprep.subr.mxu0 0.0
    %1758 = vmatpush2.xpose.msra.mxu0 0.0
    %1759 = vmatprep.subr.mxu0 0.0
    %1760 = vmatpush2.xpose.msra.mxu0 0.0
    %1761 = vmatprep.subr.mxu0 0.0
    %1762 = vmatpush2.xpose.msra.mxu0 0.0
    %1763 = vmatprep.subr.mxu0 0.0
    %1764 = vmatpush2.xpose.msra.mxu0 0.0
    %1765 = vmatprep.subr.mxu0 0.0
    %1766 = vmatpush2.xpose.msra.mxu0 0.0
    %1767 = vmatprep.subr.mxu0 0.0
    %1768 = vmatpush2.xpose.msra.mxu0 0.0
    %1769 = vmatprep.subr.mxu0 0.0
    %1770 = vmatpush2.xpose.msra.mxu0 0.0
    %1771 = vmatprep.mubr.f32.mxu0 0.0
    %v1772 = vand.u32 %v1621, 4294901760
    %1773 = vmatmul.mubr.f32.gmra.mxu0 %v1772
    %v1774 = vpop.f32.mrf.mxu0
    %v1775 = vadd.f32 %v1699, %v1774
    %v1776 = vpop.f32.mrf.mxu0
    %1777 = vdwg.mxu0
    %1778 = vmatprep.subr.mxu0 0.0
    %1779 = vmatpush1.xpose.msra.mxu0 0.0
    %1780 = vmatprep.subr.mxu0 0.0
    %1781 = vmatpush1.xpose.msra.mxu0 0.0
    %1782 = vmatprep.subr.mxu0 0.0
    %1783 = vmatpush1.xpose.msra.mxu0 0.0
    %1784 = vmatprep.subr.mxu0 0.0
    %1785 = vmatpush1.xpose.msra.mxu0 0.0
    %1786 = vmatprep.subr.mxu0 0.0
    %1787 = vmatpush1.xpose.msra.mxu0 0.0
    %1788 = vmatprep.subr.mxu0 0.0
    %1789 = vmatpush1.xpose.msra.mxu0 0.0
    %1790 = vmatprep.subr.mxu0 0.0
    %1791 = vmatpush1.xpose.msra.mxu0 0.0
    %1792 = vmatprep.subr.mxu0 0.0
    %1793 = vmatpush1.xpose.msra.mxu0 0.0
    %1794 = vmatprep.subr.mxu0 0.0
    %1795 = vmatpush1.xpose.msra.mxu0 0.0
    %1796 = vmatprep.subr.mxu0 0.0
    %1797 = vmatpush1.xpose.msra.mxu0 0.0
    %1798 = vmatprep.subr.mxu0 0.0
    %1799 = vmatpush1.xpose.msra.mxu0 0.0
    %1800 = vmatprep.subr.mxu0 0.0
    %1801 = vmatpush1.xpose.msra.mxu0 0.0
    %1802 = vmatprep.subr.mxu0 0.0
    %1803 = vmatpush1.xpose.msra.mxu0 0.0
    %1804 = vmatprep.subr.mxu0 0.0
    %1805 = vmatpush1.xpose.msra.mxu0 0.0
    %1806 = vmatprep.subr.mxu0 0.0
    %1807 = vmatpush1.xpose.msra.mxu0 0.0
    %1808 = vmatprep.subr.mxu0 0.0
    %v1809 = vand.u32 %v1624, 4294901760
    %v1810 = vsub.f32 %v1624, %v1809
    %1811 = vmatpush1.xpose.msra.mxu0 %v1810
    %1812 = vmatprep.subr.mxu0 0.0
    %1813 = vmatpush2.xpose.msra.mxu0 0.0
    %1814 = vmatprep.subr.mxu0 0.0
    %1815 = vmatpush2.xpose.msra.mxu0 0.0
    %1816 = vmatprep.subr.mxu0 0.0
    %1817 = vmatpush2.xpose.msra.mxu0 0.0
    %1818 = vmatprep.subr.mxu0 0.0
    %1819 = vmatpush2.xpose.msra.mxu0 0.0
    %1820 = vmatprep.subr.mxu0 0.0
    %1821 = vmatpush2.xpose.msra.mxu0 0.0
    %1822 = vmatprep.subr.mxu0 0.0
    %1823 = vmatpush2.xpose.msra.mxu0 0.0
    %1824 = vmatprep.subr.mxu0 0.0
    %1825 = vmatpush2.xpose.msra.mxu0 0.0
    %1826 = vmatprep.subr.mxu0 0.0
    %1827 = vmatpush2.xpose.msra.mxu0 0.0
    %1828 = vmatprep.subr.mxu0 0.0
    %1829 = vmatpush2.xpose.msra.mxu0 0.0
    %1830 = vmatprep.subr.mxu0 0.0
    %1831 = vmatpush2.xpose.msra.mxu0 0.0
    %1832 = vmatprep.subr.mxu0 0.0
    %1833 = vmatpush2.xpose.msra.mxu0 0.0
    %1834 = vmatprep.subr.mxu0 0.0
    %1835 = vmatpush2.xpose.msra.mxu0 0.0
    %1836 = vmatprep.subr.mxu0 0.0
    %1837 = vmatpush2.xpose.msra.mxu0 0.0
    %1838 = vmatprep.subr.mxu0 0.0
    %1839 = vmatpush2.xpose.msra.mxu0 0.0
    %1840 = vmatprep.subr.mxu0 0.0
    %1841 = vmatpush2.xpose.msra.mxu0 0.0
    %1842 = vmatprep.subr.mxu0 0.0
    %1843 = vmatpush2.xpose.msra.mxu0 0.0
    %1844 = vmatprep.mubr.f32.mxu0 0.0
    %v1845 = vand.u32 %v1621, 4294901760
    %v1846 = vsub.f32 %v1621, %v1845
    %1847 = vmatmul.mubr.f32.gmra.mxu0 %v1846
    %v1848 = vpop.f32.mrf.mxu0
    %v1849 = vadd.f32 %v1775, %v1848
    %v1850 = vpop.f32.mrf.mxu0
    %1851 = vdwg.mxu0
    %1852 = vmatprep.subr.mxu0 0.0
    %1853 = vmatpush1.xpose.msra.mxu0 0.0
    %1854 = vmatprep.subr.mxu0 0.0
    %1855 = vmatpush1.xpose.msra.mxu0 0.0
    %1856 = vmatprep.subr.mxu0 0.0
    %1857 = vmatpush1.xpose.msra.mxu0 0.0
    %1858 = vmatprep.subr.mxu0 0.0
    %1859 = vmatpush1.xpose.msra.mxu0 0.0
    %1860 = vmatprep.subr.mxu0 0.0
    %1861 = vmatpush1.xpose.msra.mxu0 0.0
    %1862 = vmatprep.subr.mxu0 0.0
    %1863 = vmatpush1.xpose.msra.mxu0 0.0
    %1864 = vmatprep.subr.mxu0 0.0
    %1865 = vmatpush1.xpose.msra.mxu0 0.0
    %1866 = vmatprep.subr.mxu0 0.0
    %1867 = vmatpush1.xpose.msra.mxu0 0.0
    %1868 = vmatprep.subr.mxu0 0.0
    %1869 = vmatpush1.xpose.msra.mxu0 0.0
    %1870 = vmatprep.subr.mxu0 0.0
    %1871 = vmatpush1.xpose.msra.mxu0 0.0
    %1872 = vmatprep.subr.mxu0 0.0
    %1873 = vmatpush1.xpose.msra.mxu0 0.0
    %1874 = vmatprep.subr.mxu0 0.0
    %1875 = vmatpush1.xpose.msra.mxu0 0.0
    %1876 = vmatprep.subr.mxu0 0.0
    %1877 = vmatpush1.xpose.msra.mxu0 0.0
    %1878 = vmatprep.subr.mxu0 0.0
    %1879 = vmatpush1.xpose.msra.mxu0 0.0
    %1880 = vmatprep.subr.mxu0 0.0
    %1881 = vmatpush1.xpose.msra.mxu0 0.0
    %1882 = vmatprep.subr.mxu0 0.0
    %v1883 = vand.u32 %v1624, 4294901760
    %1884 = vmatpush1.xpose.msra.mxu0 %v1883
    %1885 = vmatprep.subr.mxu0 0.0
    %1886 = vmatpush2.xpose.msra.mxu0 0.0
    %1887 = vmatprep.subr.mxu0 0.0
    %1888 = vmatpush2.xpose.msra.mxu0 0.0
    %1889 = vmatprep.subr.mxu0 0.0
    %1890 = vmatpush2.xpose.msra.mxu0 0.0
    %1891 = vmatprep.subr.mxu0 0.0
    %1892 = vmatpush2.xpose.msra.mxu0 0.0
    %1893 = vmatprep.subr.mxu0 0.0
    %1894 = vmatpush2.xpose.msra.mxu0 0.0
    %1895 = vmatprep.subr.mxu0 0.0
    %1896 = vmatpush2.xpose.msra.mxu0 0.0
    %1897 = vmatprep.subr.mxu0 0.0
    %1898 = vmatpush2.xpose.msra.mxu0 0.0
    %1899 = vmatprep.subr.mxu0 0.0
    %1900 = vmatpush2.xpose.msra.mxu0 0.0
    %1901 = vmatprep.subr.mxu0 0.0
    %1902 = vmatpush2.xpose.msra.mxu0 0.0
    %1903 = vmatprep.subr.mxu0 0.0
    %1904 = vmatpush2.xpose.msra.mxu0 0.0
    %1905 = vmatprep.subr.mxu0 0.0
    %1906 = vmatpush2.xpose.msra.mxu0 0.0
    %1907 = vmatprep.subr.mxu0 0.0
    %1908 = vmatpush2.xpose.msra.mxu0 0.0
    %1909 = vmatprep.subr.mxu0 0.0
    %1910 = vmatpush2.xpose.msra.mxu0 0.0
    %1911 = vmatprep.subr.mxu0 0.0
    %1912 = vmatpush2.xpose.msra.mxu0 0.0
    %1913 = vmatprep.subr.mxu0 0.0
    %1914 = vmatpush2.xpose.msra.mxu0 0.0
    %1915 = vmatprep.subr.mxu0 0.0
    %1916 = vmatpush2.xpose.msra.mxu0 0.0
    %1917 = vmatprep.mubr.f32.mxu0 0.0
    %v1918 = vand.u32 %v1621, 4294901760
    %v1919 = vsub.f32 %v1621, %v1918
    %v1920 = vand.u32 %v1919, 4294901760
    %1921 = vmatmul.mubr.f32.gmra.mxu0 %v1920
    %v1922 = vpop.f32.mrf.mxu0
    %v1923 = vadd.f32 %v1849, %v1922
    %v1924 = vpop.f32.mrf.mxu0
    %1925 = vdwg.mxu0
    %1926 = vmatprep.subr.mxu0 0.0
    %1927 = vmatpush1.xpose.msra.mxu0 0.0
    %1928 = vmatprep.subr.mxu0 0.0
    %1929 = vmatpush1.xpose.msra.mxu0 0.0
    %1930 = vmatprep.subr.mxu0 0.0
    %1931 = vmatpush1.xpose.msra.mxu0 0.0
    %1932 = vmatprep.subr.mxu0 0.0
    %1933 = vmatpush1.xpose.msra.mxu0 0.0
    %1934 = vmatprep.subr.mxu0 0.0
    %1935 = vmatpush1.xpose.msra.mxu0 0.0
    %1936 = vmatprep.subr.mxu0 0.0
    %1937 = vmatpush1.xpose.msra.mxu0 0.0
    %1938 = vmatprep.subr.mxu0 0.0
    %1939 = vmatpush1.xpose.msra.mxu0 0.0
    %1940 = vmatprep.subr.mxu0 0.0
    %1941 = vmatpush1.xpose.msra.mxu0 0.0
    %1942 = vmatprep.subr.mxu0 0.0
    %1943 = vmatpush1.xpose.msra.mxu0 0.0
    %1944 = vmatprep.subr.mxu0 0.0
    %1945 = vmatpush1.xpose.msra.mxu0 0.0
    %1946 = vmatprep.subr.mxu0 0.0
    %1947 = vmatpush1.xpose.msra.mxu0 0.0
    %1948 = vmatprep.subr.mxu0 0.0
    %1949 = vmatpush1.xpose.msra.mxu0 0.0
    %1950 = vmatprep.subr.mxu0 0.0
    %1951 = vmatpush1.xpose.msra.mxu0 0.0
    %1952 = vmatprep.subr.mxu0 0.0
    %1953 = vmatpush1.xpose.msra.mxu0 0.0
    %1954 = vmatprep.subr.mxu0 0.0
    %1955 = vmatpush1.xpose.msra.mxu0 0.0
    %1956 = vmatprep.subr.mxu0 0.0
    %v1957 = vand.u32 %v1624, 4294901760
    %v1958 = vsub.f32 %v1624, %v1957
    %v1959 = vand.u32 %v1958, 4294901760
    %1960 = vmatpush1.xpose.msra.mxu0 %v1959
    %1961 = vmatprep.subr.mxu0 0.0
    %1962 = vmatpush2.xpose.msra.mxu0 0.0
    %1963 = vmatprep.subr.mxu0 0.0
    %1964 = vmatpush2.xpose.msra.mxu0 0.0
    %1965 = vmatprep.subr.mxu0 0.0
    %1966 = vmatpush2.xpose.msra.mxu0 0.0
    %1967 = vmatprep.subr.mxu0 0.0
    %1968 = vmatpush2.xpose.msra.mxu0 0.0
    %1969 = vmatprep.subr.mxu0 0.0
    %1970 = vmatpush2.xpose.msra.mxu0 0.0
    %1971 = vmatprep.subr.mxu0 0.0
    %1972 = vmatpush2.xpose.msra.mxu0 0.0
    %1973 = vmatprep.subr.mxu0 0.0
    %1974 = vmatpush2.xpose.msra.mxu0 0.0
    %1975 = vmatprep.subr.mxu0 0.0
    %1976 = vmatpush2.xpose.msra.mxu0 0.0
    %1977 = vmatprep.subr.mxu0 0.0
    %1978 = vmatpush2.xpose.msra.mxu0 0.0
    %1979 = vmatprep.subr.mxu0 0.0
    %1980 = vmatpush2.xpose.msra.mxu0 0.0
    %1981 = vmatprep.subr.mxu0 0.0
    %1982 = vmatpush2.xpose.msra.mxu0 0.0
    %1983 = vmatprep.subr.mxu0 0.0
    %1984 = vmatpush2.xpose.msra.mxu0 0.0
    %1985 = vmatprep.subr.mxu0 0.0
    %1986 = vmatpush2.xpose.msra.mxu0 0.0
    %1987 = vmatprep.subr.mxu0 0.0
    %1988 = vmatpush2.xpose.msra.mxu0 0.0
    %1989 = vmatprep.subr.mxu0 0.0
    %1990 = vmatpush2.xpose.msra.mxu0 0.0
    %1991 = vmatprep.subr.mxu0 0.0
    %1992 = vmatpush2.xpose.msra.mxu0 0.0
    %1993 = vmatprep.mubr.f32.mxu0 0.0
    %v1994 = vand.u32 %v1621, 4294901760
    %1995 = vmatmul.mubr.f32.gmra.mxu0 %v1994
    %v1996 = vpop.f32.mrf.mxu0
    %v1997 = vadd.f32 %v1923, %v1996
    %v1998 = vpop.f32.mrf.mxu0
    %1999 = vdwg.mxu0
    %2000 = vmatprep.subr.mxu0 0.0
    %2001 = vmatpush1.xpose.msra.mxu0 0.0
    %2002 = vmatprep.subr.mxu0 0.0
    %2003 = vmatpush1.xpose.msra.mxu0 0.0
    %2004 = vmatprep.subr.mxu0 0.0
    %2005 = vmatpush1.xpose.msra.mxu0 0.0
    %2006 = vmatprep.subr.mxu0 0.0
    %2007 = vmatpush1.xpose.msra.mxu0 0.0
    %2008 = vmatprep.subr.mxu0 0.0
    %2009 = vmatpush1.xpose.msra.mxu0 0.0
    %2010 = vmatprep.subr.mxu0 0.0
    %2011 = vmatpush1.xpose.msra.mxu0 0.0
    %2012 = vmatprep.subr.mxu0 0.0
    %2013 = vmatpush1.xpose.msra.mxu0 0.0
    %2014 = vmatprep.subr.mxu0 0.0
    %2015 = vmatpush1.xpose.msra.mxu0 0.0
    %2016 = vmatprep.subr.mxu0 0.0
    %2017 = vmatpush1.xpose.msra.mxu0 0.0
    %2018 = vmatprep.subr.mxu0 0.0
    %2019 = vmatpush1.xpose.msra.mxu0 0.0
    %2020 = vmatprep.subr.mxu0 0.0
    %2021 = vmatpush1.xpose.msra.mxu0 0.0
    %2022 = vmatprep.subr.mxu0 0.0
    %2023 = vmatpush1.xpose.msra.mxu0 0.0
    %2024 = vmatprep.subr.mxu0 0.0
    %2025 = vmatpush1.xpose.msra.mxu0 0.0
    %2026 = vmatprep.subr.mxu0 0.0
    %2027 = vmatpush1.xpose.msra.mxu0 0.0
    %2028 = vmatprep.subr.mxu0 0.0
    %2029 = vmatpush1.xpose.msra.mxu0 0.0
    %2030 = vmatprep.subr.mxu0 0.0
    %v2031 = vand.u32 %v1624, 4294901760
    %2032 = vmatpush1.xpose.msra.mxu0 %v2031
    %2033 = vmatprep.subr.mxu0 0.0
    %2034 = vmatpush2.xpose.msra.mxu0 0.0
    %2035 = vmatprep.subr.mxu0 0.0
    %2036 = vmatpush2.xpose.msra.mxu0 0.0
    %2037 = vmatprep.subr.mxu0 0.0
    %2038 = vmatpush2.xpose.msra.mxu0 0.0
    %2039 = vmatprep.subr.mxu0 0.0
    %2040 = vmatpush2.xpose.msra.mxu0 0.0
    %2041 = vmatprep.subr.mxu0 0.0
    %2042 = vmatpush2.xpose.msra.mxu0 0.0
    %2043 = vmatprep.subr.mxu0 0.0
    %2044 = vmatpush2.xpose.msra.mxu0 0.0
    %2045 = vmatprep.subr.mxu0 0.0
    %2046 = vmatpush2.xpose.msra.mxu0 0.0
    %2047 = vmatprep.subr.mxu0 0.0
    %2048 = vmatpush2.xpose.msra.mxu0 0.0
    %2049 = vmatprep.subr.mxu0 0.0
    %2050 = vmatpush2.xpose.msra.mxu0 0.0
    %2051 = vmatprep.subr.mxu0 0.0
    %2052 = vmatpush2.xpose.msra.mxu0 0.0
    %2053 = vmatprep.subr.mxu0 0.0
    %2054 = vmatpush2.xpose.msra.mxu0 0.0
    %2055 = vmatprep.subr.mxu0 0.0
    %2056 = vmatpush2.xpose.msra.mxu0 0.0
    %2057 = vmatprep.subr.mxu0 0.0
    %2058 = vmatpush2.xpose.msra.mxu0 0.0
    %2059 = vmatprep.subr.mxu0 0.0
    %2060 = vmatpush2.xpose.msra.mxu0 0.0
    %2061 = vmatprep.subr.mxu0 0.0
    %2062 = vmatpush2.xpose.msra.mxu0 0.0
    %2063 = vmatprep.subr.mxu0 0.0
    %2064 = vmatpush2.xpose.msra.mxu0 0.0
    %2065 = vmatprep.mubr.f32.mxu0 0.0
    %v2066 = vand.u32 %v1621, 4294901760
    %2067 = vmatmul.mubr.f32.gmra.mxu0 %v2066
    %v2068 = vpop.f32.mrf.mxu0
    %v2069 = vadd.f32 %v1997, %v2068
    %v2070 = vpop.f32.mrf.mxu0
    %2071 = vdwg.mxu0
    %v2073 = vsel %vm1619, %v550, 0
    %v2076 = vsel %vm1619, %v1083, 0
    %2078 = vmatprep.subr.mxu0 0.0
    %2079 = vmatpush1.xpose.msra.mxu0 0.0
    %2080 = vmatprep.subr.mxu0 0.0
    %2081 = vmatpush1.xpose.msra.mxu0 0.0
    %2082 = vmatprep.subr.mxu0 0.0
    %2083 = vmatpush1.xpose.msra.mxu0 0.0
    %2084 = vmatprep.subr.mxu0 0.0
    %2085 = vmatpush1.xpose.msra.mxu0 0.0
    %2086 = vmatprep.subr.mxu0 0.0
    %2087 = vmatpush1.xpose.msra.mxu0 0.0
    %2088 = vmatprep.subr.mxu0 0.0
    %2089 = vmatpush1.xpose.msra.mxu0 0.0
    %2090 = vmatprep.subr.mxu0 0.0
    %2091 = vmatpush1.xpose.msra.mxu0 0.0
    %2092 = vmatprep.subr.mxu0 0.0
    %2093 = vmatpush1.xpose.msra.mxu0 0.0
    %2094 = vmatprep.subr.mxu0 0.0
    %2095 = vmatpush1.xpose.msra.mxu0 0.0
    %2096 = vmatprep.subr.mxu0 0.0
    %2097 = vmatpush1.xpose.msra.mxu0 0.0
    %2098 = vmatprep.subr.mxu0 0.0
    %2099 = vmatpush1.xpose.msra.mxu0 0.0
    %2100 = vmatprep.subr.mxu0 0.0
    %2101 = vmatpush1.xpose.msra.mxu0 0.0
    %2102 = vmatprep.subr.mxu0 0.0
    %2103 = vmatpush1.xpose.msra.mxu0 0.0
    %2104 = vmatprep.subr.mxu0 0.0
    %2105 = vmatpush1.xpose.msra.mxu0 0.0
    %2106 = vmatprep.subr.mxu0 0.0
    %2107 = vmatpush1.xpose.msra.mxu0 0.0
    %2108 = vmatprep.subr.mxu0 0.0
    %v2109 = vand.u32 %v2076, 4294901760
    %2110 = vmatpush1.xpose.msra.mxu0 %v2109
    %2111 = vmatprep.subr.mxu0 0.0
    %2112 = vmatpush2.xpose.msra.mxu0 0.0
    %2113 = vmatprep.subr.mxu0 0.0
    %2114 = vmatpush2.xpose.msra.mxu0 0.0
    %2115 = vmatprep.subr.mxu0 0.0
    %2116 = vmatpush2.xpose.msra.mxu0 0.0
    %2117 = vmatprep.subr.mxu0 0.0
    %2118 = vmatpush2.xpose.msra.mxu0 0.0
    %2119 = vmatprep.subr.mxu0 0.0
    %2120 = vmatpush2.xpose.msra.mxu0 0.0
    %2121 = vmatprep.subr.mxu0 0.0
    %2122 = vmatpush2.xpose.msra.mxu0 0.0
    %2123 = vmatprep.subr.mxu0 0.0
    %2124 = vmatpush2.xpose.msra.mxu0 0.0
    %2125 = vmatprep.subr.mxu0 0.0
    %2126 = vmatpush2.xpose.msra.mxu0 0.0
    %2127 = vmatprep.subr.mxu0 0.0
    %2128 = vmatpush2.xpose.msra.mxu0 0.0
    %2129 = vmatprep.subr.mxu0 0.0
    %2130 = vmatpush2.xpose.msra.mxu0 0.0
    %2131 = vmatprep.subr.mxu0 0.0
    %2132 = vmatpush2.xpose.msra.mxu0 0.0
    %2133 = vmatprep.subr.mxu0 0.0
    %2134 = vmatpush2.xpose.msra.mxu0 0.0
    %2135 = vmatprep.subr.mxu0 0.0
    %2136 = vmatpush2.xpose.msra.mxu0 0.0
    %2137 = vmatprep.subr.mxu0 0.0
    %2138 = vmatpush2.xpose.msra.mxu0 0.0
    %2139 = vmatprep.subr.mxu0 0.0
    %2140 = vmatpush2.xpose.msra.mxu0 0.0
    %2141 = vmatprep.subr.mxu0 0.0
    %2142 = vmatpush2.xpose.msra.mxu0 0.0
    %2143 = vmatprep.mubr.f32.mxu0 0.0
    %v2144 = vand.u32 %v2073, 4294901760
    %v2145 = vsub.f32 %v2073, %v2144
    %v2146 = vand.u32 %v2145, 4294901760
    %v2147 = vsub.f32 %v2145, %v2146
    %v2148 = vand.u32 %v2147, 4294901760
    %2149 = vmatmul.mubr.f32.gmra.mxu0 %v2148
    %v2150 = vpop.f32.mrf.mxu0
    %v2151 = vadd.f32 0.0, %v2150
    %v2152 = vpop.f32.mrf.mxu0
    %2153 = vdwg.mxu0
    %2154 = vmatprep.subr.mxu0 0.0
    %2155 = vmatpush1.xpose.msra.mxu0 0.0
    %2156 = vmatprep.subr.mxu0 0.0
    %2157 = vmatpush1.xpose.msra.mxu0 0.0
    %2158 = vmatprep.subr.mxu0 0.0
    %2159 = vmatpush1.xpose.msra.mxu0 0.0
    %2160 = vmatprep.subr.mxu0 0.0
    %2161 = vmatpush1.xpose.msra.mxu0 0.0
    %2162 = vmatprep.subr.mxu0 0.0
    %2163 = vmatpush1.xpose.msra.mxu0 0.0
    %2164 = vmatprep.subr.mxu0 0.0
    %2165 = vmatpush1.xpose.msra.mxu0 0.0
    %2166 = vmatprep.subr.mxu0 0.0
    %2167 = vmatpush1.xpose.msra.mxu0 0.0
    %2168 = vmatprep.subr.mxu0 0.0
    %2169 = vmatpush1.xpose.msra.mxu0 0.0
    %2170 = vmatprep.subr.mxu0 0.0
    %2171 = vmatpush1.xpose.msra.mxu0 0.0
    %2172 = vmatprep.subr.mxu0 0.0
    %2173 = vmatpush1.xpose.msra.mxu0 0.0
    %2174 = vmatprep.subr.mxu0 0.0
    %2175 = vmatpush1.xpose.msra.mxu0 0.0
    %2176 = vmatprep.subr.mxu0 0.0
    %2177 = vmatpush1.xpose.msra.mxu0 0.0
    %2178 = vmatprep.subr.mxu0 0.0
    %2179 = vmatpush1.xpose.msra.mxu0 0.0
    %2180 = vmatprep.subr.mxu0 0.0
    %2181 = vmatpush1.xpose.msra.mxu0 0.0
    %2182 = vmatprep.subr.mxu0 0.0
    %2183 = vmatpush1.xpose.msra.mxu0 0.0
    %2184 = vmatprep.subr.mxu0 0.0
    %v2185 = vand.u32 %v2076, 4294901760
    %v2186 = vsub.f32 %v2076, %v2185
    %v2187 = vand.u32 %v2186, 4294901760
    %v2188 = vsub.f32 %v2186, %v2187
    %v2189 = vand.u32 %v2188, 4294901760
    %2190 = vmatpush1.xpose.msra.mxu0 %v2189
    %2191 = vmatprep.subr.mxu0 0.0
    %2192 = vmatpush2.xpose.msra.mxu0 0.0
    %2193 = vmatprep.subr.mxu0 0.0
    %2194 = vmatpush2.xpose.msra.mxu0 0.0
    %2195 = vmatprep.subr.mxu0 0.0
    %2196 = vmatpush2.xpose.msra.mxu0 0.0
    %2197 = vmatprep.subr.mxu0 0.0
    %2198 = vmatpush2.xpose.msra.mxu0 0.0
    %2199 = vmatprep.subr.mxu0 0.0
    %2200 = vmatpush2.xpose.msra.mxu0 0.0
    %2201 = vmatprep.subr.mxu0 0.0
    %2202 = vmatpush2.xpose.msra.mxu0 0.0
    %2203 = vmatprep.subr.mxu0 0.0
    %2204 = vmatpush2.xpose.msra.mxu0 0.0
    %2205 = vmatprep.subr.mxu0 0.0
    %2206 = vmatpush2.xpose.msra.mxu0 0.0
    %2207 = vmatprep.subr.mxu0 0.0
    %2208 = vmatpush2.xpose.msra.mxu0 0.0
    %2209 = vmatprep.subr.mxu0 0.0
    %2210 = vmatpush2.xpose.msra.mxu0 0.0
    %2211 = vmatprep.subr.mxu0 0.0
    %2212 = vmatpush2.xpose.msra.mxu0 0.0
    %2213 = vmatprep.subr.mxu0 0.0
    %2214 = vmatpush2.xpose.msra.mxu0 0.0
    %2215 = vmatprep.subr.mxu0 0.0
    %2216 = vmatpush2.xpose.msra.mxu0 0.0
    %2217 = vmatprep.subr.mxu0 0.0
    %2218 = vmatpush2.xpose.msra.mxu0 0.0
    %2219 = vmatprep.subr.mxu0 0.0
    %2220 = vmatpush2.xpose.msra.mxu0 0.0
    %2221 = vmatprep.subr.mxu0 0.0
    %2222 = vmatpush2.xpose.msra.mxu0 0.0
    %2223 = vmatprep.mubr.f32.mxu0 0.0
    %v2224 = vand.u32 %v2073, 4294901760
    %2225 = vmatmul.mubr.f32.gmra.mxu0 %v2224
    %v2226 = vpop.f32.mrf.mxu0
    %v2227 = vadd.f32 %v2151, %v2226
    %v2228 = vpop.f32.mrf.mxu0
    %2229 = vdwg.mxu0
    %2230 = vmatprep.subr.mxu0 0.0
    %2231 = vmatpush1.xpose.msra.mxu0 0.0
    %2232 = vmatprep.subr.mxu0 0.0
    %2233 = vmatpush1.xpose.msra.mxu0 0.0
    %2234 = vmatprep.subr.mxu0 0.0
    %2235 = vmatpush1.xpose.msra.mxu0 0.0
    %2236 = vmatprep.subr.mxu0 0.0
    %2237 = vmatpush1.xpose.msra.mxu0 0.0
    %2238 = vmatprep.subr.mxu0 0.0
    %2239 = vmatpush1.xpose.msra.mxu0 0.0
    %2240 = vmatprep.subr.mxu0 0.0
    %2241 = vmatpush1.xpose.msra.mxu0 0.0
    %2242 = vmatprep.subr.mxu0 0.0
    %2243 = vmatpush1.xpose.msra.mxu0 0.0
    %2244 = vmatprep.subr.mxu0 0.0
    %2245 = vmatpush1.xpose.msra.mxu0 0.0
    %2246 = vmatprep.subr.mxu0 0.0
    %2247 = vmatpush1.xpose.msra.mxu0 0.0
    %2248 = vmatprep.subr.mxu0 0.0
    %2249 = vmatpush1.xpose.msra.mxu0 0.0
    %2250 = vmatprep.subr.mxu0 0.0
    %2251 = vmatpush1.xpose.msra.mxu0 0.0
    %2252 = vmatprep.subr.mxu0 0.0
    %2253 = vmatpush1.xpose.msra.mxu0 0.0
    %2254 = vmatprep.subr.mxu0 0.0
    %2255 = vmatpush1.xpose.msra.mxu0 0.0
    %2256 = vmatprep.subr.mxu0 0.0
    %2257 = vmatpush1.xpose.msra.mxu0 0.0
    %2258 = vmatprep.subr.mxu0 0.0
    %2259 = vmatpush1.xpose.msra.mxu0 0.0
    %2260 = vmatprep.subr.mxu0 0.0
    %v2261 = vand.u32 %v2076, 4294901760
    %v2262 = vsub.f32 %v2076, %v2261
    %2263 = vmatpush1.xpose.msra.mxu0 %v2262
    %2264 = vmatprep.subr.mxu0 0.0
    %2265 = vmatpush2.xpose.msra.mxu0 0.0
    %2266 = vmatprep.subr.mxu0 0.0
    %2267 = vmatpush2.xpose.msra.mxu0 0.0
    %2268 = vmatprep.subr.mxu0 0.0
    %2269 = vmatpush2.xpose.msra.mxu0 0.0
    %2270 = vmatprep.subr.mxu0 0.0
    %2271 = vmatpush2.xpose.msra.mxu0 0.0
    %2272 = vmatprep.subr.mxu0 0.0
    %2273 = vmatpush2.xpose.msra.mxu0 0.0
    %2274 = vmatprep.subr.mxu0 0.0
    %2275 = vmatpush2.xpose.msra.mxu0 0.0
    %2276 = vmatprep.subr.mxu0 0.0
    %2277 = vmatpush2.xpose.msra.mxu0 0.0
    %2278 = vmatprep.subr.mxu0 0.0
    %2279 = vmatpush2.xpose.msra.mxu0 0.0
    %2280 = vmatprep.subr.mxu0 0.0
    %2281 = vmatpush2.xpose.msra.mxu0 0.0
    %2282 = vmatprep.subr.mxu0 0.0
    %2283 = vmatpush2.xpose.msra.mxu0 0.0
    %2284 = vmatprep.subr.mxu0 0.0
    %2285 = vmatpush2.xpose.msra.mxu0 0.0
    %2286 = vmatprep.subr.mxu0 0.0
    %2287 = vmatpush2.xpose.msra.mxu0 0.0
    %2288 = vmatprep.subr.mxu0 0.0
    %2289 = vmatpush2.xpose.msra.mxu0 0.0
    %2290 = vmatprep.subr.mxu0 0.0
    %2291 = vmatpush2.xpose.msra.mxu0 0.0
    %2292 = vmatprep.subr.mxu0 0.0
    %2293 = vmatpush2.xpose.msra.mxu0 0.0
    %2294 = vmatprep.subr.mxu0 0.0
    %2295 = vmatpush2.xpose.msra.mxu0 0.0
    %2296 = vmatprep.mubr.f32.mxu0 0.0
    %v2297 = vand.u32 %v2073, 4294901760
    %v2298 = vsub.f32 %v2073, %v2297
    %2299 = vmatmul.mubr.f32.gmra.mxu0 %v2298
    %v2300 = vpop.f32.mrf.mxu0
    %v2301 = vadd.f32 %v2227, %v2300
    %v2302 = vpop.f32.mrf.mxu0
    %2303 = vdwg.mxu0
    %2304 = vmatprep.subr.mxu0 0.0
    %2305 = vmatpush1.xpose.msra.mxu0 0.0
    %2306 = vmatprep.subr.mxu0 0.0
    %2307 = vmatpush1.xpose.msra.mxu0 0.0
    %2308 = vmatprep.subr.mxu0 0.0
    %2309 = vmatpush1.xpose.msra.mxu0 0.0
    %2310 = vmatprep.subr.mxu0 0.0
    %2311 = vmatpush1.xpose.msra.mxu0 0.0
    %2312 = vmatprep.subr.mxu0 0.0
    %2313 = vmatpush1.xpose.msra.mxu0 0.0
    %2314 = vmatprep.subr.mxu0 0.0
    %2315 = vmatpush1.xpose.msra.mxu0 0.0
    %2316 = vmatprep.subr.mxu0 0.0
    %2317 = vmatpush1.xpose.msra.mxu0 0.0
    %2318 = vmatprep.subr.mxu0 0.0
    %2319 = vmatpush1.xpose.msra.mxu0 0.0
    %2320 = vmatprep.subr.mxu0 0.0
    %2321 = vmatpush1.xpose.msra.mxu0 0.0
    %2322 = vmatprep.subr.mxu0 0.0
    %2323 = vmatpush1.xpose.msra.mxu0 0.0
    %2324 = vmatprep.subr.mxu0 0.0
    %2325 = vmatpush1.xpose.msra.mxu0 0.0
    %2326 = vmatprep.subr.mxu0 0.0
    %2327 = vmatpush1.xpose.msra.mxu0 0.0
    %2328 = vmatprep.subr.mxu0 0.0
    %2329 = vmatpush1.xpose.msra.mxu0 0.0
    %2330 = vmatprep.subr.mxu0 0.0
    %2331 = vmatpush1.xpose.msra.mxu0 0.0
    %2332 = vmatprep.subr.mxu0 0.0
    %2333 = vmatpush1.xpose.msra.mxu0 0.0
    %2334 = vmatprep.subr.mxu0 0.0
    %v2335 = vand.u32 %v2076, 4294901760
    %2336 = vmatpush1.xpose.msra.mxu0 %v2335
    %2337 = vmatprep.subr.mxu0 0.0
    %2338 = vmatpush2.xpose.msra.mxu0 0.0
    %2339 = vmatprep.subr.mxu0 0.0
    %2340 = vmatpush2.xpose.msra.mxu0 0.0
    %2341 = vmatprep.subr.mxu0 0.0
    %2342 = vmatpush2.xpose.msra.mxu0 0.0
    %2343 = vmatprep.subr.mxu0 0.0
    %2344 = vmatpush2.xpose.msra.mxu0 0.0
    %2345 = vmatprep.subr.mxu0 0.0
    %2346 = vmatpush2.xpose.msra.mxu0 0.0
    %2347 = vmatprep.subr.mxu0 0.0
    %2348 = vmatpush2.xpose.msra.mxu0 0.0
    %2349 = vmatprep.subr.mxu0 0.0
    %2350 = vmatpush2.xpose.msra.mxu0 0.0
    %2351 = vmatprep.subr.mxu0 0.0
    %2352 = vmatpush2.xpose.msra.mxu0 0.0
    %2353 = vmatprep.subr.mxu0 0.0
    %2354 = vmatpush2.xpose.msra.mxu0 0.0
    %2355 = vmatprep.subr.mxu0 0.0
    %2356 = vmatpush2.xpose.msra.mxu0 0.0
    %2357 = vmatprep.subr.mxu0 0.0
    %2358 = vmatpush2.xpose.msra.mxu0 0.0
    %2359 = vmatprep.subr.mxu0 0.0
    %2360 = vmatpush2.xpose.msra.mxu0 0.0
    %2361 = vmatprep.subr.mxu0 0.0
    %2362 = vmatpush2.xpose.msra.mxu0 0.0
    %2363 = vmatprep.subr.mxu0 0.0
    %2364 = vmatpush2.xpose.msra.mxu0 0.0
    %2365 = vmatprep.subr.mxu0 0.0
    %2366 = vmatpush2.xpose.msra.mxu0 0.0
    %2367 = vmatprep.subr.mxu0 0.0
    %2368 = vmatpush2.xpose.msra.mxu0 0.0
    %2369 = vmatprep.mubr.f32.mxu0 0.0
    %v2370 = vand.u32 %v2073, 4294901760
    %v2371 = vsub.f32 %v2073, %v2370
    %v2372 = vand.u32 %v2371, 4294901760
    %2373 = vmatmul.mubr.f32.gmra.mxu0 %v2372
    %v2374 = vpop.f32.mrf.mxu0
    %v2375 = vadd.f32 %v2301, %v2374
    %v2376 = vpop.f32.mrf.mxu0
    %2377 = vdwg.mxu0
    %2378 = vmatprep.subr.mxu0 0.0
    %2379 = vmatpush1.xpose.msra.mxu0 0.0
    %2380 = vmatprep.subr.mxu0 0.0
    %2381 = vmatpush1.xpose.msra.mxu0 0.0
    %2382 = vmatprep.subr.mxu0 0.0
    %2383 = vmatpush1.xpose.msra.mxu0 0.0
    %2384 = vmatprep.subr.mxu0 0.0
    %2385 = vmatpush1.xpose.msra.mxu0 0.0
    %2386 = vmatprep.subr.mxu0 0.0
    %2387 = vmatpush1.xpose.msra.mxu0 0.0
    %2388 = vmatprep.subr.mxu0 0.0
    %2389 = vmatpush1.xpose.msra.mxu0 0.0
    %2390 = vmatprep.subr.mxu0 0.0
    %2391 = vmatpush1.xpose.msra.mxu0 0.0
    %2392 = vmatprep.subr.mxu0 0.0
    %2393 = vmatpush1.xpose.msra.mxu0 0.0
    %2394 = vmatprep.subr.mxu0 0.0
    %2395 = vmatpush1.xpose.msra.mxu0 0.0
    %2396 = vmatprep.subr.mxu0 0.0
    %2397 = vmatpush1.xpose.msra.mxu0 0.0
    %2398 = vmatprep.subr.mxu0 0.0
    %2399 = vmatpush1.xpose.msra.mxu0 0.0
    %2400 = vmatprep.subr.mxu0 0.0
    %2401 = vmatpush1.xpose.msra.mxu0 0.0
    %2402 = vmatprep.subr.mxu0 0.0
    %2403 = vmatpush1.xpose.msra.mxu0 0.0
    %2404 = vmatprep.subr.mxu0 0.0
    %2405 = vmatpush1.xpose.msra.mxu0 0.0
    %2406 = vmatprep.subr.mxu0 0.0
    %2407 = vmatpush1.xpose.msra.mxu0 0.0
    %2408 = vmatprep.subr.mxu0 0.0
    %v2409 = vand.u32 %v2076, 4294901760
    %v2410 = vsub.f32 %v2076, %v2409
    %v2411 = vand.u32 %v2410, 4294901760
    %2412 = vmatpush1.xpose.msra.mxu0 %v2411
    %2413 = vmatprep.subr.mxu0 0.0
    %2414 = vmatpush2.xpose.msra.mxu0 0.0
    %2415 = vmatprep.subr.mxu0 0.0
    %2416 = vmatpush2.xpose.msra.mxu0 0.0
    %2417 = vmatprep.subr.mxu0 0.0
    %2418 = vmatpush2.xpose.msra.mxu0 0.0
    %2419 = vmatprep.subr.mxu0 0.0
    %2420 = vmatpush2.xpose.msra.mxu0 0.0
    %2421 = vmatprep.subr.mxu0 0.0
    %2422 = vmatpush2.xpose.msra.mxu0 0.0
    %2423 = vmatprep.subr.mxu0 0.0
    %2424 = vmatpush2.xpose.msra.mxu0 0.0
    %2425 = vmatprep.subr.mxu0 0.0
    %2426 = vmatpush2.xpose.msra.mxu0 0.0
    %2427 = vmatprep.subr.mxu0 0.0
    %2428 = vmatpush2.xpose.msra.mxu0 0.0
    %2429 = vmatprep.subr.mxu0 0.0
    %2430 = vmatpush2.xpose.msra.mxu0 0.0
    %2431 = vmatprep.subr.mxu0 0.0
    %2432 = vmatpush2.xpose.msra.mxu0 0.0
    %2433 = vmatprep.subr.mxu0 0.0
    %2434 = vmatpush2.xpose.msra.mxu0 0.0
    %2435 = vmatprep.subr.mxu0 0.0
    %2436 = vmatpush2.xpose.msra.mxu0 0.0
    %2437 = vmatprep.subr.mxu0 0.0
    %2438 = vmatpush2.xpose.msra.mxu0 0.0
    %2439 = vmatprep.subr.mxu0 0.0
    %2440 = vmatpush2.xpose.msra.mxu0 0.0
    %2441 = vmatprep.subr.mxu0 0.0
    %2442 = vmatpush2.xpose.msra.mxu0 0.0
    %2443 = vmatprep.subr.mxu0 0.0
    %2444 = vmatpush2.xpose.msra.mxu0 0.0
    %2445 = vmatprep.mubr.f32.mxu0 0.0
    %v2446 = vand.u32 %v2073, 4294901760
    %2447 = vmatmul.mubr.f32.gmra.mxu0 %v2446
    %v2448 = vpop.f32.mrf.mxu0
    %v2449 = vadd.f32 %v2375, %v2448
    %v2450 = vpop.f32.mrf.mxu0
    %2451 = vdwg.mxu0
    %2452 = vmatprep.subr.mxu0 0.0
    %2453 = vmatpush1.xpose.msra.mxu0 0.0
    %2454 = vmatprep.subr.mxu0 0.0
    %2455 = vmatpush1.xpose.msra.mxu0 0.0
    %2456 = vmatprep.subr.mxu0 0.0
    %2457 = vmatpush1.xpose.msra.mxu0 0.0
    %2458 = vmatprep.subr.mxu0 0.0
    %2459 = vmatpush1.xpose.msra.mxu0 0.0
    %2460 = vmatprep.subr.mxu0 0.0
    %2461 = vmatpush1.xpose.msra.mxu0 0.0
    %2462 = vmatprep.subr.mxu0 0.0
    %2463 = vmatpush1.xpose.msra.mxu0 0.0
    %2464 = vmatprep.subr.mxu0 0.0
    %2465 = vmatpush1.xpose.msra.mxu0 0.0
    %2466 = vmatprep.subr.mxu0 0.0
    %2467 = vmatpush1.xpose.msra.mxu0 0.0
    %2468 = vmatprep.subr.mxu0 0.0
    %2469 = vmatpush1.xpose.msra.mxu0 0.0
    %2470 = vmatprep.subr.mxu0 0.0
    %2471 = vmatpush1.xpose.msra.mxu0 0.0
    %2472 = vmatprep.subr.mxu0 0.0
    %2473 = vmatpush1.xpose.msra.mxu0 0.0
    %2474 = vmatprep.subr.mxu0 0.0
    %2475 = vmatpush1.xpose.msra.mxu0 0.0
    %2476 = vmatprep.subr.mxu0 0.0
    %2477 = vmatpush1.xpose.msra.mxu0 0.0
    %2478 = vmatprep.subr.mxu0 0.0
    %2479 = vmatpush1.xpose.msra.mxu0 0.0
    %2480 = vmatprep.subr.mxu0 0.0
    %2481 = vmatpush1.xpose.msra.mxu0 0.0
    %2482 = vmatprep.subr.mxu0 0.0
    %v2483 = vand.u32 %v2076, 4294901760
    %2484 = vmatpush1.xpose.msra.mxu0 %v2483
    %2485 = vmatprep.subr.mxu0 0.0
    %2486 = vmatpush2.xpose.msra.mxu0 0.0
    %2487 = vmatprep.subr.mxu0 0.0
    %2488 = vmatpush2.xpose.msra.mxu0 0.0
    %2489 = vmatprep.subr.mxu0 0.0
    %2490 = vmatpush2.xpose.msra.mxu0 0.0
    %2491 = vmatprep.subr.mxu0 0.0
    %2492 = vmatpush2.xpose.msra.mxu0 0.0
    %2493 = vmatprep.subr.mxu0 0.0
    %2494 = vmatpush2.xpose.msra.mxu0 0.0
    %2495 = vmatprep.subr.mxu0 0.0
    %2496 = vmatpush2.xpose.msra.mxu0 0.0
    %2497 = vmatprep.subr.mxu0 0.0
    %2498 = vmatpush2.xpose.msra.mxu0 0.0
    %2499 = vmatprep.subr.mxu0 0.0
    %2500 = vmatpush2.xpose.msra.mxu0 0.0
    %2501 = vmatprep.subr.mxu0 0.0
    %2502 = vmatpush2.xpose.msra.mxu0 0.0
    %2503 = vmatprep.subr.mxu0 0.0
    %2504 = vmatpush2.xpose.msra.mxu0 0.0
    %2505 = vmatprep.subr.mxu0 0.0
    %2506 = vmatpush2.xpose.msra.mxu0 0.0
    %2507 = vmatprep.subr.mxu0 0.0
    %2508 = vmatpush2.xpose.msra.mxu0 0.0
    %2509 = vmatprep.subr.mxu0 0.0
    %2510 = vmatpush2.xpose.msra.mxu0 0.0
    %2511 = vmatprep.subr.mxu0 0.0
    %2512 = vmatpush2.xpose.msra.mxu0 0.0
    %2513 = vmatprep.subr.mxu0 0.0
    %2514 = vmatpush2.xpose.msra.mxu0 0.0
    %2515 = vmatprep.subr.mxu0 0.0
    %2516 = vmatpush2.xpose.msra.mxu0 0.0
    %2517 = vmatprep.mubr.f32.mxu0 0.0
    %v2518 = vand.u32 %v2073, 4294901760
    %2519 = vmatmul.mubr.f32.gmra.mxu0 %v2518
    %v2520 = vpop.f32.mrf.mxu0
    %v2521 = vadd.f32 %v2449, %v2520
    %v2522 = vpop.f32.mrf.mxu0
    %2523 = vdwg.mxu0
    %v2524 = vlaneseq
    %v2525 = vshrl.u32 %v2524, 7
    %v2526 = vlaneseq
    %v2527 = vand.u32 %v2526, 127
    %vm2528 = vcmp.le.s32.totalorder %v2527, %v2525
    %v2529 = vsel %vm2528, 1, 0
    %vm2530 = vcmp.eq.s32.totalorder %v2529, 1
    %v2531 = vsel %vm2530, %v2069, -inf
    %v2532 = vsel %vm2530, %v2521, -inf
    %vm2533 = vcmask 64512
    %v2534 = vsel %vm2533, %v2531, -inf
    %2535 = vmax.xlane.f32.xlu0 %v2534
    %v2536 = vpop.xlane.xlu0 %2535
    %v2537 = vsel %vm2533, %v2532, -inf
    %2538 = vmax.xlane.f32.xlu0 %v2537
    %v2539 = vpop.xlane.xlu0 %2538
    %v2540 = vsub.f32 %v2531, %v2536
    %v2541 = vsub.f32 %v2532, %v2539
    %v2542 = vmul.f32 %v2540, 1.442695
    %v2543 = vpow.pop %v2542
    %v2544 = vmul.f32 %v2541, 1.442695
    %v2545 = vpow.pop %v2544
    %v2546 = vsel %vm2533, %v2543, 0.0
    %2547 = vadd.xlane.f32.xlu0 %v2546
    %v2548 = vpop.xlane.xlu0 %2547
    %v2549 = vsel %vm2533, %v2545, 0.0
    %2550 = vadd.xlane.f32.xlu0 %v2549
    %v2551 = vpop.xlane.xlu0 %2550
    %v2552 = vrcp.pop %v2548
    %v2553 = vmul.f32 %v2543, %v2552
    %v2554 = vrcp.pop %v2551
    %v2555 = vmul.f32 %v2545, %v2554
    %v2557 = vsel %vm2533, %v2553, 0
    %2559 = vmatprep.subr.mxu0 0.0
    %2560 = vmatpush1.msra.mxu0 0.0
    %2561 = vmatprep.subr.mxu0 0.0
    %2562 = vmatpush1.msra.mxu0 0.0
    %2563 = vmatprep.subr.mxu0 0.0
    %2564 = vmatpush1.msra.mxu0 0.0
    %2565 = vmatprep.subr.mxu0 0.0
    %2566 = vmatpush1.msra.mxu0 0.0
    %2567 = vmatprep.subr.mxu0 0.0
    %2568 = vmatpush1.msra.mxu0 0.0
    %2569 = vmatprep.subr.mxu0 0.0
    %2570 = vmatpush1.msra.mxu0 0.0
    %2571 = vmatprep.subr.mxu0 0.0
    %2572 = vmatpush1.msra.mxu0 0.0
    %2573 = vmatprep.subr.mxu0 0.0
    %2574 = vmatpush1.msra.mxu0 0.0
    %2575 = vmatprep.subr.mxu0 0.0
    %2576 = vmatpush1.msra.mxu0 0.0
    %2577 = vmatprep.subr.mxu0 0.0
    %2578 = vmatpush1.msra.mxu0 0.0
    %2579 = vmatprep.subr.mxu0 0.0
    %2580 = vmatpush1.msra.mxu0 0.0
    %2581 = vmatprep.subr.mxu0 0.0
    %2582 = vmatpush1.msra.mxu0 0.0
    %2583 = vmatprep.subr.mxu0 0.0
    %2584 = vmatpush1.msra.mxu0 0.0
    %2585 = vmatprep.subr.mxu0 0.0
    %2586 = vmatpush1.msra.mxu0 0.0
    %2587 = vmatprep.subr.mxu0 0.0
    %2588 = vmatpush1.msra.mxu0 0.0
    %2589 = vmatprep.subr.mxu0 0.0
    %v2590 = vand.u32 %v1610, 4294901760
    %2591 = vmatpush1.msra.mxu0 %v2590
    %2592 = vmatprep.subr.mxu0 0.0
    %2593 = vmatpush2.msra.mxu0 0.0
    %2594 = vmatprep.subr.mxu0 0.0
    %2595 = vmatpush2.msra.mxu0 0.0
    %2596 = vmatprep.subr.mxu0 0.0
    %2597 = vmatpush2.msra.mxu0 0.0
    %2598 = vmatprep.subr.mxu0 0.0
    %2599 = vmatpush2.msra.mxu0 0.0
    %2600 = vmatprep.subr.mxu0 0.0
    %2601 = vmatpush2.msra.mxu0 0.0
    %2602 = vmatprep.subr.mxu0 0.0
    %2603 = vmatpush2.msra.mxu0 0.0
    %2604 = vmatprep.subr.mxu0 0.0
    %2605 = vmatpush2.msra.mxu0 0.0
    %2606 = vmatprep.subr.mxu0 0.0
    %2607 = vmatpush2.msra.mxu0 0.0
    %2608 = vmatprep.subr.mxu0 0.0
    %2609 = vmatpush2.msra.mxu0 0.0
    %2610 = vmatprep.subr.mxu0 0.0
    %2611 = vmatpush2.msra.mxu0 0.0
    %2612 = vmatprep.subr.mxu0 0.0
    %2613 = vmatpush2.msra.mxu0 0.0
    %2614 = vmatprep.subr.mxu0 0.0
    %2615 = vmatpush2.msra.mxu0 0.0
    %2616 = vmatprep.subr.mxu0 0.0
    %2617 = vmatpush2.msra.mxu0 0.0
    %2618 = vmatprep.subr.mxu0 0.0
    %2619 = vmatpush2.msra.mxu0 0.0
    %2620 = vmatprep.subr.mxu0 0.0
    %2621 = vmatpush2.msra.mxu0 0.0
    %2622 = vmatprep.subr.mxu0 0.0
    %2623 = vmatpush2.msra.mxu0 0.0
    %2624 = vmatprep.mubr.f32.mxu0 0.0
    %v2625 = vand.u32 %v2557, 4294901760
    %v2626 = vsub.f32 %v2557, %v2625
    %v2627 = vand.u32 %v2626, 4294901760
    %v2628 = vsub.f32 %v2626, %v2627
    %v2629 = vand.u32 %v2628, 4294901760
    %2630 = vmatmul.mubr.f32.gmra.mxu0 %v2629
    %v2631 = vpop.f32.mrf.mxu0
    %v2632 = vadd.f32 0.0, %v2631
    %v2633 = vpop.f32.mrf.mxu0
    %2634 = vdwg.mxu0
    %2635 = vmatprep.subr.mxu0 0.0
    %2636 = vmatpush1.msra.mxu0 0.0
    %2637 = vmatprep.subr.mxu0 0.0
    %2638 = vmatpush1.msra.mxu0 0.0
    %2639 = vmatprep.subr.mxu0 0.0
    %2640 = vmatpush1.msra.mxu0 0.0
    %2641 = vmatprep.subr.mxu0 0.0
    %2642 = vmatpush1.msra.mxu0 0.0
    %2643 = vmatprep.subr.mxu0 0.0
    %2644 = vmatpush1.msra.mxu0 0.0
    %2645 = vmatprep.subr.mxu0 0.0
    %2646 = vmatpush1.msra.mxu0 0.0
    %2647 = vmatprep.subr.mxu0 0.0
    %2648 = vmatpush1.msra.mxu0 0.0
    %2649 = vmatprep.subr.mxu0 0.0
    %2650 = vmatpush1.msra.mxu0 0.0
    %2651 = vmatprep.subr.mxu0 0.0
    %2652 = vmatpush1.msra.mxu0 0.0
    %2653 = vmatprep.subr.mxu0 0.0
    %2654 = vmatpush1.msra.mxu0 0.0
    %2655 = vmatprep.subr.mxu0 0.0
    %2656 = vmatpush1.msra.mxu0 0.0
    %2657 = vmatprep.subr.mxu0 0.0
    %2658 = vmatpush1.msra.mxu0 0.0
    %2659 = vmatprep.subr.mxu0 0.0
    %2660 = vmatpush1.msra.mxu0 0.0
    %2661 = vmatprep.subr.mxu0 0.0
    %2662 = vmatpush1.msra.mxu0 0.0
    %2663 = vmatprep.subr.mxu0 0.0
    %2664 = vmatpush1.msra.mxu0 0.0
    %2665 = vmatprep.subr.mxu0 0.0
    %v2666 = vand.u32 %v1610, 4294901760
    %v2667 = vsub.f32 %v1610, %v2666
    %v2668 = vand.u32 %v2667, 4294901760
    %v2669 = vsub.f32 %v2667, %v2668
    %v2670 = vand.u32 %v2669, 4294901760
    %2671 = vmatpush1.msra.mxu0 %v2670
    %2672 = vmatprep.subr.mxu0 0.0
    %2673 = vmatpush2.msra.mxu0 0.0
    %2674 = vmatprep.subr.mxu0 0.0
    %2675 = vmatpush2.msra.mxu0 0.0
    %2676 = vmatprep.subr.mxu0 0.0
    %2677 = vmatpush2.msra.mxu0 0.0
    %2678 = vmatprep.subr.mxu0 0.0
    %2679 = vmatpush2.msra.mxu0 0.0
    %2680 = vmatprep.subr.mxu0 0.0
    %2681 = vmatpush2.msra.mxu0 0.0
    %2682 = vmatprep.subr.mxu0 0.0
    %2683 = vmatpush2.msra.mxu0 0.0
    %2684 = vmatprep.subr.mxu0 0.0
    %2685 = vmatpush2.msra.mxu0 0.0
    %2686 = vmatprep.subr.mxu0 0.0
    %2687 = vmatpush2.msra.mxu0 0.0
    %2688 = vmatprep.subr.mxu0 0.0
    %2689 = vmatpush2.msra.mxu0 0.0
    %2690 = vmatprep.subr.mxu0 0.0
    %2691 = vmatpush2.msra.mxu0 0.0
    %2692 = vmatprep.subr.mxu0 0.0
    %2693 = vmatpush2.msra.mxu0 0.0
    %2694 = vmatprep.subr.mxu0 0.0
    %2695 = vmatpush2.msra.mxu0 0.0
    %2696 = vmatprep.subr.mxu0 0.0
    %2697 = vmatpush2.msra.mxu0 0.0
    %2698 = vmatprep.subr.mxu0 0.0
    %2699 = vmatpush2.msra.mxu0 0.0
    %2700 = vmatprep.subr.mxu0 0.0
    %2701 = vmatpush2.msra.mxu0 0.0
    %2702 = vmatprep.subr.mxu0 0.0
    %2703 = vmatpush2.msra.mxu0 0.0
    %2704 = vmatprep.mubr.f32.mxu0 0.0
    %v2705 = vand.u32 %v2557, 4294901760
    %2706 = vmatmul.mubr.f32.gmra.mxu0 %v2705
    %v2707 = vpop.f32.mrf.mxu0
    %v2708 = vadd.f32 %v2632, %v2707
    %v2709 = vpop.f32.mrf.mxu0
    %2710 = vdwg.mxu0
    %2711 = vmatprep.subr.mxu0 0.0
    %2712 = vmatpush1.msra.mxu0 0.0
    %2713 = vmatprep.subr.mxu0 0.0
    %2714 = vmatpush1.msra.mxu0 0.0
    %2715 = vmatprep.subr.mxu0 0.0
    %2716 = vmatpush1.msra.mxu0 0.0
    %2717 = vmatprep.subr.mxu0 0.0
    %2718 = vmatpush1.msra.mxu0 0.0
    %2719 = vmatprep.subr.mxu0 0.0
    %2720 = vmatpush1.msra.mxu0 0.0
    %2721 = vmatprep.subr.mxu0 0.0
    %2722 = vmatpush1.msra.mxu0 0.0
    %2723 = vmatprep.subr.mxu0 0.0
    %2724 = vmatpush1.msra.mxu0 0.0
    %2725 = vmatprep.subr.mxu0 0.0
    %2726 = vmatpush1.msra.mxu0 0.0
    %2727 = vmatprep.subr.mxu0 0.0
    %2728 = vmatpush1.msra.mxu0 0.0
    %2729 = vmatprep.subr.mxu0 0.0
    %2730 = vmatpush1.msra.mxu0 0.0
    %2731 = vmatprep.subr.mxu0 0.0
    %2732 = vmatpush1.msra.mxu0 0.0
    %2733 = vmatprep.subr.mxu0 0.0
    %2734 = vmatpush1.msra.mxu0 0.0
    %2735 = vmatprep.subr.mxu0 0.0
    %2736 = vmatpush1.msra.mxu0 0.0
    %2737 = vmatprep.subr.mxu0 0.0
    %2738 = vmatpush1.msra.mxu0 0.0
    %2739 = vmatprep.subr.mxu0 0.0
    %2740 = vmatpush1.msra.mxu0 0.0
    %2741 = vmatprep.subr.mxu0 0.0
    %v2742 = vand.u32 %v1610, 4294901760
    %v2743 = vsub.f32 %v1610, %v2742
    %2744 = vmatpush1.msra.mxu0 %v2743
    %2745 = vmatprep.subr.mxu0 0.0
    %2746 = vmatpush2.msra.mxu0 0.0
    %2747 = vmatprep.subr.mxu0 0.0
    %2748 = vmatpush2.msra.mxu0 0.0
    %2749 = vmatprep.subr.mxu0 0.0
    %2750 = vmatpush2.msra.mxu0 0.0
    %2751 = vmatprep.subr.mxu0 0.0
    %2752 = vmatpush2.msra.mxu0 0.0
    %2753 = vmatprep.subr.mxu0 0.0
    %2754 = vmatpush2.msra.mxu0 0.0
    %2755 = vmatprep.subr.mxu0 0.0
    %2756 = vmatpush2.msra.mxu0 0.0
    %2757 = vmatprep.subr.mxu0 0.0
    %2758 = vmatpush2.msra.mxu0 0.0
    %2759 = vmatprep.subr.mxu0 0.0
    %2760 = vmatpush2.msra.mxu0 0.0
    %2761 = vmatprep.subr.mxu0 0.0
    %2762 = vmatpush2.msra.mxu0 0.0
    %2763 = vmatprep.subr.mxu0 0.0
    %2764 = vmatpush2.msra.mxu0 0.0
    %2765 = vmatprep.subr.mxu0 0.0
    %2766 = vmatpush2.msra.mxu0 0.0
    %2767 = vmatprep.subr.mxu0 0.0
    %2768 = vmatpush2.msra.mxu0 0.0
    %2769 = vmatprep.subr.mxu0 0.0
    %2770 = vmatpush2.msra.mxu0 0.0
    %2771 = vmatprep.subr.mxu0 0.0
    %2772 = vmatpush2.msra.mxu0 0.0
    %2773 = vmatprep.subr.mxu0 0.0
    %2774 = vmatpush2.msra.mxu0 0.0
    %2775 = vmatprep.subr.mxu0 0.0
    %2776 = vmatpush2.msra.mxu0 0.0
    %2777 = vmatprep.mubr.f32.mxu0 0.0
    %v2778 = vand.u32 %v2557, 4294901760
    %v2779 = vsub.f32 %v2557, %v2778
    %2780 = vmatmul.mubr.f32.gmra.mxu0 %v2779
    %v2781 = vpop.f32.mrf.mxu0
    %v2782 = vadd.f32 %v2708, %v2781
    %v2783 = vpop.f32.mrf.mxu0
    %2784 = vdwg.mxu0
    %2785 = vmatprep.subr.mxu0 0.0
    %2786 = vmatpush1.msra.mxu0 0.0
    %2787 = vmatprep.subr.mxu0 0.0
    %2788 = vmatpush1.msra.mxu0 0.0
    %2789 = vmatprep.subr.mxu0 0.0
    %2790 = vmatpush1.msra.mxu0 0.0
    %2791 = vmatprep.subr.mxu0 0.0
    %2792 = vmatpush1.msra.mxu0 0.0
    %2793 = vmatprep.subr.mxu0 0.0
    %2794 = vmatpush1.msra.mxu0 0.0
    %2795 = vmatprep.subr.mxu0 0.0
    %2796 = vmatpush1.msra.mxu0 0.0
    %2797 = vmatprep.subr.mxu0 0.0
    %2798 = vmatpush1.msra.mxu0 0.0
    %2799 = vmatprep.subr.mxu0 0.0
    %2800 = vmatpush1.msra.mxu0 0.0
    %2801 = vmatprep.subr.mxu0 0.0
    %2802 = vmatpush1.msra.mxu0 0.0
    %2803 = vmatprep.subr.mxu0 0.0
    %2804 = vmatpush1.msra.mxu0 0.0
    %2805 = vmatprep.subr.mxu0 0.0
    %2806 = vmatpush1.msra.mxu0 0.0
    %2807 = vmatprep.subr.mxu0 0.0
    %2808 = vmatpush1.msra.mxu0 0.0
    %2809 = vmatprep.subr.mxu0 0.0
    %2810 = vmatpush1.msra.mxu0 0.0
    %2811 = vmatprep.subr.mxu0 0.0
    %2812 = vmatpush1.msra.mxu0 0.0
    %2813 = vmatprep.subr.mxu0 0.0
    %2814 = vmatpush1.msra.mxu0 0.0
    %2815 = vmatprep.subr.mxu0 0.0
    %v2816 = vand.u32 %v1610, 4294901760
    %2817 = vmatpush1.msra.mxu0 %v2816
    %2818 = vmatprep.subr.mxu0 0.0
    %2819 = vmatpush2.msra.mxu0 0.0
    %2820 = vmatprep.subr.mxu0 0.0
    %2821 = vmatpush2.msra.mxu0 0.0
    %2822 = vmatprep.subr.mxu0 0.0
    %2823 = vmatpush2.msra.mxu0 0.0
    %2824 = vmatprep.subr.mxu0 0.0
    %2825 = vmatpush2.msra.mxu0 0.0
    %2826 = vmatprep.subr.mxu0 0.0
    %2827 = vmatpush2.msra.mxu0 0.0
    %2828 = vmatprep.subr.mxu0 0.0
    %2829 = vmatpush2.msra.mxu0 0.0
    %2830 = vmatprep.subr.mxu0 0.0
    %2831 = vmatpush2.msra.mxu0 0.0
    %2832 = vmatprep.subr.mxu0 0.0
    %2833 = vmatpush2.msra.mxu0 0.0
    %2834 = vmatprep.subr.mxu0 0.0
    %2835 = vmatpush2.msra.mxu0 0.0
    %2836 = vmatprep.subr.mxu0 0.0
    %2837 = vmatpush2.msra.mxu0 0.0
    %2838 = vmatprep.subr.mxu0 0.0
    %2839 = vmatpush2.msra.mxu0 0.0
    %2840 = vmatprep.subr.mxu0 0.0
    %2841 = vmatpush2.msra.mxu0 0.0
    %2842 = vmatprep.subr.mxu0 0.0
    %2843 = vmatpush2.msra.mxu0 0.0
    %2844 = vmatprep.subr.mxu0 0.0
    %2845 = vmatpush2.msra.mxu0 0.0
    %2846 = vmatprep.subr.mxu0 0.0
    %2847 = vmatpush2.msra.mxu0 0.0
    %2848 = vmatprep.subr.mxu0 0.0
    %2849 = vmatpush2.msra.mxu0 0.0
    %2850 = vmatprep.mubr.f32.mxu0 0.0
    %v2851 = vand.u32 %v2557, 4294901760
    %v2852 = vsub.f32 %v2557, %v2851
    %v2853 = vand.u32 %v2852, 4294901760
    %2854 = vmatmul.mubr.f32.gmra.mxu0 %v2853
    %v2855 = vpop.f32.mrf.mxu0
    %v2856 = vadd.f32 %v2782, %v2855
    %v2857 = vpop.f32.mrf.mxu0
    %2858 = vdwg.mxu0
    %2859 = vmatprep.subr.mxu0 0.0
    %2860 = vmatpush1.msra.mxu0 0.0
    %2861 = vmatprep.subr.mxu0 0.0
    %2862 = vmatpush1.msra.mxu0 0.0
    %2863 = vmatprep.subr.mxu0 0.0
    %2864 = vmatpush1.msra.mxu0 0.0
    %2865 = vmatprep.subr.mxu0 0.0
    %2866 = vmatpush1.msra.mxu0 0.0
    %2867 = vmatprep.subr.mxu0 0.0
    %2868 = vmatpush1.msra.mxu0 0.0
    %2869 = vmatprep.subr.mxu0 0.0
    %2870 = vmatpush1.msra.mxu0 0.0
    %2871 = vmatprep.subr.mxu0 0.0
    %2872 = vmatpush1.msra.mxu0 0.0
    %2873 = vmatprep.subr.mxu0 0.0
    %2874 = vmatpush1.msra.mxu0 0.0
    %2875 = vmatprep.subr.mxu0 0.0
    %2876 = vmatpush1.msra.mxu0 0.0
    %2877 = vmatprep.subr.mxu0 0.0
    %2878 = vmatpush1.msra.mxu0 0.0
    %2879 = vmatprep.subr.mxu0 0.0
    %2880 = vmatpush1.msra.mxu0 0.0
    %2881 = vmatprep.subr.mxu0 0.0
    %2882 = vmatpush1.msra.mxu0 0.0
    %2883 = vmatprep.subr.mxu0 0.0
    %2884 = vmatpush1.msra.mxu0 0.0
    %2885 = vmatprep.subr.mxu0 0.0
    %2886 = vmatpush1.msra.mxu0 0.0
    %2887 = vmatprep.subr.mxu0 0.0
    %2888 = vmatpush1.msra.mxu0 0.0
    %2889 = vmatprep.subr.mxu0 0.0
    %v2890 = vand.u32 %v1610, 4294901760
    %v2891 = vsub.f32 %v1610, %v2890
    %v2892 = vand.u32 %v2891, 4294901760
    %2893 = vmatpush1.msra.mxu0 %v2892
    %2894 = vmatprep.subr.mxu0 0.0
    %2895 = vmatpush2.msra.mxu0 0.0
    %2896 = vmatprep.subr.mxu0 0.0
    %2897 = vmatpush2.msra.mxu0 0.0
    %2898 = vmatprep.subr.mxu0 0.0
    %2899 = vmatpush2.msra.mxu0 0.0
    %2900 = vmatprep.subr.mxu0 0.0
    %2901 = vmatpush2.msra.mxu0 0.0
    %2902 = vmatprep.subr.mxu0 0.0
    %2903 = vmatpush2.msra.mxu0 0.0
    %2904 = vmatprep.subr.mxu0 0.0
    %2905 = vmatpush2.msra.mxu0 0.0
    %2906 = vmatprep.subr.mxu0 0.0
    %2907 = vmatpush2.msra.mxu0 0.0
    %2908 = vmatprep.subr.mxu0 0.0
    %2909 = vmatpush2.msra.mxu0 0.0
    %2910 = vmatprep.subr.mxu0 0.0
    %2911 = vmatpush2.msra.mxu0 0.0
    %2912 = vmatprep.subr.mxu0 0.0
    %2913 = vmatpush2.msra.mxu0 0.0
    %2914 = vmatprep.subr.mxu0 0.0
    %2915 = vmatpush2.msra.mxu0 0.0
    %2916 = vmatprep.subr.mxu0 0.0
    %2917 = vmatpush2.msra.mxu0 0.0
    %2918 = vmatprep.subr.mxu0 0.0
    %2919 = vmatpush2.msra.mxu0 0.0
    %2920 = vmatprep.subr.mxu0 0.0
    %2921 = vmatpush2.msra.mxu0 0.0
    %2922 = vmatprep.subr.mxu0 0.0
    %2923 = vmatpush2.msra.mxu0 0.0
    %2924 = vmatprep.subr.mxu0 0.0
    %2925 = vmatpush2.msra.mxu0 0.0
    %2926 = vmatprep.mubr.f32.mxu0 0.0
    %v2927 = vand.u32 %v2557, 4294901760
    %2928 = vmatmul.mubr.f32.gmra.mxu0 %v2927
    %v2929 = vpop.f32.mrf.mxu0
    %v2930 = vadd.f32 %v2856, %v2929
    %v2931 = vpop.f32.mrf.mxu0
    %2932 = vdwg.mxu0
    %2933 = vmatprep.subr.mxu0 0.0
    %2934 = vmatpush1.msra.mxu0 0.0
    %2935 = vmatprep.subr.mxu0 0.0
    %2936 = vmatpush1.msra.mxu0 0.0
    %2937 = vmatprep.subr.mxu0 0.0
    %2938 = vmatpush1.msra.mxu0 0.0
    %2939 = vmatprep.subr.mxu0 0.0
    %2940 = vmatpush1.msra.mxu0 0.0
    %2941 = vmatprep.subr.mxu0 0.0
    %2942 = vmatpush1.msra.mxu0 0.0
    %2943 = vmatprep.subr.mxu0 0.0
    %2944 = vmatpush1.msra.mxu0 0.0
    %2945 = vmatprep.subr.mxu0 0.0
    %2946 = vmatpush1.msra.mxu0 0.0
    %2947 = vmatprep.subr.mxu0 0.0
    %2948 = vmatpush1.msra.mxu0 0.0
    %2949 = vmatprep.subr.mxu0 0.0
    %2950 = vmatpush1.msra.mxu0 0.0
    %2951 = vmatprep.subr.mxu0 0.0
    %2952 = vmatpush1.msra.mxu0 0.0
    %2953 = vmatprep.subr.mxu0 0.0
    %2954 = vmatpush1.msra.mxu0 0.0
    %2955 = vmatprep.subr.mxu0 0.0
    %2956 = vmatpush1.msra.mxu0 0.0
    %2957 = vmatprep.subr.mxu0 0.0
    %2958 = vmatpush1.msra.mxu0 0.0
    %2959 = vmatprep.subr.mxu0 0.0
    %2960 = vmatpush1.msra.mxu0 0.0
    %2961 = vmatprep.subr.mxu0 0.0
    %2962 = vmatpush1.msra.mxu0 0.0
    %2963 = vmatprep.subr.mxu0 0.0
    %v2964 = vand.u32 %v1610, 4294901760
    %2965 = vmatpush1.msra.mxu0 %v2964
    %2966 = vmatprep.subr.mxu0 0.0
    %2967 = vmatpush2.msra.mxu0 0.0
    %2968 = vmatprep.subr.mxu0 0.0
    %2969 = vmatpush2.msra.mxu0 0.0
    %2970 = vmatprep.subr.mxu0 0.0
    %2971 = vmatpush2.msra.mxu0 0.0
    %2972 = vmatprep.subr.mxu0 0.0
    %2973 = vmatpush2.msra.mxu0 0.0
    %2974 = vmatprep.subr.mxu0 0.0
    %2975 = vmatpush2.msra.mxu0 0.0
    %2976 = vmatprep.subr.mxu0 0.0
    %2977 = vmatpush2.msra.mxu0 0.0
    %2978 = vmatprep.subr.mxu0 0.0
    %2979 = vmatpush2.msra.mxu0 0.0
    %2980 = vmatprep.subr.mxu0 0.0
    %2981 = vmatpush2.msra.mxu0 0.0
    %2982 = vmatprep.subr.mxu0 0.0
    %2983 = vmatpush2.msra.mxu0 0.0
    %2984 = vmatprep.subr.mxu0 0.0
    %2985 = vmatpush2.msra.mxu0 0.0
    %2986 = vmatprep.subr.mxu0 0.0
    %2987 = vmatpush2.msra.mxu0 0.0
    %2988 = vmatprep.subr.mxu0 0.0
    %2989 = vmatpush2.msra.mxu0 0.0
    %2990 = vmatprep.subr.mxu0 0.0
    %2991 = vmatpush2.msra.mxu0 0.0
    %2992 = vmatprep.subr.mxu0 0.0
    %2993 = vmatpush2.msra.mxu0 0.0
    %2994 = vmatprep.subr.mxu0 0.0
    %2995 = vmatpush2.msra.mxu0 0.0
    %2996 = vmatprep.subr.mxu0 0.0
    %2997 = vmatpush2.msra.mxu0 0.0
    %2998 = vmatprep.mubr.f32.mxu0 0.0
    %v2999 = vand.u32 %v2557, 4294901760
    %3000 = vmatmul.mubr.f32.gmra.mxu0 %v2999
    %v3001 = vpop.f32.mrf.mxu0
    %v3002 = vadd.f32 %v2930, %v3001
    %v3003 = vpop.f32.mrf.mxu0
    %3004 = vdwg.mxu0
    %v3006 = vsel %vm2533, %v2555, 0
    %3008 = vmatprep.subr.mxu0 0.0
    %3009 = vmatpush1.msra.mxu0 0.0
    %3010 = vmatprep.subr.mxu0 0.0
    %3011 = vmatpush1.msra.mxu0 0.0
    %3012 = vmatprep.subr.mxu0 0.0
    %3013 = vmatpush1.msra.mxu0 0.0
    %3014 = vmatprep.subr.mxu0 0.0
    %3015 = vmatpush1.msra.mxu0 0.0
    %3016 = vmatprep.subr.mxu0 0.0
    %3017 = vmatpush1.msra.mxu0 0.0
    %3018 = vmatprep.subr.mxu0 0.0
    %3019 = vmatpush1.msra.mxu0 0.0
    %3020 = vmatprep.subr.mxu0 0.0
    %3021 = vmatpush1.msra.mxu0 0.0
    %3022 = vmatprep.subr.mxu0 0.0
    %3023 = vmatpush1.msra.mxu0 0.0
    %3024 = vmatprep.subr.mxu0 0.0
    %3025 = vmatpush1.msra.mxu0 0.0
    %3026 = vmatprep.subr.mxu0 0.0
    %3027 = vmatpush1.msra.mxu0 0.0
    %3028 = vmatprep.subr.mxu0 0.0
    %3029 = vmatpush1.msra.mxu0 0.0
    %3030 = vmatprep.subr.mxu0 0.0
    %3031 = vmatpush1.msra.mxu0 0.0
    %3032 = vmatprep.subr.mxu0 0.0
    %3033 = vmatpush1.msra.mxu0 0.0
    %3034 = vmatprep.subr.mxu0 0.0
    %3035 = vmatpush1.msra.mxu0 0.0
    %3036 = vmatprep.subr.mxu0 0.0
    %3037 = vmatpush1.msra.mxu0 0.0
    %3038 = vmatprep.subr.mxu0 0.0
    %v3039 = vand.u32 %v1616, 4294901760
    %3040 = vmatpush1.msra.mxu0 %v3039
    %3041 = vmatprep.subr.mxu0 0.0
    %3042 = vmatpush2.msra.mxu0 0.0
    %3043 = vmatprep.subr.mxu0 0.0
    %3044 = vmatpush2.msra.mxu0 0.0
    %3045 = vmatprep.subr.mxu0 0.0
    %3046 = vmatpush2.msra.mxu0 0.0
    %3047 = vmatprep.subr.mxu0 0.0
    %3048 = vmatpush2.msra.mxu0 0.0
    %3049 = vmatprep.subr.mxu0 0.0
    %3050 = vmatpush2.msra.mxu0 0.0
    %3051 = vmatprep.subr.mxu0 0.0
    %3052 = vmatpush2.msra.mxu0 0.0
    %3053 = vmatprep.subr.mxu0 0.0
    %3054 = vmatpush2.msra.mxu0 0.0
    %3055 = vmatprep.subr.mxu0 0.0
    %3056 = vmatpush2.msra.mxu0 0.0
    %3057 = vmatprep.subr.mxu0 0.0
    %3058 = vmatpush2.msra.mxu0 0.0
    %3059 = vmatprep.subr.mxu0 0.0
    %3060 = vmatpush2.msra.mxu0 0.0
    %3061 = vmatprep.subr.mxu0 0.0
    %3062 = vmatpush2.msra.mxu0 0.0
    %3063 = vmatprep.subr.mxu0 0.0
    %3064 = vmatpush2.msra.mxu0 0.0
    %3065 = vmatprep.subr.mxu0 0.0
    %3066 = vmatpush2.msra.mxu0 0.0
    %3067 = vmatprep.subr.mxu0 0.0
    %3068 = vmatpush2.msra.mxu0 0.0
    %3069 = vmatprep.subr.mxu0 0.0
    %3070 = vmatpush2.msra.mxu0 0.0
    %3071 = vmatprep.subr.mxu0 0.0
    %3072 = vmatpush2.msra.mxu0 0.0
    %3073 = vmatprep.mubr.f32.mxu0 0.0
    %v3074 = vand.u32 %v3006, 4294901760
    %v3075 = vsub.f32 %v3006, %v3074
    %v3076 = vand.u32 %v3075, 4294901760
    %v3077 = vsub.f32 %v3075, %v3076
    %v3078 = vand.u32 %v3077, 4294901760
    %3079 = vmatmul.mubr.f32.gmra.mxu0 %v3078
    %v3080 = vpop.f32.mrf.mxu0
    %v3081 = vadd.f32 0.0, %v3080
    %v3082 = vpop.f32.mrf.mxu0
    %3083 = vdwg.mxu0
    %3084 = vmatprep.subr.mxu0 0.0
    %3085 = vmatpush1.msra.mxu0 0.0
    %3086 = vmatprep.subr.mxu0 0.0
    %3087 = vmatpush1.msra.mxu0 0.0
    %3088 = vmatprep.subr.mxu0 0.0
    %3089 = vmatpush1.msra.mxu0 0.0
    %3090 = vmatprep.subr.mxu0 0.0
    %3091 = vmatpush1.msra.mxu0 0.0
    %3092 = vmatprep.subr.mxu0 0.0
    %3093 = vmatpush1.msra.mxu0 0.0
    %3094 = vmatprep.subr.mxu0 0.0
    %3095 = vmatpush1.msra.mxu0 0.0
    %3096 = vmatprep.subr.mxu0 0.0
    %3097 = vmatpush1.msra.mxu0 0.0
    %3098 = vmatprep.subr.mxu0 0.0
    %3099 = vmatpush1.msra.mxu0 0.0
    %3100 = vmatprep.subr.mxu0 0.0
    %3101 = vmatpush1.msra.mxu0 0.0
    %3102 = vmatprep.subr.mxu0 0.0
    %3103 = vmatpush1.msra.mxu0 0.0
    %3104 = vmatprep.subr.mxu0 0.0
    %3105 = vmatpush1.msra.mxu0 0.0
    %3106 = vmatprep.subr.mxu0 0.0
    %3107 = vmatpush1.msra.mxu0 0.0
    %3108 = vmatprep.subr.mxu0 0.0
    %3109 = vmatpush1.msra.mxu0 0.0
    %3110 = vmatprep.subr.mxu0 0.0
    %3111 = vmatpush1.msra.mxu0 0.0
    %3112 = vmatprep.subr.mxu0 0.0
    %3113 = vmatpush1.msra.mxu0 0.0
    %3114 = vmatprep.subr.mxu0 0.0
    %v3115 = vand.u32 %v1616, 4294901760
    %v3116 = vsub.f32 %v1616, %v3115
    %v3117 = vand.u32 %v3116, 4294901760
    %v3118 = vsub.f32 %v3116, %v3117
    %v3119 = vand.u32 %v3118, 4294901760
    %3120 = vmatpush1.msra.mxu0 %v3119
    %3121 = vmatprep.subr.mxu0 0.0
    %3122 = vmatpush2.msra.mxu0 0.0
    %3123 = vmatprep.subr.mxu0 0.0
    %3124 = vmatpush2.msra.mxu0 0.0
    %3125 = vmatprep.subr.mxu0 0.0
    %3126 = vmatpush2.msra.mxu0 0.0
    %3127 = vmatprep.subr.mxu0 0.0
    %3128 = vmatpush2.msra.mxu0 0.0
    %3129 = vmatprep.subr.mxu0 0.0
    %3130 = vmatpush2.msra.mxu0 0.0
    %3131 = vmatprep.subr.mxu0 0.0
    %3132 = vmatpush2.msra.mxu0 0.0
    %3133 = vmatprep.subr.mxu0 0.0
    %3134 = vmatpush2.msra.mxu0 0.0
    %3135 = vmatprep.subr.mxu0 0.0
    %3136 = vmatpush2.msra.mxu0 0.0
    %3137 = vmatprep.subr.mxu0 0.0
    %3138 = vmatpush2.msra.mxu0 0.0
    %3139 = vmatprep.subr.mxu0 0.0
    %3140 = vmatpush2.msra.mxu0 0.0
    %3141 = vmatprep.subr.mxu0 0.0
    %3142 = vmatpush2.msra.mxu0 0.0
    %3143 = vmatprep.subr.mxu0 0.0
    %3144 = vmatpush2.msra.mxu0 0.0
    %3145 = vmatprep.subr.mxu0 0.0
    %3146 = vmatpush2.msra.mxu0 0.0
    %3147 = vmatprep.subr.mxu0 0.0
    %3148 = vmatpush2.msra.mxu0 0.0
    %3149 = vmatprep.subr.mxu0 0.0
    %3150 = vmatpush2.msra.mxu0 0.0
    %3151 = vmatprep.subr.mxu0 0.0
    %3152 = vmatpush2.msra.mxu0 0.0
    %3153 = vmatprep.mubr.f32.mxu0 0.0
    %v3154 = vand.u32 %v3006, 4294901760
    %3155 = vmatmul.mubr.f32.gmra.mxu0 %v3154
    %v3156 = vpop.f32.mrf.mxu0
    %v3157 = vadd.f32 %v3081, %v3156
    %v3158 = vpop.f32.mrf.mxu0
    %3159 = vdwg.mxu0
    %3160 = vmatprep.subr.mxu0 0.0
    %3161 = vmatpush1.msra.mxu0 0.0
    %3162 = vmatprep.subr.mxu0 0.0
    %3163 = vmatpush1.msra.mxu0 0.0
    %3164 = vmatprep.subr.mxu0 0.0
    %3165 = vmatpush1.msra.mxu0 0.0
    %3166 = vmatprep.subr.mxu0 0.0
    %3167 = vmatpush1.msra.mxu0 0.0
    %3168 = vmatprep.subr.mxu0 0.0
    %3169 = vmatpush1.msra.mxu0 0.0
    %3170 = vmatprep.subr.mxu0 0.0
    %3171 = vmatpush1.msra.mxu0 0.0
    %3172 = vmatprep.subr.mxu0 0.0
    %3173 = vmatpush1.msra.mxu0 0.0
    %3174 = vmatprep.subr.mxu0 0.0
    %3175 = vmatpush1.msra.mxu0 0.0
    %3176 = vmatprep.subr.mxu0 0.0
    %3177 = vmatpush1.msra.mxu0 0.0
    %3178 = vmatprep.subr.mxu0 0.0
    %3179 = vmatpush1.msra.mxu0 0.0
    %3180 = vmatprep.subr.mxu0 0.0
    %3181 = vmatpush1.msra.mxu0 0.0
    %3182 = vmatprep.subr.mxu0 0.0
    %3183 = vmatpush1.msra.mxu0 0.0
    %3184 = vmatprep.subr.mxu0 0.0
    %3185 = vmatpush1.msra.mxu0 0.0
    %3186 = vmatprep.subr.mxu0 0.0
    %3187 = vmatpush1.msra.mxu0 0.0
    %3188 = vmatprep.subr.mxu0 0.0
    %3189 = vmatpush1.msra.mxu0 0.0
    %3190 = vmatprep.subr.mxu0 0.0
    %v3191 = vand.u32 %v1616, 4294901760
    %v3192 = vsub.f32 %v1616, %v3191
    %3193 = vmatpush1.msra.mxu0 %v3192
    %3194 = vmatprep.subr.mxu0 0.0
    %3195 = vmatpush2.msra.mxu0 0.0
    %3196 = vmatprep.subr.mxu0 0.0
    %3197 = vmatpush2.msra.mxu0 0.0
    %3198 = vmatprep.subr.mxu0 0.0
    %3199 = vmatpush2.msra.mxu0 0.0
    %3200 = vmatprep.subr.mxu0 0.0
    %3201 = vmatpush2.msra.mxu0 0.0
    %3202 = vmatprep.subr.mxu0 0.0
    %3203 = vmatpush2.msra.mxu0 0.0
    %3204 = vmatprep.subr.mxu0 0.0
    %3205 = vmatpush2.msra.mxu0 0.0
    %3206 = vmatprep.subr.mxu0 0.0
    %3207 = vmatpush2.msra.mxu0 0.0
    %3208 = vmatprep.subr.mxu0 0.0
    %3209 = vmatpush2.msra.mxu0 0.0
    %3210 = vmatprep.subr.mxu0 0.0
    %3211 = vmatpush2.msra.mxu0 0.0
    %3212 = vmatprep.subr.mxu0 0.0
    %3213 = vmatpush2.msra.mxu0 0.0
    %3214 = vmatprep.subr.mxu0 0.0
    %3215 = vmatpush2.msra.mxu0 0.0
    %3216 = vmatprep.subr.mxu0 0.0
    %3217 = vmatpush2.msra.mxu0 0.0
    %3218 = vmatprep.subr.mxu0 0.0
    %3219 = vmatpush2.msra.mxu0 0.0
    %3220 = vmatprep.subr.mxu0 0.0
    %3221 = vmatpush2.msra.mxu0 0.0
    %3222 = vmatprep.subr.mxu0 0.0
    %3223 = vmatpush2.msra.mxu0 0.0
    %3224 = vmatprep.subr.mxu0 0.0
    %3225 = vmatpush2.msra.mxu0 0.0
    %3226 = vmatprep.mubr.f32.mxu0 0.0
    %v3227 = vand.u32 %v3006, 4294901760
    %v3228 = vsub.f32 %v3006, %v3227
    %3229 = vmatmul.mubr.f32.gmra.mxu0 %v3228
    %v3230 = vpop.f32.mrf.mxu0
    %v3231 = vadd.f32 %v3157, %v3230
    %v3232 = vpop.f32.mrf.mxu0
    %3233 = vdwg.mxu0
    %3234 = vmatprep.subr.mxu0 0.0
    %3235 = vmatpush1.msra.mxu0 0.0
    %3236 = vmatprep.subr.mxu0 0.0
    %3237 = vmatpush1.msra.mxu0 0.0
    %3238 = vmatprep.subr.mxu0 0.0
    %3239 = vmatpush1.msra.mxu0 0.0
    %3240 = vmatprep.subr.mxu0 0.0
    %3241 = vmatpush1.msra.mxu0 0.0
    %3242 = vmatprep.subr.mxu0 0.0
    %3243 = vmatpush1.msra.mxu0 0.0
    %3244 = vmatprep.subr.mxu0 0.0
    %3245 = vmatpush1.msra.mxu0 0.0
    %3246 = vmatprep.subr.mxu0 0.0
    %3247 = vmatpush1.msra.mxu0 0.0
    %3248 = vmatprep.subr.mxu0 0.0
    %3249 = vmatpush1.msra.mxu0 0.0
    %3250 = vmatprep.subr.mxu0 0.0
    %3251 = vmatpush1.msra.mxu0 0.0
    %3252 = vmatprep.subr.mxu0 0.0
    %3253 = vmatpush1.msra.mxu0 0.0
    %3254 = vmatprep.subr.mxu0 0.0
    %3255 = vmatpush1.msra.mxu0 0.0
    %3256 = vmatprep.subr.mxu0 0.0
    %3257 = vmatpush1.msra.mxu0 0.0
    %3258 = vmatprep.subr.mxu0 0.0
    %3259 = vmatpush1.msra.mxu0 0.0
    %3260 = vmatprep.subr.mxu0 0.0
    %3261 = vmatpush1.msra.mxu0 0.0
    %3262 = vmatprep.subr.mxu0 0.0
    %3263 = vmatpush1.msra.mxu0 0.0
    %3264 = vmatprep.subr.mxu0 0.0
    %v3265 = vand.u32 %v1616, 4294901760
    %3266 = vmatpush1.msra.mxu0 %v3265
    %3267 = vmatprep.subr.mxu0 0.0
    %3268 = vmatpush2.msra.mxu0 0.0
    %3269 = vmatprep.subr.mxu0 0.0
    %3270 = vmatpush2.msra.mxu0 0.0
    %3271 = vmatprep.subr.mxu0 0.0
    %3272 = vmatpush2.msra.mxu0 0.0
    %3273 = vmatprep.subr.mxu0 0.0
    %3274 = vmatpush2.msra.mxu0 0.0
    %3275 = vmatprep.subr.mxu0 0.0
    %3276 = vmatpush2.msra.mxu0 0.0
    %3277 = vmatprep.subr.mxu0 0.0
    %3278 = vmatpush2.msra.mxu0 0.0
    %3279 = vmatprep.subr.mxu0 0.0
    %3280 = vmatpush2.msra.mxu0 0.0
    %3281 = vmatprep.subr.mxu0 0.0
    %3282 = vmatpush2.msra.mxu0 0.0
    %3283 = vmatprep.subr.mxu0 0.0
    %3284 = vmatpush2.msra.mxu0 0.0
    %3285 = vmatprep.subr.mxu0 0.0
    %3286 = vmatpush2.msra.mxu0 0.0
    %3287 = vmatprep.subr.mxu0 0.0
    %3288 = vmatpush2.msra.mxu0 0.0
    %3289 = vmatprep.subr.mxu0 0.0
    %3290 = vmatpush2.msra.mxu0 0.0
    %3291 = vmatprep.subr.mxu0 0.0
    %3292 = vmatpush2.msra.mxu0 0.0
    %3293 = vmatprep.subr.mxu0 0.0
    %3294 = vmatpush2.msra.mxu0 0.0
    %3295 = vmatprep.subr.mxu0 0.0
    %3296 = vmatpush2.msra.mxu0 0.0
    %3297 = vmatprep.subr.mxu0 0.0
    %3298 = vmatpush2.msra.mxu0 0.0
    %3299 = vmatprep.mubr.f32.mxu0 0.0
    %v3300 = vand.u32 %v3006, 4294901760
    %v3301 = vsub.f32 %v3006, %v3300
    %v3302 = vand.u32 %v3301, 4294901760
    %3303 = vmatmul.mubr.f32.gmra.mxu0 %v3302
    %v3304 = vpop.f32.mrf.mxu0
    %v3305 = vadd.f32 %v3231, %v3304
    %v3306 = vpop.f32.mrf.mxu0
    %3307 = vdwg.mxu0
    %3308 = vmatprep.subr.mxu0 0.0
    %3309 = vmatpush1.msra.mxu0 0.0
    %3310 = vmatprep.subr.mxu0 0.0
    %3311 = vmatpush1.msra.mxu0 0.0
    %3312 = vmatprep.subr.mxu0 0.0
    %3313 = vmatpush1.msra.mxu0 0.0
    %3314 = vmatprep.subr.mxu0 0.0
    %3315 = vmatpush1.msra.mxu0 0.0
    %3316 = vmatprep.subr.mxu0 0.0
    %3317 = vmatpush1.msra.mxu0 0.0
    %3318 = vmatprep.subr.mxu0 0.0
    %3319 = vmatpush1.msra.mxu0 0.0
    %3320 = vmatprep.subr.mxu0 0.0
    %3321 = vmatpush1.msra.mxu0 0.0
    %3322 = vmatprep.subr.mxu0 0.0
    %3323 = vmatpush1.msra.mxu0 0.0
    %3324 = vmatprep.subr.mxu0 0.0
    %3325 = vmatpush1.msra.mxu0 0.0
    %3326 = vmatprep.subr.mxu0 0.0
    %3327 = vmatpush1.msra.mxu0 0.0
    %3328 = vmatprep.subr.mxu0 0.0
    %3329 = vmatpush1.msra.mxu0 0.0
    %3330 = vmatprep.subr.mxu0 0.0
    %3331 = vmatpush1.msra.mxu0 0.0
    %3332 = vmatprep.subr.mxu0 0.0
    %3333 = vmatpush1.msra.mxu0 0.0
    %3334 = vmatprep.subr.mxu0 0.0
    %3335 = vmatpush1.msra.mxu0 0.0
    %3336 = vmatprep.subr.mxu0 0.0
    %3337 = vmatpush1.msra.mxu0 0.0
    %3338 = vmatprep.subr.mxu0 0.0
    %v3339 = vand.u32 %v1616, 4294901760
    %v3340 = vsub.f32 %v1616, %v3339
    %v3341 = vand.u32 %v3340, 4294901760
    %3342 = vmatpush1.msra.mxu0 %v3341
    %3343 = vmatprep.subr.mxu0 0.0
    %3344 = vmatpush2.msra.mxu0 0.0
    %3345 = vmatprep.subr.mxu0 0.0
    %3346 = vmatpush2.msra.mxu0 0.0
    %3347 = vmatprep.subr.mxu0 0.0
    %3348 = vmatpush2.msra.mxu0 0.0
    %3349 = vmatprep.subr.mxu0 0.0
    %3350 = vmatpush2.msra.mxu0 0.0
    %3351 = vmatprep.subr.mxu0 0.0
    %3352 = vmatpush2.msra.mxu0 0.0
    %3353 = vmatprep.subr.mxu0 0.0
    %3354 = vmatpush2.msra.mxu0 0.0
    %3355 = vmatprep.subr.mxu0 0.0
    %3356 = vmatpush2.msra.mxu0 0.0
    %3357 = vmatprep.subr.mxu0 0.0
    %3358 = vmatpush2.msra.mxu0 0.0
    %3359 = vmatprep.subr.mxu0 0.0
    %3360 = vmatpush2.msra.mxu0 0.0
    %3361 = vmatprep.subr.mxu0 0.0
    %3362 = vmatpush2.msra.mxu0 0.0
    %3363 = vmatprep.subr.mxu0 0.0
    %3364 = vmatpush2.msra.mxu0 0.0
    %3365 = vmatprep.subr.mxu0 0.0
    %3366 = vmatpush2.msra.mxu0 0.0
    %3367 = vmatprep.subr.mxu0 0.0
    %3368 = vmatpush2.msra.mxu0 0.0
    %3369 = vmatprep.subr.mxu0 0.0
    %3370 = vmatpush2.msra.mxu0 0.0
    %3371 = vmatprep.subr.mxu0 0.0
    %3372 = vmatpush2.msra.mxu0 0.0
    %3373 = vmatprep.subr.mxu0 0.0
    %3374 = vmatpush2.msra.mxu0 0.0
    %3375 = vmatprep.mubr.f32.mxu0 0.0
    %v3376 = vand.u32 %v3006, 4294901760
    %3377 = vmatmul.mubr.f32.gmra.mxu0 %v3376
    %v3378 = vpop.f32.mrf.mxu0
    %v3379 = vadd.f32 %v3305, %v3378
    %v3380 = vpop.f32.mrf.mxu0
    %3381 = vdwg.mxu0
    %3382 = vmatprep.subr.mxu0 0.0
    %3383 = vmatpush1.msra.mxu0 0.0
    %3384 = vmatprep.subr.mxu0 0.0
    %3385 = vmatpush1.msra.mxu0 0.0
    %3386 = vmatprep.subr.mxu0 0.0
    %3387 = vmatpush1.msra.mxu0 0.0
    %3388 = vmatprep.subr.mxu0 0.0
    %3389 = vmatpush1.msra.mxu0 0.0
    %3390 = vmatprep.subr.mxu0 0.0
    %3391 = vmatpush1.msra.mxu0 0.0
    %3392 = vmatprep.subr.mxu0 0.0
    %3393 = vmatpush1.msra.mxu0 0.0
    %3394 = vmatprep.subr.mxu0 0.0
    %3395 = vmatpush1.msra.mxu0 0.0
    %3396 = vmatprep.subr.mxu0 0.0
    %3397 = vmatpush1.msra.mxu0 0.0
    %3398 = vmatprep.subr.mxu0 0.0
    %3399 = vmatpush1.msra.mxu0 0.0
    %3400 = vmatprep.subr.mxu0 0.0
    %3401 = vmatpush1.msra.mxu0 0.0
    %3402 = vmatprep.subr.mxu0 0.0
    %3403 = vmatpush1.msra.mxu0 0.0
    %3404 = vmatprep.subr.mxu0 0.0
    %3405 = vmatpush1.msra.mxu0 0.0
    %3406 = vmatprep.subr.mxu0 0.0
    %3407 = vmatpush1.msra.mxu0 0.0
    %3408 = vmatprep.subr.mxu0 0.0
    %3409 = vmatpush1.msra.mxu0 0.0
    %3410 = vmatprep.subr.mxu0 0.0
    %3411 = vmatpush1.msra.mxu0 0.0
    %3412 = vmatprep.subr.mxu0 0.0
    %v3413 = vand.u32 %v1616, 4294901760
    %3414 = vmatpush1.msra.mxu0 %v3413
    %3415 = vmatprep.subr.mxu0 0.0
    %3416 = vmatpush2.msra.mxu0 0.0
    %3417 = vmatprep.subr.mxu0 0.0
    %3418 = vmatpush2.msra.mxu0 0.0
    %3419 = vmatprep.subr.mxu0 0.0
    %3420 = vmatpush2.msra.mxu0 0.0
    %3421 = vmatprep.subr.mxu0 0.0
    %3422 = vmatpush2.msra.mxu0 0.0
    %3423 = vmatprep.subr.mxu0 0.0
    %3424 = vmatpush2.msra.mxu0 0.0
    %3425 = vmatprep.subr.mxu0 0.0
    %3426 = vmatpush2.msra.mxu0 0.0
    %3427 = vmatprep.subr.mxu0 0.0
    %3428 = vmatpush2.msra.mxu0 0.0
    %3429 = vmatprep.subr.mxu0 0.0
    %3430 = vmatpush2.msra.mxu0 0.0
    %3431 = vmatprep.subr.mxu0 0.0
    %3432 = vmatpush2.msra.mxu0 0.0
    %3433 = vmatprep.subr.mxu0 0.0
    %3434 = vmatpush2.msra.mxu0 0.0
    %3435 = vmatprep.subr.mxu0 0.0
    %3436 = vmatpush2.msra.mxu0 0.0
    %3437 = vmatprep.subr.mxu0 0.0
    %3438 = vmatpush2.msra.mxu0 0.0
    %3439 = vmatprep.subr.mxu0 0.0
    %3440 = vmatpush2.msra.mxu0 0.0
    %3441 = vmatprep.subr.mxu0 0.0
    %3442 = vmatpush2.msra.mxu0 0.0
    %3443 = vmatprep.subr.mxu0 0.0
    %3444 = vmatpush2.msra.mxu0 0.0
    %3445 = vmatprep.subr.mxu0 0.0
    %3446 = vmatpush2.msra.mxu0 0.0
    %3447 = vmatprep.mubr.f32.mxu0 0.0
    %v3448 = vand.u32 %v3006, 4294901760
    %3449 = vmatmul.mubr.f32.gmra.mxu0 %v3448
    %v3450 = vpop.f32.mrf.mxu0
    %v3451 = vadd.f32 %v3379, %v3450
    %v3452 = vpop.f32.mrf.mxu0
    %3453 = vdwg.mxu0
    %3454 = vst.msk [vmem:[#allocation2] sm:$0xff] %vm1619, %v3002
    %3455 = vst.msk [vmem:[#allocation2 + $0x8] sm:$0xff] %vm1619, %v3451
    // Predicated region
    $region10: #{tpu_custom_call.1} parent=1 // pred_check
      _
    $region11: #{tpu_custom_call.1} parent=1 // pred_check_branch
      %3457 = sbr.rel (0) target = $region13
    $region12: #{tpu_custom_call.1} parent=1 // pred_region
      %s3459 = ssub.s32 256, 256
      %3460 = vsyncadd [#allocation3], %s3459
      %s3461 = sshll.u32 [#allocation2], 4
      %s3462 = int_to_ptr.vmem [resolvable:$true] %s3461
      %3467 = dma.vmem_to_hbm [thread:$0]  %s3462, 256, %s2, [#allocation3], 128, 128, 8
    $region13: #{tpu_custom_call.1} parent=1 // pred_fallthru
      _
    // Predicated region
    $region14: #{tpu_custom_call.1} parent=1 // pred_check
      _
    $region15: #{tpu_custom_call.1} parent=1 // pred_check_branch
      %3469 = sbr.rel (0) target = $region17
    $region16: #{tpu_custom_call.1} parent=1 // pred_region
      %3470 = dma.done [#allocation3], 256
    $region17: #{tpu_custom_call.1} parent=1 // pred_fallthru
      _
    %3471 = vsyncpa [#allocation3], 1

</llo_original>
